<compile_context>
chip_gen: v5e
topology: v5e:2x2
jax: 0.10.0
libtpu: 0.0.40
codegen_flags: <defaults>
</compile_context>

<pallas_src>
import math
import functools

import jax
import jax.numpy as jnp
from jax.experimental import pallas as pl
from jax.experimental.pallas import tpu as pltpu


# ----------------------------------------------------------------------------
# Fused Pallas kernel: posenc + n_layers x (MHA + FFN), post-norm, eval mode.
# ----------------------------------------------------------------------------

def _layernorm(h, w, b, eps=1e-5):
    mu = jnp.mean(h, axis=-1, keepdims=True)
    d = h - mu
    var = jnp.mean(d * d, axis=-1, keepdims=True)         # biased var (PyTorch LN)
    return d * jax.lax.rsqrt(var + eps) * w + b


def _fused_encoder_kernel(n_heads, n_layers, B, S, D, x_ref, pe_ref, *refs):
    out_ref = refs[-1]
    params = refs[:-1]                                     # 12 refs per layer
    H = n_heads
    hd = D // H
    scale = 1.0 / math.sqrt(hd)

    # Per-head lane masks, built once (hoisted out of the layer loop).
    lane = jax.lax.broadcasted_iota(jnp.int32, (1, D), 1)
    head_masks = [
        ((lane >= h * hd) & (lane < (h + 1) * hd)).astype(jnp.float32)
        for h in range(H)
    ]

    # Positional encoding (input is already f32).
    x = x_ref[...] + pe_ref[...][None, :, :]               # (B, S, D)
    h2d = x.reshape(B * S, D)                               # fold batch into matmul rows

    for l in range(n_layers):
        (wqkv, bqkv, wo, bo, ln1w, ln1b,
         w1, b1, w2, b2, ln2w, ln2b) = [r[...] for r in params[l * 12:(l + 1) * 12]]

        # --- self attention --------------------------------------------------
        # Fused QKV projection over all B*S rows: (B*S, D) @ (D, 3D).
        qkv = jnp.dot(h2d, wqkv, preferred_element_type=jnp.float32) + bqkv
        q = qkv[:, 0 * D:1 * D].reshape(B, S, D)            # 128-aligned lane slices
        k = qkv[:, 1 * D:2 * D].reshape(B, S, D)
        v = qkv[:, 2 * D:3 * D].reshape(B, S, D)

        # Per-head attention via full-width masked matmuls (no lane slicing,
        # no concat); batched over B with 3-D einsums.  Head contexts land in
        # their own output columns, summed into a single (B, S, D) context.
        ctx = jnp.zeros((B, S, D), jnp.float32)
        for m in head_masks:                                 # static, tiny H
            s = jnp.einsum('bqd,bkd->bqk', q * m, k,
                           preferred_element_type=jnp.float32) * scale   # (B, S, S)
            s = s - jnp.max(s, axis=-1, keepdims=True)
            e = jnp.exp(s)
            p = e * pl.reciprocal(jnp.sum(e, axis=-1, keepdims=True), approx=False)
            ctx = ctx + jnp.einsum('bqk,bkd->bqd', p, v * m,
                                   preferred_element_type=jnp.float32)   # (B, S, D)

        # Single full-width output projection (K = D = 128).
        attn = jnp.dot(ctx.reshape(B * S, D), wo,
                       preferred_element_type=jnp.float32) + bo

        # dropout is identity in eval mode
        h1 = _layernorm(h2d + attn, ln1w, ln1b)

        # --- feed forward -----------------------------------------------------
        f = jnp.dot(h1, w1, preferred_element_type=jnp.float32) + b1
        f = jnp.maximum(f, 0.0)                              # ReLU
        f = jnp.dot(f, w2, preferred_element_type=jnp.float32) + b2

        h2d = _layernorm(h1 + f, ln2w, ln2b)

    out_ref[...] = h2d.reshape(B, S, D).astype(out_ref.dtype)


def transformer_encoder_forward(x, layer_params, pe, n_heads):
    B, S, D = x.shape
    n_layers = len(layer_params)

    flat_params = []
    for p in layer_params:
        flat_params += [p["wqkv"], p["bqkv"], p["wo"], p["bo"],
                        p["ln1w"], p["ln1b"], p["w1"], p["b1"],
                        p["w2"], p["b2"], p["ln2w"], p["ln2b"]]

    kernel = functools.partial(_fused_encoder_kernel, n_heads, n_layers, B, S, D)
    n_inputs = 2 + len(flat_params)

    # Single invocation (no grid): everything resident in VMEM, no pipelining /
    # double-buffering of the constant weights, one kernel launch total.
    # TODO(synk): at this toy size one v7x TensorCore stays idle; for larger B/S
    # split batch or sequence across a size-2 "parallel" grid axis.
    return pl.pallas_call(
        kernel,
        out_shape=jax.ShapeDtypeStruct((B, S, D), x.dtype),
        in_specs=[pl.BlockSpec(memory_space=pltpu.MemorySpace.VMEM)] * n_inputs,
        out_specs=pl.BlockSpec(memory_space=pltpu.MemorySpace.VMEM),
    )(x, pe[:S], *flat_params)


# ----------------------------------------------------------------------------
# Parameter setup / glue (plain JAX, host side)
# ----------------------------------------------------------------------------

def make_positional_encoding(d_model, max_len=100):
    position = jnp.arange(max_len, dtype=jnp.float32)[:, None]
    div = jnp.exp(jnp.arange(0, d_model, 2, dtype=jnp.float32)
                  * (-jnp.log(10000.0) / d_model))
    pe = jnp.zeros((max_len, d_model), dtype=jnp.float32)
    pe = pe.at[:, 0::2].set(jnp.sin(position * div))
    pe = pe.at[:, 1::2].set(jnp.cos(position * div))
    return pe


def init_layer_params(key, d_model, dff):
    ks = jax.random.split(key, 4)
    std = 0.02
    # Weights stored already transposed (in_features, out_features) so the kernel
    # computes x @ W (PyTorch nn.Linear computes x @ W^T).
    return {
        "wqkv": std * jax.random.normal(ks[0], (d_model, 3 * d_model), jnp.float32),
        "bqkv": jnp.zeros((1, 3 * d_model), jnp.float32),
        "wo":   std * jax.random.normal(ks[1], (d_model, d_model), jnp.float32),
        "bo":   jnp.zeros((1, d_model), jnp.float32),
        "ln1w": jnp.ones((1, d_model), jnp.float32),
        "ln1b": jnp.zeros((1, d_model), jnp.float32),
        "w1":   std * jax.random.normal(ks[2], (d_model, dff), jnp.float32),
        "b1":   jnp.zeros((1, dff), jnp.float32),
        "w2":   std * jax.random.normal(ks[3], (dff, d_model), jnp.float32),
        "b2":   jnp.zeros((1, d_model), jnp.float32),
        "ln2w": jnp.ones((1, d_model), jnp.float32),
        "ln2b": jnp.zeros((1, d_model), jnp.float32),
    }


# ----------------------------------------------------------------------------
if __name__ == "__main__":
    d_model, n_heads, n_layers, dff = 128, 4, 2, 256
    batch, seq = 2, 8

    key = jax.random.PRNGKey(0)
    kx, *kl = jax.random.split(key, 1 + n_layers)

    x = jax.random.normal(kx, (batch, seq, d_model), dtype=jnp.float32)
    pe = make_positional_encoding(d_model, max_len=100)
    layer_params = [init_layer_params(kl[i], d_model, dff) for i in range(n_layers)]

    # (The PyTorch transpose(0,1)/transpose(0,1) pair around the layers is a pure
    #  layout change; attention/LN/FFN are batch-independent, so (B, S, D) is kept.)
    out = transformer_encoder_forward(x, layer_params, pe, n_heads)
    out = jax.block_until_ready(out)
    assert out.shape == (batch, seq, d_model)
    assert jnp.all(jnp.isfinite(out))
    print("KERNEL_OK")
</pallas_src>

<mosaic_0001>
module attributes {stable_mosaic.version = 11 : i64} {
  func.func @_fused_encoder_kernel(%arg0: memref<2x8x128xf32, #tpu.memory_space<vmem>>, %arg1: memref<8x128xf32, #tpu.memory_space<vmem>>, %arg2: memref<128x384xf32, #tpu.memory_space<vmem>>, %arg3: memref<1x384xf32, #tpu.memory_space<vmem>>, %arg4: memref<128x128xf32, #tpu.memory_space<vmem>>, %arg5: memref<1x128xf32, #tpu.memory_space<vmem>>, %arg6: memref<1x128xf32, #tpu.memory_space<vmem>>, %arg7: memref<1x128xf32, #tpu.memory_space<vmem>>, %arg8: memref<128x256xf32, #tpu.memory_space<vmem>>, %arg9: memref<1x256xf32, #tpu.memory_space<vmem>>, %arg10: memref<256x128xf32, #tpu.memory_space<vmem>>, %arg11: memref<1x128xf32, #tpu.memory_space<vmem>>, %arg12: memref<1x128xf32, #tpu.memory_space<vmem>>, %arg13: memref<1x128xf32, #tpu.memory_space<vmem>>, %arg14: memref<128x384xf32, #tpu.memory_space<vmem>>, %arg15: memref<1x384xf32, #tpu.memory_space<vmem>>, %arg16: memref<128x128xf32, #tpu.memory_space<vmem>>, %arg17: memref<1x128xf32, #tpu.memory_space<vmem>>, %arg18: memref<1x128xf32, #tpu.memory_space<vmem>>, %arg19: memref<1x128xf32, #tpu.memory_space<vmem>>, %arg20: memref<128x256xf32, #tpu.memory_space<vmem>>, %arg21: memref<1x256xf32, #tpu.memory_space<vmem>>, %arg22: memref<256x128xf32, #tpu.memory_space<vmem>>, %arg23: memref<1x128xf32, #tpu.memory_space<vmem>>, %arg24: memref<1x128xf32, #tpu.memory_space<vmem>>, %arg25: memref<1x128xf32, #tpu.memory_space<vmem>>, %arg26: memref<2x8x128xf32, #tpu.memory_space<vmem>>) attributes {dimension_semantics = [], scalar_prefetch = 0 : i64, scratch_operands = 0 : i64, tpu.core_type = #tpu.core_type<tc>} {
    %0 = tpu.iota {dimensions = array<i32: 1>} : vector<1x128xi32>
    %c0_i32 = arith.constant 0 : i32
    %1 = vector.broadcast %c0_i32 : i32 to vector<1x128xi32>
    %2 = arith.cmpi sge, %0, %1 : vector<1x128xi32>
    %c32_i32 = arith.constant 32 : i32
    %3 = vector.broadcast %c32_i32 : i32 to vector<1x128xi32>
    %4 = arith.cmpi slt, %0, %3 : vector<1x128xi32>
    %5 = arith.andi %2, %4 : vector<1x128xi1>
    %6 = arith.extui %5 : vector<1x128xi1> to vector<1x128xi32>
    %7 = arith.sitofp %6 : vector<1x128xi32> to vector<1x128xf32>
    %c32_i32_0 = arith.constant 32 : i32
    %8 = vector.broadcast %c32_i32_0 : i32 to vector<1x128xi32>
    %9 = arith.cmpi sge, %0, %8 : vector<1x128xi32>
    %c64_i32 = arith.constant 64 : i32
    %10 = vector.broadcast %c64_i32 : i32 to vector<1x128xi32>
    %11 = arith.cmpi slt, %0, %10 : vector<1x128xi32>
    %12 = arith.andi %9, %11 : vector<1x128xi1>
    %13 = arith.extui %12 : vector<1x128xi1> to vector<1x128xi32>
    %14 = arith.sitofp %13 : vector<1x128xi32> to vector<1x128xf32>
    %c64_i32_1 = arith.constant 64 : i32
    %15 = vector.broadcast %c64_i32_1 : i32 to vector<1x128xi32>
    %16 = arith.cmpi sge, %0, %15 : vector<1x128xi32>
    %c96_i32 = arith.constant 96 : i32
    %17 = vector.broadcast %c96_i32 : i32 to vector<1x128xi32>
    %18 = arith.cmpi slt, %0, %17 : vector<1x128xi32>
    %19 = arith.andi %16, %18 : vector<1x128xi1>
    %20 = arith.extui %19 : vector<1x128xi1> to vector<1x128xi32>
    %21 = arith.sitofp %20 : vector<1x128xi32> to vector<1x128xf32>
    %c96_i32_2 = arith.constant 96 : i32
    %22 = vector.broadcast %c96_i32_2 : i32 to vector<1x128xi32>
    %23 = arith.cmpi sge, %0, %22 : vector<1x128xi32>
    %c128_i32 = arith.constant 128 : i32
    %24 = vector.broadcast %c128_i32 : i32 to vector<1x128xi32>
    %25 = arith.cmpi slt, %0, %24 : vector<1x128xi32>
    %26 = arith.andi %23, %25 : vector<1x128xi1>
    %27 = arith.extui %26 : vector<1x128xi1> to vector<1x128xi32>
    %28 = arith.sitofp %27 : vector<1x128xi32> to vector<1x128xf32>
    %c0 = arith.constant 0 : index
    %c0_3 = arith.constant 0 : index
    %c0_4 = arith.constant 0 : index
    %29 = vector.load %arg0[%c0, %c0_3, %c0_4] : memref<2x8x128xf32, #tpu.memory_space<vmem>>, vector<2x8x128xf32>
    %c0_5 = arith.constant 0 : index
    %c0_6 = arith.constant 0 : index
    %30 = vector.load %arg1[%c0_5, %c0_6] : memref<8x128xf32, #tpu.memory_space<vmem>>, vector<8x128xf32>
    %31 = vector.shape_cast %30 : vector<8x128xf32> to vector<1x8x128xf32>
    %32 = vector.broadcast %31 : vector<1x8x128xf32> to vector<2x8x128xf32>
    %33 = arith.addf %29, %32 : vector<2x8x128xf32>
    %34 = vector.shape_cast %33 : vector<2x8x128xf32> to vector<16x128xf32>
    %c0_7 = arith.constant 0 : index
    %c0_8 = arith.constant 0 : index
    %35 = vector.load %arg2[%c0_7, %c0_8] : memref<128x384xf32, #tpu.memory_space<vmem>>, vector<128x384xf32>
    %c0_9 = arith.constant 0 : index
    %c0_10 = arith.constant 0 : index
    %36 = vector.load %arg3[%c0_9, %c0_10] : memref<1x384xf32, #tpu.memory_space<vmem>>, vector<1x384xf32>
    %c0_11 = arith.constant 0 : index
    %c0_12 = arith.constant 0 : index
    %37 = vector.load %arg4[%c0_11, %c0_12] : memref<128x128xf32, #tpu.memory_space<vmem>>, vector<128x128xf32>
    %c0_13 = arith.constant 0 : index
    %c0_14 = arith.constant 0 : index
    %38 = vector.load %arg5[%c0_13, %c0_14] : memref<1x128xf32, #tpu.memory_space<vmem>>, vector<1x128xf32>
    %c0_15 = arith.constant 0 : index
    %c0_16 = arith.constant 0 : index
    %39 = vector.load %arg6[%c0_15, %c0_16] : memref<1x128xf32, #tpu.memory_space<vmem>>, vector<1x128xf32>
    %c0_17 = arith.constant 0 : index
    %c0_18 = arith.constant 0 : index
    %40 = vector.load %arg7[%c0_17, %c0_18] : memref<1x128xf32, #tpu.memory_space<vmem>>, vector<1x128xf32>
    %c0_19 = arith.constant 0 : index
    %c0_20 = arith.constant 0 : index
    %41 = vector.load %arg8[%c0_19, %c0_20] : memref<128x256xf32, #tpu.memory_space<vmem>>, vector<128x256xf32>
    %c0_21 = arith.constant 0 : index
    %c0_22 = arith.constant 0 : index
    %42 = vector.load %arg9[%c0_21, %c0_22] : memref<1x256xf32, #tpu.memory_space<vmem>>, vector<1x256xf32>
    %c0_23 = arith.constant 0 : index
    %c0_24 = arith.constant 0 : index
    %43 = vector.load %arg10[%c0_23, %c0_24] : memref<256x128xf32, #tpu.memory_space<vmem>>, vector<256x128xf32>
    %c0_25 = arith.constant 0 : index
    %c0_26 = arith.constant 0 : index
    %44 = vector.load %arg11[%c0_25, %c0_26] : memref<1x128xf32, #tpu.memory_space<vmem>>, vector<1x128xf32>
    %c0_27 = arith.constant 0 : index
    %c0_28 = arith.constant 0 : index
    %45 = vector.load %arg12[%c0_27, %c0_28] : memref<1x128xf32, #tpu.memory_space<vmem>>, vector<1x128xf32>
    %c0_29 = arith.constant 0 : index
    %c0_30 = arith.constant 0 : index
    %46 = vector.load %arg13[%c0_29, %c0_30] : memref<1x128xf32, #tpu.memory_space<vmem>>, vector<1x128xf32>
    %cst = arith.constant dense<0.000000e+00> : vector<16x384xf32>
    %47 = tpu.matmul %34, %35, %cst {dimension_numbers = #tpu.dot_dimension_numbers<[1], [0], [0], [1], [0, 0, 1, 1], [], []>} : vector<16x128xf32>, vector<128x384xf32>, vector<16x384xf32> -> vector<16x384xf32>
    %48 = vector.broadcast %36 : vector<1x384xf32> to vector<16x384xf32>
    %49 = arith.addf %47, %48 : vector<16x384xf32>
    %50 = vector.extract_strided_slice %49 {offsets = [0, 0], sizes = [16, 128], strides = [1, 1]} : vector<16x384xf32> to vector<16x128xf32>
    %51 = vector.shape_cast %50 : vector<16x128xf32> to vector<2x8x128xf32>
    %52 = vector.extract_strided_slice %49 {offsets = [0, 128], sizes = [16, 128], strides = [1, 1]} : vector<16x384xf32> to vector<16x128xf32>
    %53 = vector.shape_cast %52 : vector<16x128xf32> to vector<2x8x128xf32>
    %54 = vector.extract_strided_slice %49 {offsets = [0, 256], sizes = [16, 128], strides = [1, 1]} : vector<16x384xf32> to vector<16x128xf32>
    %55 = vector.shape_cast %54 : vector<16x128xf32> to vector<2x8x128xf32>
    %cst_31 = arith.constant 0.000000e+00 : f32
    %56 = vector.broadcast %cst_31 : f32 to vector<2x8x128xf32>
    %57 = vector.shape_cast %7 : vector<1x128xf32> to vector<1x1x128xf32>
    %58 = vector.broadcast %57 : vector<1x1x128xf32> to vector<2x8x128xf32>
    %59 = arith.mulf %51, %58 : vector<2x8x128xf32>
    "tpu.trace_start"() <{level = 10 : i32, message = "bqd,bkd->bqk"}> : () -> ()
    %cst_32 = arith.constant dense<0.000000e+00> : vector<2x8x8xf32>
    %60 = tpu.matmul %59, %53, %cst_32 {dimension_numbers = #tpu.dot_dimension_numbers<[2], [2], [1], [1], [0, 0, 0, 1, 1, 1], [0], [0]>} : vector<2x8x128xf32>, vector<2x8x128xf32>, vector<2x8x8xf32> -> vector<2x8x8xf32>
    "tpu.trace_stop"() : () -> ()
    %cst_33 = arith.constant 0.176776692 : f32
    %61 = vector.broadcast %cst_33 : f32 to vector<2x8x8xf32>
    %62 = arith.mulf %60, %61 : vector<2x8x8xf32>
    %cst_34 = arith.constant dense<0xFF800000> : vector<2x8xf32>
    %63 = vector.multi_reduction <maximumf>, %62, %cst_34 [2] : vector<2x8x8xf32> to vector<2x8xf32>
    %64 = vector.shape_cast %63 : vector<2x8xf32> to vector<2x8x1xf32>
    %65 = vector.broadcast %64 : vector<2x8x1xf32> to vector<2x8x8xf32>
    %66 = arith.subf %62, %65 : vector<2x8x8xf32>
    %67 = math.exp %66 : vector<2x8x8xf32>
    %cst_35 = arith.constant dense<0.000000e+00> : vector<2x8xf32>
    %68 = vector.multi_reduction <add>, %67, %cst_35 [2] : vector<2x8x8xf32> to vector<2x8xf32>
    %69 = vector.shape_cast %68 : vector<2x8xf32> to vector<2x8x1xf32>
    %70 = tpu.reciprocal %69 : vector<2x8x1xf32> -> vector<2x8x1xf32>
    %71 = vector.broadcast %70 : vector<2x8x1xf32> to vector<2x8x8xf32>
    %72 = arith.mulf %67, %71 : vector<2x8x8xf32>
    %73 = vector.shape_cast %7 : vector<1x128xf32> to vector<1x1x128xf32>
    %74 = vector.broadcast %73 : vector<1x1x128xf32> to vector<2x8x128xf32>
    %75 = arith.mulf %55, %74 : vector<2x8x128xf32>
    "tpu.trace_start"() <{level = 10 : i32, message = "bqk,bkd->bqd"}> : () -> ()
    %cst_36 = arith.constant dense<0.000000e+00> : vector<2x8x128xf32>
    %76 = tpu.matmul %72, %75, %cst_36 {dimension_numbers = #tpu.dot_dimension_numbers<[2], [1], [1], [2], [0, 0, 0, 1, 1, 2], [0], [0]>} : vector<2x8x8xf32>, vector<2x8x128xf32>, vector<2x8x128xf32> -> vector<2x8x128xf32>
    "tpu.trace_stop"() : () -> ()
    %77 = arith.addf %56, %76 : vector<2x8x128xf32>
    %78 = vector.shape_cast %14 : vector<1x128xf32> to vector<1x1x128xf32>
    %79 = vector.broadcast %78 : vector<1x1x128xf32> to vector<2x8x128xf32>
    %80 = arith.mulf %51, %79 : vector<2x8x128xf32>
    "tpu.trace_start"() <{level = 10 : i32, message = "bqd,bkd->bqk"}> : () -> ()
    %cst_37 = arith.constant dense<0.000000e+00> : vector<2x8x8xf32>
    %81 = tpu.matmul %80, %53, %cst_37 {dimension_numbers = #tpu.dot_dimension_numbers<[2], [2], [1], [1], [0, 0, 0, 1, 1, 1], [0], [0]>} : vector<2x8x128xf32>, vector<2x8x128xf32>, vector<2x8x8xf32> -> vector<2x8x8xf32>
    "tpu.trace_stop"() : () -> ()
    %cst_38 = arith.constant 0.176776692 : f32
    %82 = vector.broadcast %cst_38 : f32 to vector<2x8x8xf32>
    %83 = arith.mulf %81, %82 : vector<2x8x8xf32>
    %cst_39 = arith.constant dense<0xFF800000> : vector<2x8xf32>
    %84 = vector.multi_reduction <maximumf>, %83, %cst_39 [2] : vector<2x8x8xf32> to vector<2x8xf32>
    %85 = vector.shape_cast %84 : vector<2x8xf32> to vector<2x8x1xf32>
    %86 = vector.broadcast %85 : vector<2x8x1xf32> to vector<2x8x8xf32>
    %87 = arith.subf %83, %86 : vector<2x8x8xf32>
    %88 = math.exp %87 : vector<2x8x8xf32>
    %cst_40 = arith.constant dense<0.000000e+00> : vector<2x8xf32>
    %89 = vector.multi_reduction <add>, %88, %cst_40 [2] : vector<2x8x8xf32> to vector<2x8xf32>
    %90 = vector.shape_cast %89 : vector<2x8xf32> to vector<2x8x1xf32>
    %91 = tpu.reciprocal %90 : vector<2x8x1xf32> -> vector<2x8x1xf32>
    %92 = vector.broadcast %91 : vector<2x8x1xf32> to vector<2x8x8xf32>
    %93 = arith.mulf %88, %92 : vector<2x8x8xf32>
    %94 = vector.shape_cast %14 : vector<1x128xf32> to vector<1x1x128xf32>
    %95 = vector.broadcast %94 : vector<1x1x128xf32> to vector<2x8x128xf32>
    %96 = arith.mulf %55, %95 : vector<2x8x128xf32>
    "tpu.trace_start"() <{level = 10 : i32, message = "bqk,bkd->bqd"}> : () -> ()
    %cst_41 = arith.constant dense<0.000000e+00> : vector<2x8x128xf32>
    %97 = tpu.matmul %93, %96, %cst_41 {dimension_numbers = #tpu.dot_dimension_numbers<[2], [1], [1], [2], [0, 0, 0, 1, 1, 2], [0], [0]>} : vector<2x8x8xf32>, vector<2x8x128xf32>, vector<2x8x128xf32> -> vector<2x8x128xf32>
    "tpu.trace_stop"() : () -> ()
    %98 = arith.addf %77, %97 : vector<2x8x128xf32>
    %99 = vector.shape_cast %21 : vector<1x128xf32> to vector<1x1x128xf32>
    %100 = vector.broadcast %99 : vector<1x1x128xf32> to vector<2x8x128xf32>
    %101 = arith.mulf %51, %100 : vector<2x8x128xf32>
    "tpu.trace_start"() <{level = 10 : i32, message = "bqd,bkd->bqk"}> : () -> ()
    %cst_42 = arith.constant dense<0.000000e+00> : vector<2x8x8xf32>
    %102 = tpu.matmul %101, %53, %cst_42 {dimension_numbers = #tpu.dot_dimension_numbers<[2], [2], [1], [1], [0, 0, 0, 1, 1, 1], [0], [0]>} : vector<2x8x128xf32>, vector<2x8x128xf32>, vector<2x8x8xf32> -> vector<2x8x8xf32>
    "tpu.trace_stop"() : () -> ()
    %cst_43 = arith.constant 0.176776692 : f32
    %103 = vector.broadcast %cst_43 : f32 to vector<2x8x8xf32>
    %104 = arith.mulf %102, %103 : vector<2x8x8xf32>
    %cst_44 = arith.constant dense<0xFF800000> : vector<2x8xf32>
    %105 = vector.multi_reduction <maximumf>, %104, %cst_44 [2] : vector<2x8x8xf32> to vector<2x8xf32>
    %106 = vector.shape_cast %105 : vector<2x8xf32> to vector<2x8x1xf32>
    %107 = vector.broadcast %106 : vector<2x8x1xf32> to vector<2x8x8xf32>
    %108 = arith.subf %104, %107 : vector<2x8x8xf32>
    %109 = math.exp %108 : vector<2x8x8xf32>
    %cst_45 = arith.constant dense<0.000000e+00> : vector<2x8xf32>
    %110 = vector.multi_reduction <add>, %109, %cst_45 [2] : vector<2x8x8xf32> to vector<2x8xf32>
    %111 = vector.shape_cast %110 : vector<2x8xf32> to vector<2x8x1xf32>
    %112 = tpu.reciprocal %111 : vector<2x8x1xf32> -> vector<2x8x1xf32>
    %113 = vector.broadcast %112 : vector<2x8x1xf32> to vector<2x8x8xf32>
    %114 = arith.mulf %109, %113 : vector<2x8x8xf32>
    %115 = vector.shape_cast %21 : vector<1x128xf32> to vector<1x1x128xf32>
    %116 = vector.broadcast %115 : vector<1x1x128xf32> to vector<2x8x128xf32>
    %117 = arith.mulf %55, %116 : vector<2x8x128xf32>
    "tpu.trace_start"() <{level = 10 : i32, message = "bqk,bkd->bqd"}> : () -> ()
    %cst_46 = arith.constant dense<0.000000e+00> : vector<2x8x128xf32>
    %118 = tpu.matmul %114, %117, %cst_46 {dimension_numbers = #tpu.dot_dimension_numbers<[2], [1], [1], [2], [0, 0, 0, 1, 1, 2], [0], [0]>} : vector<2x8x8xf32>, vector<2x8x128xf32>, vector<2x8x128xf32> -> vector<2x8x128xf32>
    "tpu.trace_stop"() : () -> ()
    %119 = arith.addf %98, %118 : vector<2x8x128xf32>
    %120 = vector.shape_cast %28 : vector<1x128xf32> to vector<1x1x128xf32>
    %121 = vector.broadcast %120 : vector<1x1x128xf32> to vector<2x8x128xf32>
    %122 = arith.mulf %51, %121 : vector<2x8x128xf32>
    "tpu.trace_start"() <{level = 10 : i32, message = "bqd,bkd->bqk"}> : () -> ()
    %cst_47 = arith.constant dense<0.000000e+00> : vector<2x8x8xf32>
    %123 = tpu.matmul %122, %53, %cst_47 {dimension_numbers = #tpu.dot_dimension_numbers<[2], [2], [1], [1], [0, 0, 0, 1, 1, 1], [0], [0]>} : vector<2x8x128xf32>, vector<2x8x128xf32>, vector<2x8x8xf32> -> vector<2x8x8xf32>
    "tpu.trace_stop"() : () -> ()
    %cst_48 = arith.constant 0.176776692 : f32
    %124 = vector.broadcast %cst_48 : f32 to vector<2x8x8xf32>
    %125 = arith.mulf %123, %124 : vector<2x8x8xf32>
    %cst_49 = arith.constant dense<0xFF800000> : vector<2x8xf32>
    %126 = vector.multi_reduction <maximumf>, %125, %cst_49 [2] : vector<2x8x8xf32> to vector<2x8xf32>
    %127 = vector.shape_cast %126 : vector<2x8xf32> to vector<2x8x1xf32>
    %128 = vector.broadcast %127 : vector<2x8x1xf32> to vector<2x8x8xf32>
    %129 = arith.subf %125, %128 : vector<2x8x8xf32>
    %130 = math.exp %129 : vector<2x8x8xf32>
    %cst_50 = arith.constant dense<0.000000e+00> : vector<2x8xf32>
    %131 = vector.multi_reduction <add>, %130, %cst_50 [2] : vector<2x8x8xf32> to vector<2x8xf32>
    %132 = vector.shape_cast %131 : vector<2x8xf32> to vector<2x8x1xf32>
    %133 = tpu.reciprocal %132 : vector<2x8x1xf32> -> vector<2x8x1xf32>
    %134 = vector.broadcast %133 : vector<2x8x1xf32> to vector<2x8x8xf32>
    %135 = arith.mulf %130, %134 : vector<2x8x8xf32>
    %136 = vector.shape_cast %28 : vector<1x128xf32> to vector<1x1x128xf32>
    %137 = vector.broadcast %136 : vector<1x1x128xf32> to vector<2x8x128xf32>
    %138 = arith.mulf %55, %137 : vector<2x8x128xf32>
    "tpu.trace_start"() <{level = 10 : i32, message = "bqk,bkd->bqd"}> : () -> ()
    %cst_51 = arith.constant dense<0.000000e+00> : vector<2x8x128xf32>
    %139 = tpu.matmul %135, %138, %cst_51 {dimension_numbers = #tpu.dot_dimension_numbers<[2], [1], [1], [2], [0, 0, 0, 1, 1, 2], [0], [0]>} : vector<2x8x8xf32>, vector<2x8x128xf32>, vector<2x8x128xf32> -> vector<2x8x128xf32>
    "tpu.trace_stop"() : () -> ()
    %140 = arith.addf %119, %139 : vector<2x8x128xf32>
    %141 = vector.shape_cast %140 : vector<2x8x128xf32> to vector<16x128xf32>
    %cst_52 = arith.constant dense<0.000000e+00> : vector<16x128xf32>
    %142 = tpu.matmul %141, %37, %cst_52 {dimension_numbers = #tpu.dot_dimension_numbers<[1], [0], [0], [1], [0, 0, 1, 1], [], []>} : vector<16x128xf32>, vector<128x128xf32>, vector<16x128xf32> -> vector<16x128xf32>
    %143 = vector.broadcast %38 : vector<1x128xf32> to vector<16x128xf32>
    %144 = arith.addf %142, %143 : vector<16x128xf32>
    %145 = arith.addf %34, %144 : vector<16x128xf32>
    %cst_53 = arith.constant dense<0.000000e+00> : vector<16xf32>
    %146 = vector.multi_reduction <add>, %145, %cst_53 [1] : vector<16x128xf32> to vector<16xf32>
    %147 = vector.shape_cast %146 : vector<16xf32> to vector<16x1xf32>
    %cst_54 = arith.constant 1.280000e+02 : f32
    %148 = vector.broadcast %cst_54 : f32 to vector<16x1xf32>
    %149 = arith.divf %147, %148 : vector<16x1xf32>
    %150 = vector.broadcast %149 : vector<16x1xf32> to vector<16x128xf32>
    %151 = arith.subf %145, %150 : vector<16x128xf32>
    %152 = arith.mulf %151, %151 : vector<16x128xf32>
    %cst_55 = arith.constant dense<0.000000e+00> : vector<16xf32>
    %153 = vector.multi_reduction <add>, %152, %cst_55 [1] : vector<16x128xf32> to vector<16xf32>
    %154 = vector.shape_cast %153 : vector<16xf32> to vector<16x1xf32>
    %cst_56 = arith.constant 1.280000e+02 : f32
    %155 = vector.broadcast %cst_56 : f32 to vector<16x1xf32>
    %156 = arith.divf %154, %155 : vector<16x1xf32>
    %cst_57 = arith.constant 9.99999974E-6 : f32
    %157 = vector.broadcast %cst_57 : f32 to vector<16x1xf32>
    %158 = arith.addf %156, %157 : vector<16x1xf32>
    %159 = math.rsqrt %158 : vector<16x1xf32>
    %160 = vector.broadcast %159 : vector<16x1xf32> to vector<16x128xf32>
    %161 = arith.mulf %151, %160 : vector<16x128xf32>
    %162 = vector.broadcast %39 : vector<1x128xf32> to vector<16x128xf32>
    %163 = arith.mulf %161, %162 : vector<16x128xf32>
    %164 = vector.broadcast %40 : vector<1x128xf32> to vector<16x128xf32>
    %165 = arith.addf %163, %164 : vector<16x128xf32>
    %cst_58 = arith.constant dense<0.000000e+00> : vector<16x256xf32>
    %166 = tpu.matmul %165, %41, %cst_58 {dimension_numbers = #tpu.dot_dimension_numbers<[1], [0], [0], [1], [0, 0, 1, 1], [], []>} : vector<16x128xf32>, vector<128x256xf32>, vector<16x256xf32> -> vector<16x256xf32>
    %167 = vector.broadcast %42 : vector<1x256xf32> to vector<16x256xf32>
    %168 = arith.addf %166, %167 : vector<16x256xf32>
    %cst_59 = arith.constant 0.000000e+00 : f32
    %169 = vector.broadcast %cst_59 : f32 to vector<16x256xf32>
    %170 = arith.maximumf %168, %169 : vector<16x256xf32>
    %cst_60 = arith.constant dense<0.000000e+00> : vector<16x128xf32>
    %171 = tpu.matmul %170, %43, %cst_60 {dimension_numbers = #tpu.dot_dimension_numbers<[1], [0], [0], [1], [0, 0, 1, 1], [], []>} : vector<16x256xf32>, vector<256x128xf32>, vector<16x128xf32> -> vector<16x128xf32>
    %172 = vector.broadcast %44 : vector<1x128xf32> to vector<16x128xf32>
    %173 = arith.addf %171, %172 : vector<16x128xf32>
    %174 = arith.addf %165, %173 : vector<16x128xf32>
    %cst_61 = arith.constant dense<0.000000e+00> : vector<16xf32>
    %175 = vector.multi_reduction <add>, %174, %cst_61 [1] : vector<16x128xf32> to vector<16xf32>
    %176 = vector.shape_cast %175 : vector<16xf32> to vector<16x1xf32>
    %cst_62 = arith.constant 1.280000e+02 : f32
    %177 = vector.broadcast %cst_62 : f32 to vector<16x1xf32>
    %178 = arith.divf %176, %177 : vector<16x1xf32>
    %179 = vector.broadcast %178 : vector<16x1xf32> to vector<16x128xf32>
    %180 = arith.subf %174, %179 : vector<16x128xf32>
    %181 = arith.mulf %180, %180 : vector<16x128xf32>
    %cst_63 = arith.constant dense<0.000000e+00> : vector<16xf32>
    %182 = vector.multi_reduction <add>, %181, %cst_63 [1] : vector<16x128xf32> to vector<16xf32>
    %183 = vector.shape_cast %182 : vector<16xf32> to vector<16x1xf32>
    %cst_64 = arith.constant 1.280000e+02 : f32
    %184 = vector.broadcast %cst_64 : f32 to vector<16x1xf32>
    %185 = arith.divf %183, %184 : vector<16x1xf32>
    %cst_65 = arith.constant 9.99999974E-6 : f32
    %186 = vector.broadcast %cst_65 : f32 to vector<16x1xf32>
    %187 = arith.addf %185, %186 : vector<16x1xf32>
    %188 = math.rsqrt %187 : vector<16x1xf32>
    %189 = vector.broadcast %188 : vector<16x1xf32> to vector<16x128xf32>
    %190 = arith.mulf %180, %189 : vector<16x128xf32>
    %191 = vector.broadcast %45 : vector<1x128xf32> to vector<16x128xf32>
    %192 = arith.mulf %190, %191 : vector<16x128xf32>
    %193 = vector.broadcast %46 : vector<1x128xf32> to vector<16x128xf32>
    %194 = arith.addf %192, %193 : vector<16x128xf32>
    %c0_66 = arith.constant 0 : index
    %c0_67 = arith.constant 0 : index
    %195 = vector.load %arg14[%c0_66, %c0_67] : memref<128x384xf32, #tpu.memory_space<vmem>>, vector<128x384xf32>
    %c0_68 = arith.constant 0 : index
    %c0_69 = arith.constant 0 : index
    %196 = vector.load %arg15[%c0_68, %c0_69] : memref<1x384xf32, #tpu.memory_space<vmem>>, vector<1x384xf32>
    %c0_70 = arith.constant 0 : index
    %c0_71 = arith.constant 0 : index
    %197 = vector.load %arg16[%c0_70, %c0_71] : memref<128x128xf32, #tpu.memory_space<vmem>>, vector<128x128xf32>
    %c0_72 = arith.constant 0 : index
    %c0_73 = arith.constant 0 : index
    %198 = vector.load %arg17[%c0_72, %c0_73] : memref<1x128xf32, #tpu.memory_space<vmem>>, vector<1x128xf32>
    %c0_74 = arith.constant 0 : index
    %c0_75 = arith.constant 0 : index
    %199 = vector.load %arg18[%c0_74, %c0_75] : memref<1x128xf32, #tpu.memory_space<vmem>>, vector<1x128xf32>
    %c0_76 = arith.constant 0 : index
    %c0_77 = arith.constant 0 : index
    %200 = vector.load %arg19[%c0_76, %c0_77] : memref<1x128xf32, #tpu.memory_space<vmem>>, vector<1x128xf32>
    %c0_78 = arith.constant 0 : index
    %c0_79 = arith.constant 0 : index
    %201 = vector.load %arg20[%c0_78, %c0_79] : memref<128x256xf32, #tpu.memory_space<vmem>>, vector<128x256xf32>
    %c0_80 = arith.constant 0 : index
    %c0_81 = arith.constant 0 : index
    %202 = vector.load %arg21[%c0_80, %c0_81] : memref<1x256xf32, #tpu.memory_space<vmem>>, vector<1x256xf32>
    %c0_82 = arith.constant 0 : index
    %c0_83 = arith.constant 0 : index
    %203 = vector.load %arg22[%c0_82, %c0_83] : memref<256x128xf32, #tpu.memory_space<vmem>>, vector<256x128xf32>
    %c0_84 = arith.constant 0 : index
    %c0_85 = arith.constant 0 : index
    %204 = vector.load %arg23[%c0_84, %c0_85] : memref<1x128xf32, #tpu.memory_space<vmem>>, vector<1x128xf32>
    %c0_86 = arith.constant 0 : index
    %c0_87 = arith.constant 0 : index
    %205 = vector.load %arg24[%c0_86, %c0_87] : memref<1x128xf32, #tpu.memory_space<vmem>>, vector<1x128xf32>
    %c0_88 = arith.constant 0 : index
    %c0_89 = arith.constant 0 : index
    %206 = vector.load %arg25[%c0_88, %c0_89] : memref<1x128xf32, #tpu.memory_space<vmem>>, vector<1x128xf32>
    %cst_90 = arith.constant dense<0.000000e+00> : vector<16x384xf32>
    %207 = tpu.matmul %194, %195, %cst_90 {dimension_numbers = #tpu.dot_dimension_numbers<[1], [0], [0], [1], [0, 0, 1, 1], [], []>} : vector<16x128xf32>, vector<128x384xf32>, vector<16x384xf32> -> vector<16x384xf32>
    %208 = vector.broadcast %196 : vector<1x384xf32> to vector<16x384xf32>
    %209 = arith.addf %207, %208 : vector<16x384xf32>
    %210 = vector.extract_strided_slice %209 {offsets = [0, 0], sizes = [16, 128], strides = [1, 1]} : vector<16x384xf32> to vector<16x128xf32>
    %211 = vector.shape_cast %210 : vector<16x128xf32> to vector<2x8x128xf32>
    %212 = vector.extract_strided_slice %209 {offsets = [0, 128], sizes = [16, 128], strides = [1, 1]} : vector<16x384xf32> to vector<16x128xf32>
    %213 = vector.shape_cast %212 : vector<16x128xf32> to vector<2x8x128xf32>
    %214 = vector.extract_strided_slice %209 {offsets = [0, 256], sizes = [16, 128], strides = [1, 1]} : vector<16x384xf32> to vector<16x128xf32>
    %215 = vector.shape_cast %214 : vector<16x128xf32> to vector<2x8x128xf32>
    %cst_91 = arith.constant 0.000000e+00 : f32
    %216 = vector.broadcast %cst_91 : f32 to vector<2x8x128xf32>
    %217 = vector.shape_cast %7 : vector<1x128xf32> to vector<1x1x128xf32>
    %218 = vector.broadcast %217 : vector<1x1x128xf32> to vector<2x8x128xf32>
    %219 = arith.mulf %211, %218 : vector<2x8x128xf32>
    "tpu.trace_start"() <{level = 10 : i32, message = "bqd,bkd->bqk"}> : () -> ()
    %cst_92 = arith.constant dense<0.000000e+00> : vector<2x8x8xf32>
    %220 = tpu.matmul %219, %213, %cst_92 {dimension_numbers = #tpu.dot_dimension_numbers<[2], [2], [1], [1], [0, 0, 0, 1, 1, 1], [0], [0]>} : vector<2x8x128xf32>, vector<2x8x128xf32>, vector<2x8x8xf32> -> vector<2x8x8xf32>
    "tpu.trace_stop"() : () -> ()
    %cst_93 = arith.constant 0.176776692 : f32
    %221 = vector.broadcast %cst_93 : f32 to vector<2x8x8xf32>
    %222 = arith.mulf %220, %221 : vector<2x8x8xf32>
    %cst_94 = arith.constant dense<0xFF800000> : vector<2x8xf32>
    %223 = vector.multi_reduction <maximumf>, %222, %cst_94 [2] : vector<2x8x8xf32> to vector<2x8xf32>
    %224 = vector.shape_cast %223 : vector<2x8xf32> to vector<2x8x1xf32>
    %225 = vector.broadcast %224 : vector<2x8x1xf32> to vector<2x8x8xf32>
    %226 = arith.subf %222, %225 : vector<2x8x8xf32>
    %227 = math.exp %226 : vector<2x8x8xf32>
    %cst_95 = arith.constant dense<0.000000e+00> : vector<2x8xf32>
    %228 = vector.multi_reduction <add>, %227, %cst_95 [2] : vector<2x8x8xf32> to vector<2x8xf32>
    %229 = vector.shape_cast %228 : vector<2x8xf32> to vector<2x8x1xf32>
    %230 = tpu.reciprocal %229 : vector<2x8x1xf32> -> vector<2x8x1xf32>
    %231 = vector.broadcast %230 : vector<2x8x1xf32> to vector<2x8x8xf32>
    %232 = arith.mulf %227, %231 : vector<2x8x8xf32>
    %233 = vector.shape_cast %7 : vector<1x128xf32> to vector<1x1x128xf32>
    %234 = vector.broadcast %233 : vector<1x1x128xf32> to vector<2x8x128xf32>
    %235 = arith.mulf %215, %234 : vector<2x8x128xf32>
    "tpu.trace_start"() <{level = 10 : i32, message = "bqk,bkd->bqd"}> : () -> ()
    %cst_96 = arith.constant dense<0.000000e+00> : vector<2x8x128xf32>
    %236 = tpu.matmul %232, %235, %cst_96 {dimension_numbers = #tpu.dot_dimension_numbers<[2], [1], [1], [2], [0, 0, 0, 1, 1, 2], [0], [0]>} : vector<2x8x8xf32>, vector<2x8x128xf32>, vector<2x8x128xf32> -> vector<2x8x128xf32>
    "tpu.trace_stop"() : () -> ()
    %237 = arith.addf %216, %236 : vector<2x8x128xf32>
    %238 = vector.shape_cast %14 : vector<1x128xf32> to vector<1x1x128xf32>
    %239 = vector.broadcast %238 : vector<1x1x128xf32> to vector<2x8x128xf32>
    %240 = arith.mulf %211, %239 : vector<2x8x128xf32>
    "tpu.trace_start"() <{level = 10 : i32, message = "bqd,bkd->bqk"}> : () -> ()
    %cst_97 = arith.constant dense<0.000000e+00> : vector<2x8x8xf32>
    %241 = tpu.matmul %240, %213, %cst_97 {dimension_numbers = #tpu.dot_dimension_numbers<[2], [2], [1], [1], [0, 0, 0, 1, 1, 1], [0], [0]>} : vector<2x8x128xf32>, vector<2x8x128xf32>, vector<2x8x8xf32> -> vector<2x8x8xf32>
    "tpu.trace_stop"() : () -> ()
    %cst_98 = arith.constant 0.176776692 : f32
    %242 = vector.broadcast %cst_98 : f32 to vector<2x8x8xf32>
    %243 = arith.mulf %241, %242 : vector<2x8x8xf32>
    %cst_99 = arith.constant dense<0xFF800000> : vector<2x8xf32>
    %244 = vector.multi_reduction <maximumf>, %243, %cst_99 [2] : vector<2x8x8xf32> to vector<2x8xf32>
    %245 = vector.shape_cast %244 : vector<2x8xf32> to vector<2x8x1xf32>
    %246 = vector.broadcast %245 : vector<2x8x1xf32> to vector<2x8x8xf32>
    %247 = arith.subf %243, %246 : vector<2x8x8xf32>
    %248 = math.exp %247 : vector<2x8x8xf32>
    %cst_100 = arith.constant dense<0.000000e+00> : vector<2x8xf32>
    %249 = vector.multi_reduction <add>, %248, %cst_100 [2] : vector<2x8x8xf32> to vector<2x8xf32>
    %250 = vector.shape_cast %249 : vector<2x8xf32> to vector<2x8x1xf32>
    %251 = tpu.reciprocal %250 : vector<2x8x1xf32> -> vector<2x8x1xf32>
    %252 = vector.broadcast %251 : vector<2x8x1xf32> to vector<2x8x8xf32>
    %253 = arith.mulf %248, %252 : vector<2x8x8xf32>
    %254 = vector.shape_cast %14 : vector<1x128xf32> to vector<1x1x128xf32>
    %255 = vector.broadcast %254 : vector<1x1x128xf32> to vector<2x8x128xf32>
    %256 = arith.mulf %215, %255 : vector<2x8x128xf32>
    "tpu.trace_start"() <{level = 10 : i32, message = "bqk,bkd->bqd"}> : () -> ()
    %cst_101 = arith.constant dense<0.000000e+00> : vector<2x8x128xf32>
    %257 = tpu.matmul %253, %256, %cst_101 {dimension_numbers = #tpu.dot_dimension_numbers<[2], [1], [1], [2], [0, 0, 0, 1, 1, 2], [0], [0]>} : vector<2x8x8xf32>, vector<2x8x128xf32>, vector<2x8x128xf32> -> vector<2x8x128xf32>
    "tpu.trace_stop"() : () -> ()
    %258 = arith.addf %237, %257 : vector<2x8x128xf32>
    %259 = vector.shape_cast %21 : vector<1x128xf32> to vector<1x1x128xf32>
    %260 = vector.broadcast %259 : vector<1x1x128xf32> to vector<2x8x128xf32>
    %261 = arith.mulf %211, %260 : vector<2x8x128xf32>
    "tpu.trace_start"() <{level = 10 : i32, message = "bqd,bkd->bqk"}> : () -> ()
    %cst_102 = arith.constant dense<0.000000e+00> : vector<2x8x8xf32>
    %262 = tpu.matmul %261, %213, %cst_102 {dimension_numbers = #tpu.dot_dimension_numbers<[2], [2], [1], [1], [0, 0, 0, 1, 1, 1], [0], [0]>} : vector<2x8x128xf32>, vector<2x8x128xf32>, vector<2x8x8xf32> -> vector<2x8x8xf32>
    "tpu.trace_stop"() : () -> ()
    %cst_103 = arith.constant 0.176776692 : f32
    %263 = vector.broadcast %cst_103 : f32 to vector<2x8x8xf32>
    %264 = arith.mulf %262, %263 : vector<2x8x8xf32>
    %cst_104 = arith.constant dense<0xFF800000> : vector<2x8xf32>
    %265 = vector.multi_reduction <maximumf>, %264, %cst_104 [2] : vector<2x8x8xf32> to vector<2x8xf32>
    %266 = vector.shape_cast %265 : vector<2x8xf32> to vector<2x8x1xf32>
    %267 = vector.broadcast %266 : vector<2x8x1xf32> to vector<2x8x8xf32>
    %268 = arith.subf %264, %267 : vector<2x8x8xf32>
    %269 = math.exp %268 : vector<2x8x8xf32>
    %cst_105 = arith.constant dense<0.000000e+00> : vector<2x8xf32>
    %270 = vector.multi_reduction <add>, %269, %cst_105 [2] : vector<2x8x8xf32> to vector<2x8xf32>
    %271 = vector.shape_cast %270 : vector<2x8xf32> to vector<2x8x1xf32>
    %272 = tpu.reciprocal %271 : vector<2x8x1xf32> -> vector<2x8x1xf32>
    %273 = vector.broadcast %272 : vector<2x8x1xf32> to vector<2x8x8xf32>
    %274 = arith.mulf %269, %273 : vector<2x8x8xf32>
    %275 = vector.shape_cast %21 : vector<1x128xf32> to vector<1x1x128xf32>
    %276 = vector.broadcast %275 : vector<1x1x128xf32> to vector<2x8x128xf32>
    %277 = arith.mulf %215, %276 : vector<2x8x128xf32>
    "tpu.trace_start"() <{level = 10 : i32, message = "bqk,bkd->bqd"}> : () -> ()
    %cst_106 = arith.constant dense<0.000000e+00> : vector<2x8x128xf32>
    %278 = tpu.matmul %274, %277, %cst_106 {dimension_numbers = #tpu.dot_dimension_numbers<[2], [1], [1], [2], [0, 0, 0, 1, 1, 2], [0], [0]>} : vector<2x8x8xf32>, vector<2x8x128xf32>, vector<2x8x128xf32> -> vector<2x8x128xf32>
    "tpu.trace_stop"() : () -> ()
    %279 = arith.addf %258, %278 : vector<2x8x128xf32>
    %280 = vector.shape_cast %28 : vector<1x128xf32> to vector<1x1x128xf32>
    %281 = vector.broadcast %280 : vector<1x1x128xf32> to vector<2x8x128xf32>
    %282 = arith.mulf %211, %281 : vector<2x8x128xf32>
    "tpu.trace_start"() <{level = 10 : i32, message = "bqd,bkd->bqk"}> : () -> ()
    %cst_107 = arith.constant dense<0.000000e+00> : vector<2x8x8xf32>
    %283 = tpu.matmul %282, %213, %cst_107 {dimension_numbers = #tpu.dot_dimension_numbers<[2], [2], [1], [1], [0, 0, 0, 1, 1, 1], [0], [0]>} : vector<2x8x128xf32>, vector<2x8x128xf32>, vector<2x8x8xf32> -> vector<2x8x8xf32>
    "tpu.trace_stop"() : () -> ()
    %cst_108 = arith.constant 0.176776692 : f32
    %284 = vector.broadcast %cst_108 : f32 to vector<2x8x8xf32>
    %285 = arith.mulf %283, %284 : vector<2x8x8xf32>
    %cst_109 = arith.constant dense<0xFF800000> : vector<2x8xf32>
    %286 = vector.multi_reduction <maximumf>, %285, %cst_109 [2] : vector<2x8x8xf32> to vector<2x8xf32>
    %287 = vector.shape_cast %286 : vector<2x8xf32> to vector<2x8x1xf32>
    %288 = vector.broadcast %287 : vector<2x8x1xf32> to vector<2x8x8xf32>
    %289 = arith.subf %285, %288 : vector<2x8x8xf32>
    %290 = math.exp %289 : vector<2x8x8xf32>
    %cst_110 = arith.constant dense<0.000000e+00> : vector<2x8xf32>
    %291 = vector.multi_reduction <add>, %290, %cst_110 [2] : vector<2x8x8xf32> to vector<2x8xf32>
    %292 = vector.shape_cast %291 : vector<2x8xf32> to vector<2x8x1xf32>
    %293 = tpu.reciprocal %292 : vector<2x8x1xf32> -> vector<2x8x1xf32>
    %294 = vector.broadcast %293 : vector<2x8x1xf32> to vector<2x8x8xf32>
    %295 = arith.mulf %290, %294 : vector<2x8x8xf32>
    %296 = vector.shape_cast %28 : vector<1x128xf32> to vector<1x1x128xf32>
    %297 = vector.broadcast %296 : vector<1x1x128xf32> to vector<2x8x128xf32>
    %298 = arith.mulf %215, %297 : vector<2x8x128xf32>
    "tpu.trace_start"() <{level = 10 : i32, message = "bqk,bkd->bqd"}> : () -> ()
    %cst_111 = arith.constant dense<0.000000e+00> : vector<2x8x128xf32>
    %299 = tpu.matmul %295, %298, %cst_111 {dimension_numbers = #tpu.dot_dimension_numbers<[2], [1], [1], [2], [0, 0, 0, 1, 1, 2], [0], [0]>} : vector<2x8x8xf32>, vector<2x8x128xf32>, vector<2x8x128xf32> -> vector<2x8x128xf32>
    "tpu.trace_stop"() : () -> ()
    %300 = arith.addf %279, %299 : vector<2x8x128xf32>
    %301 = vector.shape_cast %300 : vector<2x8x128xf32> to vector<16x128xf32>
    %cst_112 = arith.constant dense<0.000000e+00> : vector<16x128xf32>
    %302 = tpu.matmul %301, %197, %cst_112 {dimension_numbers = #tpu.dot_dimension_numbers<[1], [0], [0], [1], [0, 0, 1, 1], [], []>} : vector<16x128xf32>, vector<128x128xf32>, vector<16x128xf32> -> vector<16x128xf32>
    %303 = vector.broadcast %198 : vector<1x128xf32> to vector<16x128xf32>
    %304 = arith.addf %302, %303 : vector<16x128xf32>
    %305 = arith.addf %194, %304 : vector<16x128xf32>
    %cst_113 = arith.constant dense<0.000000e+00> : vector<16xf32>
    %306 = vector.multi_reduction <add>, %305, %cst_113 [1] : vector<16x128xf32> to vector<16xf32>
    %307 = vector.shape_cast %306 : vector<16xf32> to vector<16x1xf32>
    %cst_114 = arith.constant 1.280000e+02 : f32
    %308 = vector.broadcast %cst_114 : f32 to vector<16x1xf32>
    %309 = arith.divf %307, %308 : vector<16x1xf32>
    %310 = vector.broadcast %309 : vector<16x1xf32> to vector<16x128xf32>
    %311 = arith.subf %305, %310 : vector<16x128xf32>
    %312 = arith.mulf %311, %311 : vector<16x128xf32>
    %cst_115 = arith.constant dense<0.000000e+00> : vector<16xf32>
    %313 = vector.multi_reduction <add>, %312, %cst_115 [1] : vector<16x128xf32> to vector<16xf32>
    %314 = vector.shape_cast %313 : vector<16xf32> to vector<16x1xf32>
    %cst_116 = arith.constant 1.280000e+02 : f32
    %315 = vector.broadcast %cst_116 : f32 to vector<16x1xf32>
    %316 = arith.divf %314, %315 : vector<16x1xf32>
    %cst_117 = arith.constant 9.99999974E-6 : f32
    %317 = vector.broadcast %cst_117 : f32 to vector<16x1xf32>
    %318 = arith.addf %316, %317 : vector<16x1xf32>
    %319 = math.rsqrt %318 : vector<16x1xf32>
    %320 = vector.broadcast %319 : vector<16x1xf32> to vector<16x128xf32>
    %321 = arith.mulf %311, %320 : vector<16x128xf32>
    %322 = vector.broadcast %199 : vector<1x128xf32> to vector<16x128xf32>
    %323 = arith.mulf %321, %322 : vector<16x128xf32>
    %324 = vector.broadcast %200 : vector<1x128xf32> to vector<16x128xf32>
    %325 = arith.addf %323, %324 : vector<16x128xf32>
    %cst_118 = arith.constant dense<0.000000e+00> : vector<16x256xf32>
    %326 = tpu.matmul %325, %201, %cst_118 {dimension_numbers = #tpu.dot_dimension_numbers<[1], [0], [0], [1], [0, 0, 1, 1], [], []>} : vector<16x128xf32>, vector<128x256xf32>, vector<16x256xf32> -> vector<16x256xf32>
    %327 = vector.broadcast %202 : vector<1x256xf32> to vector<16x256xf32>
    %328 = arith.addf %326, %327 : vector<16x256xf32>
    %cst_119 = arith.constant 0.000000e+00 : f32
    %329 = vector.broadcast %cst_119 : f32 to vector<16x256xf32>
    %330 = arith.maximumf %328, %329 : vector<16x256xf32>
    %cst_120 = arith.constant dense<0.000000e+00> : vector<16x128xf32>
    %331 = tpu.matmul %330, %203, %cst_120 {dimension_numbers = #tpu.dot_dimension_numbers<[1], [0], [0], [1], [0, 0, 1, 1], [], []>} : vector<16x256xf32>, vector<256x128xf32>, vector<16x128xf32> -> vector<16x128xf32>
    %332 = vector.broadcast %204 : vector<1x128xf32> to vector<16x128xf32>
    %333 = arith.addf %331, %332 : vector<16x128xf32>
    %334 = arith.addf %325, %333 : vector<16x128xf32>
    %cst_121 = arith.constant dense<0.000000e+00> : vector<16xf32>
    %335 = vector.multi_reduction <add>, %334, %cst_121 [1] : vector<16x128xf32> to vector<16xf32>
    %336 = vector.shape_cast %335 : vector<16xf32> to vector<16x1xf32>
    %cst_122 = arith.constant 1.280000e+02 : f32
    %337 = vector.broadcast %cst_122 : f32 to vector<16x1xf32>
    %338 = arith.divf %336, %337 : vector<16x1xf32>
    %339 = vector.broadcast %338 : vector<16x1xf32> to vector<16x128xf32>
    %340 = arith.subf %334, %339 : vector<16x128xf32>
    %341 = arith.mulf %340, %340 : vector<16x128xf32>
    %cst_123 = arith.constant dense<0.000000e+00> : vector<16xf32>
    %342 = vector.multi_reduction <add>, %341, %cst_123 [1] : vector<16x128xf32> to vector<16xf32>
    %343 = vector.shape_cast %342 : vector<16xf32> to vector<16x1xf32>
    %cst_124 = arith.constant 1.280000e+02 : f32
    %344 = vector.broadcast %cst_124 : f32 to vector<16x1xf32>
    %345 = arith.divf %343, %344 : vector<16x1xf32>
    %cst_125 = arith.constant 9.99999974E-6 : f32
    %346 = vector.broadcast %cst_125 : f32 to vector<16x1xf32>
    %347 = arith.addf %345, %346 : vector<16x1xf32>
    %348 = math.rsqrt %347 : vector<16x1xf32>
    %349 = vector.broadcast %348 : vector<16x1xf32> to vector<16x128xf32>
    %350 = arith.mulf %340, %349 : vector<16x128xf32>
    %351 = vector.broadcast %205 : vector<1x128xf32> to vector<16x128xf32>
    %352 = arith.mulf %350, %351 : vector<16x128xf32>
    %353 = vector.broadcast %206 : vector<1x128xf32> to vector<16x128xf32>
    %354 = arith.addf %352, %353 : vector<16x128xf32>
    %355 = vector.shape_cast %354 : vector<16x128xf32> to vector<2x8x128xf32>
    %c0_126 = arith.constant 0 : index
    %c0_127 = arith.constant 0 : index
    %c0_128 = arith.constant 0 : index
    %356 = vector.load %arg26[%c0_126, %c0_127, %c0_128] : memref<2x8x128xf32, #tpu.memory_space<vmem>>, vector<2x8x128xf32>
    tpu.vector_store %arg26[%c0_126, %c0_127, %c0_128], %355 {strides = array<i32>} : memref<2x8x128xf32, #tpu.memory_space<vmem>>, vector<2x8x128xf32>,
    return
  }
}

</mosaic_0001>

<llo_original>
// kernel: tpu_custom_call.1
$region0: #{tpu_custom_call.1}
  #allocation0 [shape = 'u32[]', space=smem, size = 0x4, offset = 0x4, fixed_abs, tag = 'smem constant byte address 0x4 - core index']
  #allocation1 [shape = 'u32[72,128]{1,0:T(1,128)}', space=vmem, size = 0x9000, scoped, tag = 'internal scratch']
  %s0 = inlined_call_operand.hbm [shape: f32[2,8,128], index: 0, kind: input, shape index: {}]
  %s1 = inlined_call_operand.hbm [shape: f32[8,128], index: 1, kind: input, shape index: {}]
  %s2 = inlined_call_operand.hbm [shape: f32[128,384], index: 2, kind: input, shape index: {}]
  %s3 = inlined_call_operand.hbm [shape: f32[1,384], index: 3, kind: input, shape index: {}]
  %s4 = inlined_call_operand.hbm [shape: f32[128,128], index: 4, kind: input, shape index: {}]
  %s5 = inlined_call_operand.hbm [shape: f32[1,128], index: 5, kind: input, shape index: {}]
  %s6 = inlined_call_operand.hbm [shape: f32[1,128], index: 6, kind: input, shape index: {}]
  %s7 = inlined_call_operand.hbm [shape: f32[1,128], index: 7, kind: input, shape index: {}]
  %s8 = inlined_call_operand.hbm [shape: f32[128,256], index: 8, kind: input, shape index: {}]
  %s9 = inlined_call_operand.vmem [shape: f32[1,256], index: 9, kind: input, shape index: {}]
  %s10 = inlined_call_operand.hbm [shape: f32[256,128], index: 10, kind: input, shape index: {}]
  %s11 = inlined_call_operand.vmem [shape: f32[1,128], index: 11, kind: input, shape index: {}]
  %s12 = inlined_call_operand.vmem [shape: f32[1,128], index: 12, kind: input, shape index: {}]
  %s13 = inlined_call_operand.vmem [shape: f32[1,128], index: 13, kind: input, shape index: {}]
  %s14 = inlined_call_operand.hbm [shape: f32[128,384], index: 14, kind: input, shape index: {}]
  %s15 = inlined_call_operand.vmem [shape: f32[1,384], index: 15, kind: input, shape index: {}]
  %s16 = inlined_call_operand.hbm [shape: f32[128,128], index: 16, kind: input, shape index: {}]
  %s17 = inlined_call_operand.vmem [shape: f32[1,128], index: 17, kind: input, shape index: {}]
  %s18 = inlined_call_operand.vmem [shape: f32[1,128], index: 18, kind: input, shape index: {}]
  %s19 = inlined_call_operand.vmem [shape: f32[1,128], index: 19, kind: input, shape index: {}]
  %s20 = inlined_call_operand.hbm [shape: f32[128,256], index: 20, kind: input, shape index: {}]
  %s21 = inlined_call_operand.vmem [shape: f32[1,256], index: 21, kind: input, shape index: {}]
  %s22 = inlined_call_operand.hbm [shape: f32[256,128], index: 22, kind: input, shape index: {}]
  %s23 = inlined_call_operand.vmem [shape: f32[1,128], index: 23, kind: input, shape index: {}]
  %s24 = inlined_call_operand.vmem [shape: f32[1,128], index: 24, kind: input, shape index: {}]
  %s25 = inlined_call_operand.vmem [shape: f32[1,128], index: 25, kind: input, shape index: {}]
  %s26 = inlined_call_operand.hbm [shape: f32[2,8,128], index: 26, kind: output, shape index: {}]
  %s27 = sld [smem:[#allocation0]]
  $region170: #{tpu_custom_call.1} parent=0
    _
  %s29 = ssub.s32 1, %s27
  %s30 = scalar_select 0, %s29, %s27
  $region1: #{tpu_custom_call.1} parent=0
    #allocation2 [shape = 'u8[8192]{0}', space=vmem, size = 0x2000, scoped, tag = 'input window, operand 0, single buffered']
    #allocation3 [shape = 's32[1]{0}', space=sflag, size = 0x4, scoped, tag = 'scoped memory for tpu_custom_call.1']
    #allocation4 [shape = 's32[1]{0}', space=sflag, size = 0x4, scoped, tag = 'scoped memory for tpu_custom_call.1']
    #allocation5 [shape = 'u8[4096]{0}', space=vmem, size = 0x1000, scoped, tag = 'input window, operand 1, single buffered']
    #allocation6 [shape = 's32[1]{0}', space=sflag, size = 0x4, scoped, tag = 'scoped memory for tpu_custom_call.1']
    #allocation7 [shape = 'u8[196608]{0}', space=vmem, size = 0x30000, scoped, tag = 'input window, operand 2, single buffered']
    #allocation8 [shape = 'u8[1536]{0}', space=vmem, size = 0x800, scoped, tag = 'input window, operand 3, single buffered']
    #allocation9 [shape = 's32[1]{0}', space=sflag, size = 0x4, scoped, tag = 'scoped memory for tpu_custom_call.1']
    #allocation10 [shape = 'u8[65536]{0}', space=vmem, size = 0x10000, scoped, tag = 'input window, operand 4, single buffered']
    #allocation11 [shape = 'u8[512]{0}', space=vmem, size = 0x400, scoped, tag = 'input window, operand 5, single buffered']
    #allocation12 [shape = 's32[1]{0}', space=sflag, size = 0x4, scoped, tag = 'scoped memory for tpu_custom_call.1']
    #allocation13 [shape = 'u8[512]{0}', space=vmem, size = 0x400, scoped, tag = 'input window, operand 6, single buffered']
    #allocation14 [shape = 'u8[512]{0}', space=vmem, size = 0x400, scoped, tag = 'input window, operand 7, single buffered']
    #allocation15 [shape = 's32[1]{0}', space=sflag, size = 0x4, scoped, tag = 'scoped memory for tpu_custom_call.1']
    #allocation16 [shape = 'u8[131072]{0}', space=vmem, size = 0x20000, scoped, tag = 'input window, operand 8, single buffered']
    #allocation17 [shape = 'u8[131072]{0}', space=vmem, size = 0x20000, scoped, tag = 'input window, operand 10, single buffered']
    #allocation18 [shape = 's32[1]{0}', space=sflag, size = 0x4, scoped, tag = 'scoped memory for tpu_custom_call.1']
    #allocation19 [shape = 'u8[196608]{0}', space=vmem, size = 0x30000, scoped, tag = 'input window, operand 14, single buffered']
    #allocation20 [shape = 'u8[65536]{0}', space=vmem, size = 0x10000, scoped, tag = 'input window, operand 16, single buffered']
    #allocation21 [shape = 's32[1]{0}', space=sflag, size = 0x4, scoped, tag = 'scoped memory for tpu_custom_call.1']
    #allocation22 [shape = 'u8[131072]{0}', space=vmem, size = 0x20000, scoped, tag = 'input window, operand 20, single buffered']
    #allocation23 [shape = 'u8[131072]{0}', space=vmem, size = 0x20000, scoped, tag = 'input window, operand 22, single buffered']
    #allocation24 [shape = 's32[1]{0}', space=sflag, size = 0x4, scoped, tag = 'scoped memory for tpu_custom_call.1']
    #allocation25 [shape = 'u8[8192]{0}', space=vmem, size = 0x2000, scoped, tag = 'output window, operand 0, single buffered']
    %31 = vsyncpa [#allocation3], 0
    %32 = vsyncpa [#allocation6], 0
    %33 = vsyncpa [#allocation9], 0
    %34 = vsyncpa [#allocation12], 0
    %35 = vsyncpa [#allocation15], 0
    %36 = vsyncpa [#allocation18], 0
    %37 = vsyncpa [#allocation21], 0
    %38 = vsyncpa [#allocation24], 0
    %39 = vsyncpa [#allocation4], 0
    // Predicated region
    $region2: #{tpu_custom_call.1} parent=1 // pred_check
      _
    $region3: #{tpu_custom_call.1} parent=1 // pred_check_branch
      %41 = sbr.rel (0) target = $region5
    $region4: #{tpu_custom_call.1} parent=1 // pred_region
      %43 = vsyncadd [#allocation3], 0
      %s44 = sshll.u32 %s0, 4
      %s45 = int_to_ptr.hbm [resolvable:$true] %s44
      %s46 = sshll.u32 [#allocation2], 4
      %s47 = int_to_ptr.vmem [resolvable:$true] %s46
      %52 = dma.hbm_to_vmem [thread:$0]  %s45, 256, %s47, [#allocation3], 128, 128, 8
    $region5: #{tpu_custom_call.1} parent=1 // pred_fallthru
      _
    // Predicated region
    $region6: #{tpu_custom_call.1} parent=1 // pred_check
      _
    $region7: #{tpu_custom_call.1} parent=1 // pred_check_branch
      %54 = sbr.rel (0) target = $region9
    $region8: #{tpu_custom_call.1} parent=1 // pred_region
      %56 = vsyncadd [#allocation6], 0
      %s58 = sshll.u32 %s1, 4
      %s59 = int_to_ptr.hbm [resolvable:$true] %s58
      %s60 = sshll.u32 [#allocation5], 4
      %s61 = int_to_ptr.vmem [resolvable:$true] %s60
      %63 = dma.hbm_to_vmem [thread:$0]  %s59, 128, %s61, [#allocation6]
    $region9: #{tpu_custom_call.1} parent=1 // pred_fallthru
      _
    // Predicated region
    $region10: #{tpu_custom_call.1} parent=1 // pred_check
      _
    $region11: #{tpu_custom_call.1} parent=1 // pred_check_branch
      %65 = sbr.rel (0) target = $region13
    $region12: #{tpu_custom_call.1} parent=1 // pred_region
      %67 = vsyncadd [#allocation6], 0
      %s68 = sshll.u32 %s2, 4
      %s69 = int_to_ptr.hbm [resolvable:$true] %s68
      %s70 = sshll.u32 [#allocation7], 4
      %s71 = int_to_ptr.vmem [resolvable:$true] %s70
      %76 = dma.hbm_to_vmem [thread:$0]  %s69, 6144, %s71, [#allocation6], 384, 384, 24
    $region13: #{tpu_custom_call.1} parent=1 // pred_fallthru
      _
    // Predicated region
    $region14: #{tpu_custom_call.1} parent=1 // pred_check
      _
    $region15: #{tpu_custom_call.1} parent=1 // pred_check_branch
      %78 = sbr.rel (0) target = $region17
    $region16: #{tpu_custom_call.1} parent=1 // pred_region
      %80 = vsyncadd [#allocation9], 0
      %s82 = sshll.u32 %s3, 4
      %s83 = int_to_ptr.hbm [resolvable:$true] %s82
      %s84 = sshll.u32 [#allocation8], 4
      %s85 = int_to_ptr.vmem [resolvable:$true] %s84
      %87 = dma.hbm_to_vmem [thread:$0]  %s83, 48, %s85, [#allocation9]
    $region17: #{tpu_custom_call.1} parent=1 // pred_fallthru
      _
    // Predicated region
    $region18: #{tpu_custom_call.1} parent=1 // pred_check
      _
    $region19: #{tpu_custom_call.1} parent=1 // pred_check_branch
      %89 = sbr.rel (0) target = $region21
    $region20: #{tpu_custom_call.1} parent=1 // pred_region
      %91 = vsyncadd [#allocation9], 0
      %s92 = sshll.u32 %s4, 4
      %s93 = int_to_ptr.hbm [resolvable:$true] %s92
      %s94 = sshll.u32 [#allocation10], 4
      %s95 = int_to_ptr.vmem [resolvable:$true] %s94
      %100 = dma.hbm_to_vmem [thread:$0]  %s93, 2048, %s95, [#allocation9], 128, 128, 8
    $region21: #{tpu_custom_call.1} parent=1 // pred_fallthru
      _
    // Predicated region
    $region22: #{tpu_custom_call.1} parent=1 // pred_check
      _
    $region23: #{tpu_custom_call.1} parent=1 // pred_check_branch
      %102 = sbr.rel (0) target = $region25
    $region24: #{tpu_custom_call.1} parent=1 // pred_region
      %104 = vsyncadd [#allocation12], 0
      %s106 = sshll.u32 %s5, 4
      %s107 = int_to_ptr.hbm [resolvable:$true] %s106
      %s108 = sshll.u32 [#allocation11], 4
      %s109 = int_to_ptr.vmem [resolvable:$true] %s108
      %111 = dma.hbm_to_vmem [thread:$0]  %s107, 16, %s109, [#allocation12]
    $region25: #{tpu_custom_call.1} parent=1 // pred_fallthru
      _
    // Predicated region
    $region26: #{tpu_custom_call.1} parent=1 // pred_check
      _
    $region27: #{tpu_custom_call.1} parent=1 // pred_check_branch
      %113 = sbr.rel (0) target = $region29
    $region28: #{tpu_custom_call.1} parent=1 // pred_region
      %115 = vsyncadd [#allocation12], 0
      %s117 = sshll.u32 %s6, 4
      %s118 = int_to_ptr.hbm [resolvable:$true] %s117
      %s119 = sshll.u32 [#allocation13], 4
      %s120 = int_to_ptr.vmem [resolvable:$true] %s119
      %122 = dma.hbm_to_vmem [thread:$0]  %s118, 16, %s120, [#allocation12]
    $region29: #{tpu_custom_call.1} parent=1 // pred_fallthru
      _
    // Predicated region
    $region30: #{tpu_custom_call.1} parent=1 // pred_check
      _
    $region31: #{tpu_custom_call.1} parent=1 // pred_check_branch
      %124 = sbr.rel (0) target = $region33
    $region32: #{tpu_custom_call.1} parent=1 // pred_region
      %126 = vsyncadd [#allocation15], 0
      %s128 = sshll.u32 %s7, 4
      %s129 = int_to_ptr.hbm [resolvable:$true] %s128
      %s130 = sshll.u32 [#allocation14], 4
      %s131 = int_to_ptr.vmem [resolvable:$true] %s130
      %133 = dma.hbm_to_vmem [thread:$0]  %s129, 16, %s131, [#allocation15]
    $region33: #{tpu_custom_call.1} parent=1 // pred_fallthru
      _
    // Predicated region
    $region34: #{tpu_custom_call.1} parent=1 // pred_check
      _
    $region35: #{tpu_custom_call.1} parent=1 // pred_check_branch
      %135 = sbr.rel (0) target = $region37
    $region36: #{tpu_custom_call.1} parent=1 // pred_region
      %137 = vsyncadd [#allocation15], 0
      %s138 = sshll.u32 %s8, 4
      %s139 = int_to_ptr.hbm [resolvable:$true] %s138
      %s140 = sshll.u32 [#allocation16], 4
      %s141 = int_to_ptr.vmem [resolvable:$true] %s140
      %146 = dma.hbm_to_vmem [thread:$0]  %s139, 4096, %s141, [#allocation15], 256, 256, 16
    $region37: #{tpu_custom_call.1} parent=1 // pred_fallthru
      _
    // Predicated region
    $region38: #{tpu_custom_call.1} parent=1 // pred_check
      _
    $region39: #{tpu_custom_call.1} parent=1 // pred_check_branch
      %148 = sbr.rel (0) target = $region41
    $region40: #{tpu_custom_call.1} parent=1 // pred_region
      _
    $region41: #{tpu_custom_call.1} parent=1 // pred_fallthru
      _
    // Predicated region
    $region42: #{tpu_custom_call.1} parent=1 // pred_check
      _
    $region43: #{tpu_custom_call.1} parent=1 // pred_check_branch
      %150 = sbr.rel (0) target = $region45
    $region44: #{tpu_custom_call.1} parent=1 // pred_region
      %152 = vsyncadd [#allocation18], 0
      %s153 = sshll.u32 %s10, 4
      %s154 = int_to_ptr.hbm [resolvable:$true] %s153
      %s155 = sshll.u32 [#allocation17], 4
      %s156 = int_to_ptr.vmem [resolvable:$true] %s155
      %161 = dma.hbm_to_vmem [thread:$0]  %s154, 4096, %s156, [#allocation18], 128, 128, 8
    $region45: #{tpu_custom_call.1} parent=1 // pred_fallthru
      _
    // Predicated region
    $region46: #{tpu_custom_call.1} parent=1 // pred_check
      _
    $region47: #{tpu_custom_call.1} parent=1 // pred_check_branch
      %163 = sbr.rel (0) target = $region49
    $region48: #{tpu_custom_call.1} parent=1 // pred_region
      _
    $region49: #{tpu_custom_call.1} parent=1 // pred_fallthru
      _
    // Predicated region
    $region50: #{tpu_custom_call.1} parent=1 // pred_check
      _
    $region51: #{tpu_custom_call.1} parent=1 // pred_check_branch
      %165 = sbr.rel (0) target = $region53
    $region52: #{tpu_custom_call.1} parent=1 // pred_region
      _
    $region53: #{tpu_custom_call.1} parent=1 // pred_fallthru
      _
    // Predicated region
    $region54: #{tpu_custom_call.1} parent=1 // pred_check
      _
    $region55: #{tpu_custom_call.1} parent=1 // pred_check_branch
      %167 = sbr.rel (0) target = $region57
    $region56: #{tpu_custom_call.1} parent=1 // pred_region
      _
    $region57: #{tpu_custom_call.1} parent=1 // pred_fallthru
      _
    // Predicated region
    $region58: #{tpu_custom_call.1} parent=1 // pred_check
      _
    $region59: #{tpu_custom_call.1} parent=1 // pred_check_branch
      %169 = sbr.rel (0) target = $region61
    $region60: #{tpu_custom_call.1} parent=1 // pred_region
      %171 = vsyncadd [#allocation18], 0
      %s172 = sshll.u32 %s14, 4
      %s173 = int_to_ptr.hbm [resolvable:$true] %s172
      %s174 = sshll.u32 [#allocation19], 4
      %s175 = int_to_ptr.vmem [resolvable:$true] %s174
      %180 = dma.hbm_to_vmem [thread:$0]  %s173, 6144, %s175, [#allocation18], 384, 384, 24
    $region61: #{tpu_custom_call.1} parent=1 // pred_fallthru
      _
    // Predicated region
    $region62: #{tpu_custom_call.1} parent=1 // pred_check
      _
    $region63: #{tpu_custom_call.1} parent=1 // pred_check_branch
      %182 = sbr.rel (0) target = $region65
    $region64: #{tpu_custom_call.1} parent=1 // pred_region
      _
    $region65: #{tpu_custom_call.1} parent=1 // pred_fallthru
      _
    // Predicated region
    $region66: #{tpu_custom_call.1} parent=1 // pred_check
      _
    $region67: #{tpu_custom_call.1} parent=1 // pred_check_branch
      %184 = sbr.rel (0) target = $region69
    $region68: #{tpu_custom_call.1} parent=1 // pred_region
      %186 = vsyncadd [#allocation21], 0
      %s187 = sshll.u32 %s16, 4
      %s188 = int_to_ptr.hbm [resolvable:$true] %s187
      %s189 = sshll.u32 [#allocation20], 4
      %s190 = int_to_ptr.vmem [resolvable:$true] %s189
      %195 = dma.hbm_to_vmem [thread:$0]  %s188, 2048, %s190, [#allocation21], 128, 128, 8
    $region69: #{tpu_custom_call.1} parent=1 // pred_fallthru
      _
    // Predicated region
    $region70: #{tpu_custom_call.1} parent=1 // pred_check
      _
    $region71: #{tpu_custom_call.1} parent=1 // pred_check_branch
      %197 = sbr.rel (0) target = $region73
    $region72: #{tpu_custom_call.1} parent=1 // pred_region
      _
    $region73: #{tpu_custom_call.1} parent=1 // pred_fallthru
      _
    // Predicated region
    $region74: #{tpu_custom_call.1} parent=1 // pred_check
      _
    $region75: #{tpu_custom_call.1} parent=1 // pred_check_branch
      %199 = sbr.rel (0) target = $region77
    $region76: #{tpu_custom_call.1} parent=1 // pred_region
      _
    $region77: #{tpu_custom_call.1} parent=1 // pred_fallthru
      _
    // Predicated region
    $region78: #{tpu_custom_call.1} parent=1 // pred_check
      _
    $region79: #{tpu_custom_call.1} parent=1 // pred_check_branch
      %201 = sbr.rel (0) target = $region81
    $region80: #{tpu_custom_call.1} parent=1 // pred_region
      _
    $region81: #{tpu_custom_call.1} parent=1 // pred_fallthru
      _
    // Predicated region
    $region82: #{tpu_custom_call.1} parent=1 // pred_check
      _
    $region83: #{tpu_custom_call.1} parent=1 // pred_check_branch
      %203 = sbr.rel (0) target = $region85
    $region84: #{tpu_custom_call.1} parent=1 // pred_region
      %205 = vsyncadd [#allocation21], 0
      %s206 = sshll.u32 %s20, 4
      %s207 = int_to_ptr.hbm [resolvable:$true] %s206
      %s208 = sshll.u32 [#allocation22], 4
      %s209 = int_to_ptr.vmem [resolvable:$true] %s208
      %214 = dma.hbm_to_vmem [thread:$0]  %s207, 4096, %s209, [#allocation21], 256, 256, 16
    $region85: #{tpu_custom_call.1} parent=1 // pred_fallthru
      _
    // Predicated region
    $region86: #{tpu_custom_call.1} parent=1 // pred_check
      _
    $region87: #{tpu_custom_call.1} parent=1 // pred_check_branch
      %216 = sbr.rel (0) target = $region89
    $region88: #{tpu_custom_call.1} parent=1 // pred_region
      _
    $region89: #{tpu_custom_call.1} parent=1 // pred_fallthru
      _
    // Predicated region
    $region90: #{tpu_custom_call.1} parent=1 // pred_check
      _
    $region91: #{tpu_custom_call.1} parent=1 // pred_check_branch
      %218 = sbr.rel (0) target = $region93
    $region92: #{tpu_custom_call.1} parent=1 // pred_region
      %220 = vsyncadd [#allocation24], 0
      %s221 = sshll.u32 %s22, 4
      %s222 = int_to_ptr.hbm [resolvable:$true] %s221
      %s223 = sshll.u32 [#allocation23], 4
      %s224 = int_to_ptr.vmem [resolvable:$true] %s223
      %229 = dma.hbm_to_vmem [thread:$0]  %s222, 4096, %s224, [#allocation24], 128, 128, 8
    $region93: #{tpu_custom_call.1} parent=1 // pred_fallthru
      _
    // Predicated region
    $region94: #{tpu_custom_call.1} parent=1 // pred_check
      _
    $region95: #{tpu_custom_call.1} parent=1 // pred_check_branch
      %231 = sbr.rel (0) target = $region97
    $region96: #{tpu_custom_call.1} parent=1 // pred_region
      _
    $region97: #{tpu_custom_call.1} parent=1 // pred_fallthru
      _
    // Predicated region
    $region98: #{tpu_custom_call.1} parent=1 // pred_check
      _
    $region99: #{tpu_custom_call.1} parent=1 // pred_check_branch
      %233 = sbr.rel (0) target = $region101
    $region100: #{tpu_custom_call.1} parent=1 // pred_region
      _
    $region101: #{tpu_custom_call.1} parent=1 // pred_fallthru
      _
    // Predicated region
    $region102: #{tpu_custom_call.1} parent=1 // pred_check
      _
    $region103: #{tpu_custom_call.1} parent=1 // pred_check_branch
      %235 = sbr.rel (0) target = $region105
    $region104: #{tpu_custom_call.1} parent=1 // pred_region
      _
    $region105: #{tpu_custom_call.1} parent=1 // pred_fallthru
      _
    // Predicated region
    $region106: #{tpu_custom_call.1} parent=1 // pred_check
      _
    $region107: #{tpu_custom_call.1} parent=1 // pred_check_branch
      %237 = sbr.rel (0) target = $region109
    $region108: #{tpu_custom_call.1} parent=1 // pred_region
      %239 = dma.done [#allocation3], 256
    $region109: #{tpu_custom_call.1} parent=1 // pred_fallthru
      _
    // Predicated region
    $region110: #{tpu_custom_call.1} parent=1 // pred_check
      _
    $region111: #{tpu_custom_call.1} parent=1 // pred_check_branch
      %241 = sbr.rel (0) target = $region113
    $region112: #{tpu_custom_call.1} parent=1 // pred_region
      %243 = dma.done [#allocation6], 128
    $region113: #{tpu_custom_call.1} parent=1 // pred_fallthru
      _
    // Predicated region
    $region114: #{tpu_custom_call.1} parent=1 // pred_check
      _
    $region115: #{tpu_custom_call.1} parent=1 // pred_check_branch
      %245 = sbr.rel (0) target = $region117
    $region116: #{tpu_custom_call.1} parent=1 // pred_region
      %247 = dma.done [#allocation6], 6144
    $region117: #{tpu_custom_call.1} parent=1 // pred_fallthru
      _
    // Predicated region
    $region118: #{tpu_custom_call.1} parent=1 // pred_check
      _
    $region119: #{tpu_custom_call.1} parent=1 // pred_check_branch
      %249 = sbr.rel (0) target = $region121
    $region120: #{tpu_custom_call.1} parent=1 // pred_region
      %251 = dma.done [#allocation9], 48
    $region121: #{tpu_custom_call.1} parent=1 // pred_fallthru
      _
    // Predicated region
    $region122: #{tpu_custom_call.1} parent=1 // pred_check
      _
    $region123: #{tpu_custom_call.1} parent=1 // pred_check_branch
      %253 = sbr.rel (0) target = $region125
    $region124: #{tpu_custom_call.1} parent=1 // pred_region
      %255 = dma.done [#allocation9], 2048
    $region125: #{tpu_custom_call.1} parent=1 // pred_fallthru
      _
    // Predicated region
    $region126: #{tpu_custom_call.1} parent=1 // pred_check
      _
    $region127: #{tpu_custom_call.1} parent=1 // pred_check_branch
      %257 = sbr.rel (0) target = $region129
    $region128: #{tpu_custom_call.1} parent=1 // pred_region
      %259 = dma.done [#allocation12], 16
    $region129: #{tpu_custom_call.1} parent=1 // pred_fallthru
      _
    // Predicated region
    $region130: #{tpu_custom_call.1} parent=1 // pred_check
      _
    $region131: #{tpu_custom_call.1} parent=1 // pred_check_branch
      %261 = sbr.rel (0) target = $region133
    $region132: #{tpu_custom_call.1} parent=1 // pred_region
      %263 = dma.done [#allocation12], 16
    $region133: #{tpu_custom_call.1} parent=1 // pred_fallthru
      _
    // Predicated region
    $region134: #{tpu_custom_call.1} parent=1 // pred_check
      _
    $region135: #{tpu_custom_call.1} parent=1 // pred_check_branch
      %265 = sbr.rel (0) target = $region137
    $region136: #{tpu_custom_call.1} parent=1 // pred_region
      %267 = dma.done [#allocation15], 16
    $region137: #{tpu_custom_call.1} parent=1 // pred_fallthru
      _
    // Predicated region
    $region138: #{tpu_custom_call.1} parent=1 // pred_check
      _
    $region139: #{tpu_custom_call.1} parent=1 // pred_check_branch
      %269 = sbr.rel (0) target = $region141
    $region140: #{tpu_custom_call.1} parent=1 // pred_region
      %271 = dma.done [#allocation15], 4096
    $region141: #{tpu_custom_call.1} parent=1 // pred_fallthru
      _
    // Predicated region
    $region142: #{tpu_custom_call.1} parent=1 // pred_check
      _
    $region143: #{tpu_custom_call.1} parent=1 // pred_check_branch
      %273 = sbr.rel (0) target = $region145
    $region144: #{tpu_custom_call.1} parent=1 // pred_region
      %275 = dma.done [#allocation18], 4096
    $region145: #{tpu_custom_call.1} parent=1 // pred_fallthru
      _
    // Predicated region
    $region146: #{tpu_custom_call.1} parent=1 // pred_check
      _
    $region147: #{tpu_custom_call.1} parent=1 // pred_check_branch
      %277 = sbr.rel (0) target = $region149
    $region148: #{tpu_custom_call.1} parent=1 // pred_region
      %279 = dma.done [#allocation18], 6144
    $region149: #{tpu_custom_call.1} parent=1 // pred_fallthru
      _
    // Predicated region
    $region150: #{tpu_custom_call.1} parent=1 // pred_check
      _
    $region151: #{tpu_custom_call.1} parent=1 // pred_check_branch
      %281 = sbr.rel (0) target = $region153
    $region152: #{tpu_custom_call.1} parent=1 // pred_region
      %283 = dma.done [#allocation21], 2048
    $region153: #{tpu_custom_call.1} parent=1 // pred_fallthru
      _
    // Predicated region
    $region154: #{tpu_custom_call.1} parent=1 // pred_check
      _
    $region155: #{tpu_custom_call.1} parent=1 // pred_check_branch
      %285 = sbr.rel (0) target = $region157
    $region156: #{tpu_custom_call.1} parent=1 // pred_region
      %287 = dma.done [#allocation21], 4096
    $region157: #{tpu_custom_call.1} parent=1 // pred_fallthru
      _
    // Predicated region
    $region158: #{tpu_custom_call.1} parent=1 // pred_check
      _
    $region159: #{tpu_custom_call.1} parent=1 // pred_check_branch
      %289 = sbr.rel (0) target = $region161
    $region160: #{tpu_custom_call.1} parent=1 // pred_region
      %291 = dma.done [#allocation24], 4096
    $region161: #{tpu_custom_call.1} parent=1 // pred_fallthru
      _
    %v292 = vlaneseq
    %v293 = vand.u32 %v292, 127
    %vm294 = vcmp.ge.s32.totalorder %v293, 0
    %vm295 = vcmp.lt.s32.totalorder %v293, 32
    %vm296 = vmand %vm294, %vm295
    %v297 = vsel %vm296, 1, 0
    %v298 = vcvt.s32.f32 %v297
    %vm299 = vcmp.ge.s32.totalorder %v293, 32
    %vm300 = vcmp.lt.s32.totalorder %v293, 64
    %vm301 = vmand %vm299, %vm300
    %v302 = vsel %vm301, 1, 0
    %v303 = vcvt.s32.f32 %v302
    %vm304 = vcmp.ge.s32.totalorder %v293, 64
    %vm305 = vcmp.lt.s32.totalorder %v293, 96
    %vm306 = vmand %vm304, %vm305
    %v307 = vsel %vm306, 1, 0
    %v308 = vcvt.s32.f32 %v307
    %vm309 = vcmp.ge.s32.totalorder %v293, 96
    %vm310 = vcmp.lt.s32.totalorder %v293, 128
    %vm311 = vmand %vm309, %vm310
    %v312 = vsel %vm311, 1, 0
    %v313 = vcvt.s32.f32 %v312
    %v314 = vld [vmem:[#allocation2] sm:$0xff]
    %v315 = vld [vmem:[#allocation2 + $0x8] sm:$0xff]
    %v316 = vld [vmem:[#allocation5] sm:$0xff]
    %v317 = vadd.f32 %v314, %v316
    %v318 = vadd.f32 %v315, %v316
    %v319 = vld [vmem:[#allocation7] sm:$0xff]
    %v320 = vld [vmem:[#allocation7 + $0x8] sm:$0xff]
    %v321 = vld [vmem:[#allocation7 + $0x10] sm:$0xff]
    %v322 = vld [vmem:[#allocation7 + $0x18] sm:$0xff]
    %v323 = vld [vmem:[#allocation7 + $0x20] sm:$0xff]
    %v324 = vld [vmem:[#allocation7 + $0x28] sm:$0xff]
    %v325 = vld [vmem:[#allocation7 + $0x30] sm:$0xff]
    %v326 = vld [vmem:[#allocation7 + $0x38] sm:$0xff]
    %v327 = vld [vmem:[#allocation7 + $0x40] sm:$0xff]
    %v328 = vld [vmem:[#allocation7 + $0x48] sm:$0xff]
    %v329 = vld [vmem:[#allocation7 + $0x50] sm:$0xff]
    %v330 = vld [vmem:[#allocation7 + $0x58] sm:$0xff]
    %v331 = vld [vmem:[#allocation7 + $0x60] sm:$0xff]
    %v332 = vld [vmem:[#allocation7 + $0x68] sm:$0xff]
    %v333 = vld [vmem:[#allocation7 + $0x70] sm:$0xff]
    %v334 = vld [vmem:[#allocation7 + $0x78] sm:$0xff]
    %v335 = vld [vmem:[#allocation7 + $0x80] sm:$0xff]
    %v336 = vld [vmem:[#allocation7 + $0x88] sm:$0xff]
    %v337 = vld [vmem:[#allocation7 + $0x90] sm:$0xff]
    %v338 = vld [vmem:[#allocation7 + $0x98] sm:$0xff]
    %v339 = vld [vmem:[#allocation7 + $0xa0] sm:$0xff]
    %v340 = vld [vmem:[#allocation7 + $0xa8] sm:$0xff]
    %v341 = vld [vmem:[#allocation7 + $0xb0] sm:$0xff]
    %v342 = vld [vmem:[#allocation7 + $0xb8] sm:$0xff]
    %v343 = vld [vmem:[#allocation7 + $0xc0] sm:$0xff]
    %v344 = vld [vmem:[#allocation7 + $0xc8] sm:$0xff]
    %v345 = vld [vmem:[#allocation7 + $0xd0] sm:$0xff]
    %v346 = vld [vmem:[#allocation7 + $0xd8] sm:$0xff]
    %v347 = vld [vmem:[#allocation7 + $0xe0] sm:$0xff]
    %v348 = vld [vmem:[#allocation7 + $0xe8] sm:$0xff]
    %v349 = vld [vmem:[#allocation7 + $0xf0] sm:$0xff]
    %v350 = vld [vmem:[#allocation7 + $0xf8] sm:$0xff]
    %v351 = vld [vmem:[#allocation7 + $0x100] sm:$0xff]
    %v352 = vld [vmem:[#allocation7 + $0x108] sm:$0xff]
    %v353 = vld [vmem:[#allocation7 + $0x110] sm:$0xff]
    %v354 = vld [vmem:[#allocation7 + $0x118] sm:$0xff]
    %v355 = vld [vmem:[#allocation7 + $0x120] sm:$0xff]
    %v356 = vld [vmem:[#allocation7 + $0x128] sm:$0xff]
    %v357 = vld [vmem:[#allocation7 + $0x130] sm:$0xff]
    %v358 = vld [vmem:[#allocation7 + $0x138] sm:$0xff]
    %v359 = vld [vmem:[#allocation7 + $0x140] sm:$0xff]
    %v360 = vld [vmem:[#allocation7 + $0x148] sm:$0xff]
    %v361 = vld [vmem:[#allocation7 + $0x150] sm:$0xff]
    %v362 = vld [vmem:[#allocation7 + $0x158] sm:$0xff]
    %v363 = vld [vmem:[#allocation7 + $0x160] sm:$0xff]
    %v364 = vld [vmem:[#allocation7 + $0x168] sm:$0xff]
    %v365 = vld [vmem:[#allocation7 + $0x170] sm:$0xff]
    %v366 = vld [vmem:[#allocation7 + $0x178] sm:$0xff]
    %v367 = vld [vmem:[#allocation8] sm:$0x7]
    %v368 = vld [vmem:[#allocation10] sm:$0xff]
    %v369 = vld [vmem:[#allocation10 + $0x8] sm:$0xff]
    %v370 = vld [vmem:[#allocation10 + $0x10] sm:$0xff]
    %v371 = vld [vmem:[#allocation10 + $0x18] sm:$0xff]
    %v372 = vld [vmem:[#allocation10 + $0x20] sm:$0xff]
    %v373 = vld [vmem:[#allocation10 + $0x28] sm:$0xff]
    %v374 = vld [vmem:[#allocation10 + $0x30] sm:$0xff]
    %v375 = vld [vmem:[#allocation10 + $0x38] sm:$0xff]
    %v376 = vld [vmem:[#allocation10 + $0x40] sm:$0xff]
    %v377 = vld [vmem:[#allocation10 + $0x48] sm:$0xff]
    %v378 = vld [vmem:[#allocation10 + $0x50] sm:$0xff]
    %v379 = vld [vmem:[#allocation10 + $0x58] sm:$0xff]
    %v380 = vld [vmem:[#allocation10 + $0x60] sm:$0xff]
    %v381 = vld [vmem:[#allocation10 + $0x68] sm:$0xff]
    %v382 = vld [vmem:[#allocation10 + $0x70] sm:$0xff]
    %v383 = vld [vmem:[#allocation10 + $0x78] sm:$0xff]
    %v384 = vld [vmem:[#allocation11] sm:$0x1]
    %v385 = vld [vmem:[#allocation13] sm:$0x1]
    %v386 = vld [vmem:[#allocation14] sm:$0x1]
    %v387 = vld [vmem:[#allocation16] sm:$0xff]
    %v388 = vld [vmem:[#allocation16 + $0x8] sm:$0xff]
    %v389 = vld [vmem:[#allocation16 + $0x10] sm:$0xff]
    %v390 = vld [vmem:[#allocation16 + $0x18] sm:$0xff]
    %v391 = vld [vmem:[#allocation16 + $0x20] sm:$0xff]
    %v392 = vld [vmem:[#allocation16 + $0x28] sm:$0xff]
    %v393 = vld [vmem:[#allocation16 + $0x30] sm:$0xff]
    %v394 = vld [vmem:[#allocation16 + $0x38] sm:$0xff]
    %v395 = vld [vmem:[#allocation16 + $0x40] sm:$0xff]
    %v396 = vld [vmem:[#allocation16 + $0x48] sm:$0xff]
    %v397 = vld [vmem:[#allocation16 + $0x50] sm:$0xff]
    %v398 = vld [vmem:[#allocation16 + $0x58] sm:$0xff]
    %v399 = vld [vmem:[#allocation16 + $0x60] sm:$0xff]
    %v400 = vld [vmem:[#allocation16 + $0x68] sm:$0xff]
    %v401 = vld [vmem:[#allocation16 + $0x70] sm:$0xff]
    %v402 = vld [vmem:[#allocation16 + $0x78] sm:$0xff]
    %v403 = vld [vmem:[#allocation16 + $0x80] sm:$0xff]
    %v404 = vld [vmem:[#allocation16 + $0x88] sm:$0xff]
    %v405 = vld [vmem:[#allocation16 + $0x90] sm:$0xff]
    %v406 = vld [vmem:[#allocation16 + $0x98] sm:$0xff]
    %v407 = vld [vmem:[#allocation16 + $0xa0] sm:$0xff]
    %v408 = vld [vmem:[#allocation16 + $0xa8] sm:$0xff]
    %v409 = vld [vmem:[#allocation16 + $0xb0] sm:$0xff]
    %v410 = vld [vmem:[#allocation16 + $0xb8] sm:$0xff]
    %v411 = vld [vmem:[#allocation16 + $0xc0] sm:$0xff]
    %v412 = vld [vmem:[#allocation16 + $0xc8] sm:$0xff]
    %v413 = vld [vmem:[#allocation16 + $0xd0] sm:$0xff]
    %v414 = vld [vmem:[#allocation16 + $0xd8] sm:$0xff]
    %v415 = vld [vmem:[#allocation16 + $0xe0] sm:$0xff]
    %v416 = vld [vmem:[#allocation16 + $0xe8] sm:$0xff]
    %v417 = vld [vmem:[#allocation16 + $0xf0] sm:$0xff]
    %v418 = vld [vmem:[#allocation16 + $0xf8] sm:$0xff]
    %v419 = vld [vmem:[%s9] sm:$0x3]
    %v420 = vld [vmem:[#allocation17] sm:$0xff]
    %v421 = vld [vmem:[#allocation17 + $0x8] sm:$0xff]
    %v422 = vld [vmem:[#allocation17 + $0x10] sm:$0xff]
    %v423 = vld [vmem:[#allocation17 + $0x18] sm:$0xff]
    %v424 = vld [vmem:[#allocation17 + $0x20] sm:$0xff]
    %v425 = vld [vmem:[#allocation17 + $0x28] sm:$0xff]
    %v426 = vld [vmem:[#allocation17 + $0x30] sm:$0xff]
    %v427 = vld [vmem:[#allocation17 + $0x38] sm:$0xff]
    %v428 = vld [vmem:[#allocation17 + $0x40] sm:$0xff]
    %v429 = vld [vmem:[#allocation17 + $0x48] sm:$0xff]
    %v430 = vld [vmem:[#allocation17 + $0x50] sm:$0xff]
    %v431 = vld [vmem:[#allocation17 + $0x58] sm:$0xff]
    %v432 = vld [vmem:[#allocation17 + $0x60] sm:$0xff]
    %v433 = vld [vmem:[#allocation17 + $0x68] sm:$0xff]
    %v434 = vld [vmem:[#allocation17 + $0x70] sm:$0xff]
    %v435 = vld [vmem:[#allocation17 + $0x78] sm:$0xff]
    %v436 = vld [vmem:[#allocation17 + $0x80] sm:$0xff]
    %v437 = vld [vmem:[#allocation17 + $0x88] sm:$0xff]
    %v438 = vld [vmem:[#allocation17 + $0x90] sm:$0xff]
    %v439 = vld [vmem:[#allocation17 + $0x98] sm:$0xff]
    %v440 = vld [vmem:[#allocation17 + $0xa0] sm:$0xff]
    %v441 = vld [vmem:[#allocation17 + $0xa8] sm:$0xff]
    %v442 = vld [vmem:[#allocation17 + $0xb0] sm:$0xff]
    %v443 = vld [vmem:[#allocation17 + $0xb8] sm:$0xff]
    %v444 = vld [vmem:[#allocation17 + $0xc0] sm:$0xff]
    %v445 = vld [vmem:[#allocation17 + $0xc8] sm:$0xff]
    %v446 = vld [vmem:[#allocation17 + $0xd0] sm:$0xff]
    %v447 = vld [vmem:[#allocation17 + $0xd8] sm:$0xff]
    %v448 = vld [vmem:[#allocation17 + $0xe0] sm:$0xff]
    %v449 = vld [vmem:[#allocation17 + $0xe8] sm:$0xff]
    %v450 = vld [vmem:[#allocation17 + $0xf0] sm:$0xff]
    %v451 = vld [vmem:[#allocation17 + $0xf8] sm:$0xff]
    %v452 = vld [vmem:[%s11] sm:$0x1]
    %v453 = vld [vmem:[%s12] sm:$0x1]
    %v454 = vld [vmem:[%s13] sm:$0x1]
    %v456 = vperm.slane %v367, 0
    %v457 = vperm.slane %v367, 1
    %v458 = vperm.slane %v367, 2
    %462 = vmatpush.msra.mxu0 %v364
    %463 = vmatpush.msra.mxu0 %v361
    %464 = vmatpush.msra.mxu0 %v358
    %465 = vmatpush.msra.mxu0 %v355
    %466 = vmatpush.msra.mxu0 %v352
    %467 = vmatpush.msra.mxu0 %v349
    %468 = vmatpush.msra.mxu0 %v346
    %469 = vmatpush.msra.mxu0 %v343
    %470 = vmatpush.msra.mxu0 %v340
    %471 = vmatpush.msra.mxu0 %v337
    %472 = vmatpush.msra.mxu0 %v334
    %473 = vmatpush.msra.mxu0 %v331
    %474 = vmatpush.msra.mxu0 %v328
    %475 = vmatpush.msra.mxu0 %v325
    %476 = vmatpush.msra.mxu0 %v322
    %477 = vmatpush.msra.mxu0 %v319
    %478 = vmatmul.f32.gmra.mxu0 %v317
    %v479 = vpop.f32.mrf.mxu0
    %v480 = vadd.f32 %v456, %v479
    %481 = vmatmul.f32.gmra.mxu0 %v318
    %v482 = vpop.f32.mrf.mxu0
    %v483 = vadd.f32 %v456, %v482
    %484 = vdwg.mxu0
    %485 = vmatpush.msra.mxu0 %v365
    %486 = vmatpush.msra.mxu0 %v362
    %487 = vmatpush.msra.mxu0 %v359
    %488 = vmatpush.msra.mxu0 %v356
    %489 = vmatpush.msra.mxu0 %v353
    %490 = vmatpush.msra.mxu0 %v350
    %491 = vmatpush.msra.mxu0 %v347
    %492 = vmatpush.msra.mxu0 %v344
    %493 = vmatpush.msra.mxu0 %v341
    %494 = vmatpush.msra.mxu0 %v338
    %495 = vmatpush.msra.mxu0 %v335
    %496 = vmatpush.msra.mxu0 %v332
    %497 = vmatpush.msra.mxu0 %v329
    %498 = vmatpush.msra.mxu0 %v326
    %499 = vmatpush.msra.mxu0 %v323
    %500 = vmatpush.msra.mxu0 %v320
    %501 = vmatmul.f32.gmra.mxu0 %v317
    %v502 = vpop.f32.mrf.mxu0
    %v503 = vadd.f32 %v457, %v502
    %504 = vmatmul.f32.gmra.mxu0 %v318
    %v505 = vpop.f32.mrf.mxu0
    %v506 = vadd.f32 %v457, %v505
    %507 = vdwg.mxu0
    %508 = vmatpush.msra.mxu0 %v366
    %509 = vmatpush.msra.mxu0 %v363
    %510 = vmatpush.msra.mxu0 %v360
    %511 = vmatpush.msra.mxu0 %v357
    %512 = vmatpush.msra.mxu0 %v354
    %513 = vmatpush.msra.mxu0 %v351
    %514 = vmatpush.msra.mxu0 %v348
    %515 = vmatpush.msra.mxu0 %v345
    %516 = vmatpush.msra.mxu0 %v342
    %517 = vmatpush.msra.mxu0 %v339
    %518 = vmatpush.msra.mxu0 %v336
    %519 = vmatpush.msra.mxu0 %v333
    %520 = vmatpush.msra.mxu0 %v330
    %521 = vmatpush.msra.mxu0 %v327
    %522 = vmatpush.msra.mxu0 %v324
    %523 = vmatpush.msra.mxu0 %v321
    %524 = vmatmul.f32.gmra.mxu0 %v317
    %v525 = vpop.f32.mrf.mxu0
    %v526 = vadd.f32 %v458, %v525
    %527 = vmatmul.f32.gmra.mxu0 %v318
    %v528 = vpop.f32.mrf.mxu0
    %v529 = vadd.f32 %v458, %v528
    %530 = vdwg.mxu0
    %v531 = vmul.f32 %v480, %v298
    %v532 = vmul.f32 %v483, %v298
    %533 = vmatpush.xpose.msra.mxu0 0.0
    %534 = vmatpush.xpose.msra.mxu0 0.0
    %535 = vmatpush.xpose.msra.mxu0 0.0
    %536 = vmatpush.xpose.msra.mxu0 0.0
    %537 = vmatpush.xpose.msra.mxu0 0.0
    %538 = vmatpush.xpose.msra.mxu0 0.0
    %539 = vmatpush.xpose.msra.mxu0 0.0
    %540 = vmatpush.xpose.msra.mxu0 0.0
    %541 = vmatpush.xpose.msra.mxu0 0.0
    %542 = vmatpush.xpose.msra.mxu0 0.0
    %543 = vmatpush.xpose.msra.mxu0 0.0
    %544 = vmatpush.xpose.msra.mxu0 0.0
    %545 = vmatpush.xpose.msra.mxu0 0.0
    %546 = vmatpush.xpose.msra.mxu0 0.0
    %547 = vmatpush.xpose.msra.mxu0 0.0
    %548 = vmatpush.xpose.msra.mxu0 %v503
    %549 = vmatmul.f32.gmra.mxu0 %v531
    %v550 = vpop.f32.mrf.mxu0
    %v551 = vadd.f32 0.0, %v550
    %552 = vdwg.mxu0
    %553 = vmatpush.xpose.msra.mxu0 0.0
    %554 = vmatpush.xpose.msra.mxu0 0.0
    %555 = vmatpush.xpose.msra.mxu0 0.0
    %556 = vmatpush.xpose.msra.mxu0 0.0
    %557 = vmatpush.xpose.msra.mxu0 0.0
    %558 = vmatpush.xpose.msra.mxu0 0.0
    %559 = vmatpush.xpose.msra.mxu0 0.0
    %560 = vmatpush.xpose.msra.mxu0 0.0
    %561 = vmatpush.xpose.msra.mxu0 0.0
    %562 = vmatpush.xpose.msra.mxu0 0.0
    %563 = vmatpush.xpose.msra.mxu0 0.0
    %564 = vmatpush.xpose.msra.mxu0 0.0
    %565 = vmatpush.xpose.msra.mxu0 0.0
    %566 = vmatpush.xpose.msra.mxu0 0.0
    %567 = vmatpush.xpose.msra.mxu0 0.0
    %568 = vmatpush.xpose.msra.mxu0 %v506
    %569 = vmatmul.f32.gmra.mxu0 %v532
    %v570 = vpop.f32.mrf.mxu0
    %v571 = vadd.f32 0.0, %v570
    %572 = vdwg.mxu0
    %v573 = vmul.f32 %v551, 0.17677669
    %v574 = vmul.f32 %v571, 0.17677669
    %vm575 = vcmask 64512
    %v576 = vsel %vm575, %v573, -inf
    %577 = vmax.xlane.f32.xlu0 %v576
    %v578 = vpop.xlane.xlu0 %577
    %v579 = vsel %vm575, %v574, -inf
    %580 = vmax.xlane.f32.xlu0 %v579
    %v581 = vpop.xlane.xlu0 %580
    %v582 = vsub.f32 %v573, %v578
    %v583 = vsub.f32 %v574, %v581
    %v584 = vmul.f32 %v582, 1.442695
    %v585 = vpow.pop %v584
    %v586 = vmul.f32 %v583, 1.442695
    %v587 = vpow.pop %v586
    %v588 = vsel %vm575, %v585, 0.0
    %589 = vadd.xlane.f32.xlu0 %v588
    %v590 = vpop.xlane.xlu0 %589
    %v591 = vsel %vm575, %v587, 0.0
    %592 = vadd.xlane.f32.xlu0 %v591
    %v593 = vpop.xlane.xlu0 %592
    %v594 = vrcp.pop %v590
    %v595 = vmul.f32 %v590, %v594
    %v596 = vsub.f32 1.0, %v595
    %v597 = vmul.f32 %v594, %v596
    %v598 = vadd.f32 %v594, %v597
    %vm599 = vweird.f32 %v590
    %vm600 = vweird.f32 %v594
    %vm601 = vmor %vm599, %vm600
    %v602 = vsel %vm601, %v594, %v598
    %v603 = vand.u32 2147483647, %v590
    %vm604 = vcmp.eq.f32.partialorder %v603, 8.507059e+37
    %v605 = vand.u32 %v590, 2147483648
    %v606 = vor.u32 1.1754944e-38, %v605
    %v607 = vsel %vm604, %v606, %v602
    %v608 = vrcp.pop %v593
    %v609 = vmul.f32 %v593, %v608
    %v610 = vsub.f32 1.0, %v609
    %v611 = vmul.f32 %v608, %v610
    %v612 = vadd.f32 %v608, %v611
    %vm613 = vweird.f32 %v593
    %vm614 = vweird.f32 %v608
    %vm615 = vmor %vm613, %vm614
    %v616 = vsel %vm615, %v608, %v612
    %v617 = vand.u32 2147483647, %v593
    %vm618 = vcmp.eq.f32.partialorder %v617, 8.507059e+37
    %v619 = vand.u32 %v593, 2147483648
    %v620 = vor.u32 1.1754944e-38, %v619
    %v621 = vsel %vm618, %v620, %v616
    %v622 = vmul.f32 %v585, %v607
    %v623 = vmul.f32 %v587, %v621
    %v624 = vmul.f32 %v526, %v298
    %v625 = vmul.f32 %v529, %v298
    %v626 = vmul.f32 %v480, %v303
    %v627 = vmul.f32 %v483, %v303
    %628 = vmatpush.xpose.msra.mxu0 0.0
    %629 = vmatpush.xpose.msra.mxu0 0.0
    %630 = vmatpush.xpose.msra.mxu0 0.0
    %631 = vmatpush.xpose.msra.mxu0 0.0
    %632 = vmatpush.xpose.msra.mxu0 0.0
    %633 = vmatpush.xpose.msra.mxu0 0.0
    %634 = vmatpush.xpose.msra.mxu0 0.0
    %635 = vmatpush.xpose.msra.mxu0 0.0
    %636 = vmatpush.xpose.msra.mxu0 0.0
    %637 = vmatpush.xpose.msra.mxu0 0.0
    %638 = vmatpush.xpose.msra.mxu0 0.0
    %639 = vmatpush.xpose.msra.mxu0 0.0
    %640 = vmatpush.xpose.msra.mxu0 0.0
    %641 = vmatpush.xpose.msra.mxu0 0.0
    %642 = vmatpush.xpose.msra.mxu0 0.0
    %643 = vmatpush.xpose.msra.mxu0 %v503
    %644 = vmatmul.f32.gmra.mxu0 %v626
    %v645 = vpop.f32.mrf.mxu0
    %v646 = vadd.f32 0.0, %v645
    %647 = vdwg.mxu0
    %648 = vmatpush.xpose.msra.mxu0 0.0
    %649 = vmatpush.xpose.msra.mxu0 0.0
    %650 = vmatpush.xpose.msra.mxu0 0.0
    %651 = vmatpush.xpose.msra.mxu0 0.0
    %652 = vmatpush.xpose.msra.mxu0 0.0
    %653 = vmatpush.xpose.msra.mxu0 0.0
    %654 = vmatpush.xpose.msra.mxu0 0.0
    %655 = vmatpush.xpose.msra.mxu0 0.0
    %656 = vmatpush.xpose.msra.mxu0 0.0
    %657 = vmatpush.xpose.msra.mxu0 0.0
    %658 = vmatpush.xpose.msra.mxu0 0.0
    %659 = vmatpush.xpose.msra.mxu0 0.0
    %660 = vmatpush.xpose.msra.mxu0 0.0
    %661 = vmatpush.xpose.msra.mxu0 0.0
    %662 = vmatpush.xpose.msra.mxu0 0.0
    %663 = vmatpush.xpose.msra.mxu0 %v506
    %664 = vmatmul.f32.gmra.mxu0 %v627
    %v665 = vpop.f32.mrf.mxu0
    %v666 = vadd.f32 0.0, %v665
    %667 = vdwg.mxu0
    %v668 = vmul.f32 %v646, 0.17677669
    %v669 = vmul.f32 %v666, 0.17677669
    %v670 = vsel %vm575, %v668, -inf
    %671 = vmax.xlane.f32.xlu0 %v670
    %v672 = vpop.xlane.xlu0 %671
    %v673 = vsel %vm575, %v669, -inf
    %674 = vmax.xlane.f32.xlu0 %v673
    %v675 = vpop.xlane.xlu0 %674
    %v676 = vsub.f32 %v668, %v672
    %v677 = vsub.f32 %v669, %v675
    %v678 = vmul.f32 %v676, 1.442695
    %v679 = vpow.pop %v678
    %v680 = vmul.f32 %v677, 1.442695
    %v681 = vpow.pop %v680
    %v682 = vsel %vm575, %v679, 0.0
    %683 = vadd.xlane.f32.xlu0 %v682
    %v684 = vpop.xlane.xlu0 %683
    %v685 = vsel %vm575, %v681, 0.0
    %686 = vadd.xlane.f32.xlu0 %v685
    %v687 = vpop.xlane.xlu0 %686
    %v688 = vrcp.pop %v684
    %v689 = vmul.f32 %v684, %v688
    %v690 = vsub.f32 1.0, %v689
    %v691 = vmul.f32 %v688, %v690
    %v692 = vadd.f32 %v688, %v691
    %vm693 = vweird.f32 %v684
    %vm694 = vweird.f32 %v688
    %vm695 = vmor %vm693, %vm694
    %v696 = vsel %vm695, %v688, %v692
    %v697 = vand.u32 2147483647, %v684
    %vm698 = vcmp.eq.f32.partialorder %v697, 8.507059e+37
    %v699 = vand.u32 %v684, 2147483648
    %v700 = vor.u32 1.1754944e-38, %v699
    %v701 = vsel %vm698, %v700, %v696
    %v702 = vrcp.pop %v687
    %v703 = vmul.f32 %v687, %v702
    %v704 = vsub.f32 1.0, %v703
    %v705 = vmul.f32 %v702, %v704
    %v706 = vadd.f32 %v702, %v705
    %vm707 = vweird.f32 %v687
    %vm708 = vweird.f32 %v702
    %vm709 = vmor %vm707, %vm708
    %v710 = vsel %vm709, %v702, %v706
    %v711 = vand.u32 2147483647, %v687
    %vm712 = vcmp.eq.f32.partialorder %v711, 8.507059e+37
    %v713 = vand.u32 %v687, 2147483648
    %v714 = vor.u32 1.1754944e-38, %v713
    %v715 = vsel %vm712, %v714, %v710
    %v716 = vmul.f32 %v679, %v701
    %v717 = vmul.f32 %v681, %v715
    %v718 = vmul.f32 %v526, %v303
    %v719 = vmul.f32 %v529, %v303
    %v721 = vsel %vm575, %v716, 0
    %723 = vmatpush.msra.mxu0 0.0
    %724 = vmatpush.msra.mxu0 0.0
    %725 = vmatpush.msra.mxu0 0.0
    %726 = vmatpush.msra.mxu0 0.0
    %727 = vmatpush.msra.mxu0 0.0
    %728 = vmatpush.msra.mxu0 0.0
    %729 = vmatpush.msra.mxu0 0.0
    %730 = vmatpush.msra.mxu0 0.0
    %731 = vmatpush.msra.mxu0 0.0
    %732 = vmatpush.msra.mxu0 0.0
    %733 = vmatpush.msra.mxu0 0.0
    %734 = vmatpush.msra.mxu0 0.0
    %735 = vmatpush.msra.mxu0 0.0
    %736 = vmatpush.msra.mxu0 0.0
    %737 = vmatpush.msra.mxu0 0.0
    %738 = vmatpush.msra.mxu0 %v718
    %739 = vmatmul.f32.gmra.mxu0 %v721
    %v740 = vpop.f32.mrf.mxu0
    %v741 = vadd.f32 0.0, %v740
    %742 = vdwg.mxu0
    %v744 = vsel %vm575, %v717, 0
    %746 = vmatpush.msra.mxu0 0.0
    %747 = vmatpush.msra.mxu0 0.0
    %748 = vmatpush.msra.mxu0 0.0
    %749 = vmatpush.msra.mxu0 0.0
    %750 = vmatpush.msra.mxu0 0.0
    %751 = vmatpush.msra.mxu0 0.0
    %752 = vmatpush.msra.mxu0 0.0
    %753 = vmatpush.msra.mxu0 0.0
    %754 = vmatpush.msra.mxu0 0.0
    %755 = vmatpush.msra.mxu0 0.0
    %756 = vmatpush.msra.mxu0 0.0
    %757 = vmatpush.msra.mxu0 0.0
    %758 = vmatpush.msra.mxu0 0.0
    %759 = vmatpush.msra.mxu0 0.0
    %760 = vmatpush.msra.mxu0 0.0
    %761 = vmatpush.msra.mxu0 %v719
    %762 = vmatmul.f32.gmra.mxu0 %v744
    %v763 = vpop.f32.mrf.mxu0
    %v764 = vadd.f32 0.0, %v763
    %765 = vdwg.mxu0
    %v767 = vsel %vm575, %v622, 0
    %769 = vmatpush.msra.mxu0 0.0
    %770 = vmatpush.msra.mxu0 0.0
    %771 = vmatpush.msra.mxu0 0.0
    %772 = vmatpush.msra.mxu0 0.0
    %773 = vmatpush.msra.mxu0 0.0
    %774 = vmatpush.msra.mxu0 0.0
    %775 = vmatpush.msra.mxu0 0.0
    %776 = vmatpush.msra.mxu0 0.0
    %777 = vmatpush.msra.mxu0 0.0
    %778 = vmatpush.msra.mxu0 0.0
    %779 = vmatpush.msra.mxu0 0.0
    %780 = vmatpush.msra.mxu0 0.0
    %781 = vmatpush.msra.mxu0 0.0
    %782 = vmatpush.msra.mxu0 0.0
    %783 = vmatpush.msra.mxu0 0.0
    %784 = vmatpush.msra.mxu0 %v624
    %785 = vmatmul.f32.gmra.mxu0 %v767
    %v786 = vpop.f32.mrf.mxu0
    %v787 = vadd.f32 %v741, %v786
    %788 = vdwg.mxu0
    %v790 = vsel %vm575, %v623, 0
    %792 = vmatpush.msra.mxu0 0.0
    %793 = vmatpush.msra.mxu0 0.0
    %794 = vmatpush.msra.mxu0 0.0
    %795 = vmatpush.msra.mxu0 0.0
    %796 = vmatpush.msra.mxu0 0.0
    %797 = vmatpush.msra.mxu0 0.0
    %798 = vmatpush.msra.mxu0 0.0
    %799 = vmatpush.msra.mxu0 0.0
    %800 = vmatpush.msra.mxu0 0.0
    %801 = vmatpush.msra.mxu0 0.0
    %802 = vmatpush.msra.mxu0 0.0
    %803 = vmatpush.msra.mxu0 0.0
    %804 = vmatpush.msra.mxu0 0.0
    %805 = vmatpush.msra.mxu0 0.0
    %806 = vmatpush.msra.mxu0 0.0
    %807 = vmatpush.msra.mxu0 %v625
    %808 = vmatmul.f32.gmra.mxu0 %v790
    %v809 = vpop.f32.mrf.mxu0
    %v810 = vadd.f32 %v764, %v809
    %811 = vdwg.mxu0
    %v812 = vmul.f32 %v480, %v308
    %v813 = vmul.f32 %v483, %v308
    %814 = vmatpush.xpose.msra.mxu0 0.0
    %815 = vmatpush.xpose.msra.mxu0 0.0
    %816 = vmatpush.xpose.msra.mxu0 0.0
    %817 = vmatpush.xpose.msra.mxu0 0.0
    %818 = vmatpush.xpose.msra.mxu0 0.0
    %819 = vmatpush.xpose.msra.mxu0 0.0
    %820 = vmatpush.xpose.msra.mxu0 0.0
    %821 = vmatpush.xpose.msra.mxu0 0.0
    %822 = vmatpush.xpose.msra.mxu0 0.0
    %823 = vmatpush.xpose.msra.mxu0 0.0
    %824 = vmatpush.xpose.msra.mxu0 0.0
    %825 = vmatpush.xpose.msra.mxu0 0.0
    %826 = vmatpush.xpose.msra.mxu0 0.0
    %827 = vmatpush.xpose.msra.mxu0 0.0
    %828 = vmatpush.xpose.msra.mxu0 0.0
    %829 = vmatpush.xpose.msra.mxu0 %v503
    %830 = vmatmul.f32.gmra.mxu0 %v812
    %v831 = vpop.f32.mrf.mxu0
    %v832 = vadd.f32 0.0, %v831
    %833 = vdwg.mxu0
    %834 = vmatpush.xpose.msra.mxu0 0.0
    %835 = vmatpush.xpose.msra.mxu0 0.0
    %836 = vmatpush.xpose.msra.mxu0 0.0
    %837 = vmatpush.xpose.msra.mxu0 0.0
    %838 = vmatpush.xpose.msra.mxu0 0.0
    %839 = vmatpush.xpose.msra.mxu0 0.0
    %840 = vmatpush.xpose.msra.mxu0 0.0
    %841 = vmatpush.xpose.msra.mxu0 0.0
    %842 = vmatpush.xpose.msra.mxu0 0.0
    %843 = vmatpush.xpose.msra.mxu0 0.0
    %844 = vmatpush.xpose.msra.mxu0 0.0
    %845 = vmatpush.xpose.msra.mxu0 0.0
    %846 = vmatpush.xpose.msra.mxu0 0.0
    %847 = vmatpush.xpose.msra.mxu0 0.0
    %848 = vmatpush.xpose.msra.mxu0 0.0
    %849 = vmatpush.xpose.msra.mxu0 %v506
    %850 = vmatmul.f32.gmra.mxu0 %v813
    %v851 = vpop.f32.mrf.mxu0
    %v852 = vadd.f32 0.0, %v851
    %853 = vdwg.mxu0
    %v854 = vmul.f32 %v832, 0.17677669
    %v855 = vmul.f32 %v852, 0.17677669
    %v856 = vsel %vm575, %v854, -inf
    %857 = vmax.xlane.f32.xlu0 %v856
    %v858 = vpop.xlane.xlu0 %857
    %v859 = vsel %vm575, %v855, -inf
    %860 = vmax.xlane.f32.xlu0 %v859
    %v861 = vpop.xlane.xlu0 %860
    %v862 = vsub.f32 %v854, %v858
    %v863 = vsub.f32 %v855, %v861
    %v864 = vmul.f32 %v862, 1.442695
    %v865 = vpow.pop %v864
    %v866 = vmul.f32 %v863, 1.442695
    %v867 = vpow.pop %v866
    %v868 = vsel %vm575, %v865, 0.0
    %869 = vadd.xlane.f32.xlu0 %v868
    %v870 = vpop.xlane.xlu0 %869
    %v871 = vsel %vm575, %v867, 0.0
    %872 = vadd.xlane.f32.xlu0 %v871
    %v873 = vpop.xlane.xlu0 %872
    %v874 = vrcp.pop %v870
    %v875 = vmul.f32 %v870, %v874
    %v876 = vsub.f32 1.0, %v875
    %v877 = vmul.f32 %v874, %v876
    %v878 = vadd.f32 %v874, %v877
    %vm879 = vweird.f32 %v870
    %vm880 = vweird.f32 %v874
    %vm881 = vmor %vm879, %vm880
    %v882 = vsel %vm881, %v874, %v878
    %v883 = vand.u32 2147483647, %v870
    %vm884 = vcmp.eq.f32.partialorder %v883, 8.507059e+37
    %v885 = vand.u32 %v870, 2147483648
    %v886 = vor.u32 1.1754944e-38, %v885
    %v887 = vsel %vm884, %v886, %v882
    %v888 = vrcp.pop %v873
    %v889 = vmul.f32 %v873, %v888
    %v890 = vsub.f32 1.0, %v889
    %v891 = vmul.f32 %v888, %v890
    %v892 = vadd.f32 %v888, %v891
    %vm893 = vweird.f32 %v873
    %vm894 = vweird.f32 %v888
    %vm895 = vmor %vm893, %vm894
    %v896 = vsel %vm895, %v888, %v892
    %v897 = vand.u32 2147483647, %v873
    %vm898 = vcmp.eq.f32.partialorder %v897, 8.507059e+37
    %v899 = vand.u32 %v873, 2147483648
    %v900 = vor.u32 1.1754944e-38, %v899
    %v901 = vsel %vm898, %v900, %v896
    %v902 = vmul.f32 %v865, %v887
    %v903 = vmul.f32 %v867, %v901
    %v904 = vmul.f32 %v526, %v308
    %v905 = vmul.f32 %v529, %v308
    %v907 = vsel %vm575, %v902, 0
    %909 = vmatpush.msra.mxu0 0.0
    %910 = vmatpush.msra.mxu0 0.0
    %911 = vmatpush.msra.mxu0 0.0
    %912 = vmatpush.msra.mxu0 0.0
    %913 = vmatpush.msra.mxu0 0.0
    %914 = vmatpush.msra.mxu0 0.0
    %915 = vmatpush.msra.mxu0 0.0
    %916 = vmatpush.msra.mxu0 0.0
    %917 = vmatpush.msra.mxu0 0.0
    %918 = vmatpush.msra.mxu0 0.0
    %919 = vmatpush.msra.mxu0 0.0
    %920 = vmatpush.msra.mxu0 0.0
    %921 = vmatpush.msra.mxu0 0.0
    %922 = vmatpush.msra.mxu0 0.0
    %923 = vmatpush.msra.mxu0 0.0
    %924 = vmatpush.msra.mxu0 %v904
    %925 = vmatmul.f32.gmra.mxu0 %v907
    %v926 = vpop.f32.mrf.mxu0
    %v927 = vadd.f32 0.0, %v926
    %928 = vdwg.mxu0
    %v930 = vsel %vm575, %v903, 0
    %932 = vmatpush.msra.mxu0 0.0
    %933 = vmatpush.msra.mxu0 0.0
    %934 = vmatpush.msra.mxu0 0.0
    %935 = vmatpush.msra.mxu0 0.0
    %936 = vmatpush.msra.mxu0 0.0
    %937 = vmatpush.msra.mxu0 0.0
    %938 = vmatpush.msra.mxu0 0.0
    %939 = vmatpush.msra.mxu0 0.0
    %940 = vmatpush.msra.mxu0 0.0
    %941 = vmatpush.msra.mxu0 0.0
    %942 = vmatpush.msra.mxu0 0.0
    %943 = vmatpush.msra.mxu0 0.0
    %944 = vmatpush.msra.mxu0 0.0
    %945 = vmatpush.msra.mxu0 0.0
    %946 = vmatpush.msra.mxu0 0.0
    %947 = vmatpush.msra.mxu0 %v905
    %948 = vmatmul.f32.gmra.mxu0 %v930
    %v949 = vpop.f32.mrf.mxu0
    %v950 = vadd.f32 0.0, %v949
    %951 = vdwg.mxu0
    %v952 = vadd.f32 %v787, %v927
    %v953 = vadd.f32 %v810, %v950
    %v954 = vmul.f32 %v480, %v313
    %v955 = vmul.f32 %v483, %v313
    %956 = vmatpush.xpose.msra.mxu0 0.0
    %957 = vmatpush.xpose.msra.mxu0 0.0
    %958 = vmatpush.xpose.msra.mxu0 0.0
    %959 = vmatpush.xpose.msra.mxu0 0.0
    %960 = vmatpush.xpose.msra.mxu0 0.0
    %961 = vmatpush.xpose.msra.mxu0 0.0
    %962 = vmatpush.xpose.msra.mxu0 0.0
    %963 = vmatpush.xpose.msra.mxu0 0.0
    %964 = vmatpush.xpose.msra.mxu0 0.0
    %965 = vmatpush.xpose.msra.mxu0 0.0
    %966 = vmatpush.xpose.msra.mxu0 0.0
    %967 = vmatpush.xpose.msra.mxu0 0.0
    %968 = vmatpush.xpose.msra.mxu0 0.0
    %969 = vmatpush.xpose.msra.mxu0 0.0
    %970 = vmatpush.xpose.msra.mxu0 0.0
    %971 = vmatpush.xpose.msra.mxu0 %v503
    %972 = vmatmul.f32.gmra.mxu0 %v954
    %v973 = vpop.f32.mrf.mxu0
    %v974 = vadd.f32 0.0, %v973
    %975 = vdwg.mxu0
    %976 = vmatpush.xpose.msra.mxu0 0.0
    %977 = vmatpush.xpose.msra.mxu0 0.0
    %978 = vmatpush.xpose.msra.mxu0 0.0
    %979 = vmatpush.xpose.msra.mxu0 0.0
    %980 = vmatpush.xpose.msra.mxu0 0.0
    %981 = vmatpush.xpose.msra.mxu0 0.0
    %982 = vmatpush.xpose.msra.mxu0 0.0
    %983 = vmatpush.xpose.msra.mxu0 0.0
    %984 = vmatpush.xpose.msra.mxu0 0.0
    %985 = vmatpush.xpose.msra.mxu0 0.0
    %986 = vmatpush.xpose.msra.mxu0 0.0
    %987 = vmatpush.xpose.msra.mxu0 0.0
    %988 = vmatpush.xpose.msra.mxu0 0.0
    %989 = vmatpush.xpose.msra.mxu0 0.0
    %990 = vmatpush.xpose.msra.mxu0 0.0
    %991 = vmatpush.xpose.msra.mxu0 %v506
    %992 = vmatmul.f32.gmra.mxu0 %v955
    %v993 = vpop.f32.mrf.mxu0
    %v994 = vadd.f32 0.0, %v993
    %995 = vdwg.mxu0
    %v996 = vmul.f32 %v974, 0.17677669
    %v997 = vmul.f32 %v994, 0.17677669
    %v998 = vsel %vm575, %v996, -inf
    %999 = vmax.xlane.f32.xlu0 %v998
    %v1000 = vpop.xlane.xlu0 %999
    %v1001 = vsel %vm575, %v997, -inf
    %1002 = vmax.xlane.f32.xlu0 %v1001
    %v1003 = vpop.xlane.xlu0 %1002
    %v1004 = vsub.f32 %v996, %v1000
    %v1005 = vsub.f32 %v997, %v1003
    %v1006 = vmul.f32 %v1004, 1.442695
    %v1007 = vpow.pop %v1006
    %v1008 = vmul.f32 %v1005, 1.442695
    %v1009 = vpow.pop %v1008
    %v1010 = vsel %vm575, %v1007, 0.0
    %1011 = vadd.xlane.f32.xlu0 %v1010
    %v1012 = vpop.xlane.xlu0 %1011
    %v1013 = vsel %vm575, %v1009, 0.0
    %1014 = vadd.xlane.f32.xlu0 %v1013
    %v1015 = vpop.xlane.xlu0 %1014
    %v1016 = vrcp.pop %v1012
    %v1017 = vmul.f32 %v1012, %v1016
    %v1018 = vsub.f32 1.0, %v1017
    %v1019 = vmul.f32 %v1016, %v1018
    %v1020 = vadd.f32 %v1016, %v1019
    %vm1021 = vweird.f32 %v1012
    %vm1022 = vweird.f32 %v1016
    %vm1023 = vmor %vm1021, %vm1022
    %v1024 = vsel %vm1023, %v1016, %v1020
    %v1025 = vand.u32 2147483647, %v1012
    %vm1026 = vcmp.eq.f32.partialorder %v1025, 8.507059e+37
    %v1027 = vand.u32 %v1012, 2147483648
    %v1028 = vor.u32 1.1754944e-38, %v1027
    %v1029 = vsel %vm1026, %v1028, %v1024
    %v1030 = vrcp.pop %v1015
    %v1031 = vmul.f32 %v1015, %v1030
    %v1032 = vsub.f32 1.0, %v1031
    %v1033 = vmul.f32 %v1030, %v1032
    %v1034 = vadd.f32 %v1030, %v1033
    %vm1035 = vweird.f32 %v1015
    %vm1036 = vweird.f32 %v1030
    %vm1037 = vmor %vm1035, %vm1036
    %v1038 = vsel %vm1037, %v1030, %v1034
    %v1039 = vand.u32 2147483647, %v1015
    %vm1040 = vcmp.eq.f32.partialorder %v1039, 8.507059e+37
    %v1041 = vand.u32 %v1015, 2147483648
    %v1042 = vor.u32 1.1754944e-38, %v1041
    %v1043 = vsel %vm1040, %v1042, %v1038
    %v1044 = vmul.f32 %v1007, %v1029
    %v1045 = vmul.f32 %v1009, %v1043
    %v1046 = vmul.f32 %v526, %v313
    %v1047 = vmul.f32 %v529, %v313
    %v1049 = vsel %vm575, %v1044, 0
    %1051 = vmatpush.msra.mxu0 0.0
    %1052 = vmatpush.msra.mxu0 0.0
    %1053 = vmatpush.msra.mxu0 0.0
    %1054 = vmatpush.msra.mxu0 0.0
    %1055 = vmatpush.msra.mxu0 0.0
    %1056 = vmatpush.msra.mxu0 0.0
    %1057 = vmatpush.msra.mxu0 0.0
    %1058 = vmatpush.msra.mxu0 0.0
    %1059 = vmatpush.msra.mxu0 0.0
    %1060 = vmatpush.msra.mxu0 0.0
    %1061 = vmatpush.msra.mxu0 0.0
    %1062 = vmatpush.msra.mxu0 0.0
    %1063 = vmatpush.msra.mxu0 0.0
    %1064 = vmatpush.msra.mxu0 0.0
    %1065 = vmatpush.msra.mxu0 0.0
    %1066 = vmatpush.msra.mxu0 %v1046
    %1067 = vmatmul.f32.gmra.mxu0 %v1049
    %v1068 = vpop.f32.mrf.mxu0
    %v1069 = vadd.f32 0.0, %v1068
    %1070 = vdwg.mxu0
    %v1072 = vsel %vm575, %v1045, 0
    %1074 = vmatpush.msra.mxu0 0.0
    %1075 = vmatpush.msra.mxu0 0.0
    %1076 = vmatpush.msra.mxu0 0.0
    %1077 = vmatpush.msra.mxu0 0.0
    %1078 = vmatpush.msra.mxu0 0.0
    %1079 = vmatpush.msra.mxu0 0.0
    %1080 = vmatpush.msra.mxu0 0.0
    %1081 = vmatpush.msra.mxu0 0.0
    %1082 = vmatpush.msra.mxu0 0.0
    %1083 = vmatpush.msra.mxu0 0.0
    %1084 = vmatpush.msra.mxu0 0.0
    %1085 = vmatpush.msra.mxu0 0.0
    %1086 = vmatpush.msra.mxu0 0.0
    %1087 = vmatpush.msra.mxu0 0.0
    %1088 = vmatpush.msra.mxu0 0.0
    %1089 = vmatpush.msra.mxu0 %v1047
    %1090 = vmatmul.f32.gmra.mxu0 %v1072
    %v1091 = vpop.f32.mrf.mxu0
    %v1092 = vadd.f32 0.0, %v1091
    %1093 = vdwg.mxu0
    %v1094 = vadd.f32 %v952, %v1069
    %v1095 = vadd.f32 %v953, %v1092
    %v1097 = vperm.slane %v384, 0
    %1099 = vmatpush.msra.mxu0 %v383
    %1100 = vmatpush.msra.mxu0 %v382
    %1101 = vmatpush.msra.mxu0 %v381
    %1102 = vmatpush.msra.mxu0 %v380
    %1103 = vmatpush.msra.mxu0 %v379
    %1104 = vmatpush.msra.mxu0 %v378
    %1105 = vmatpush.msra.mxu0 %v377
    %1106 = vmatpush.msra.mxu0 %v376
    %1107 = vmatpush.msra.mxu0 %v375
    %1108 = vmatpush.msra.mxu0 %v374
    %1109 = vmatpush.msra.mxu0 %v373
    %1110 = vmatpush.msra.mxu0 %v372
    %1111 = vmatpush.msra.mxu0 %v371
    %1112 = vmatpush.msra.mxu0 %v370
    %1113 = vmatpush.msra.mxu0 %v369
    %1114 = vmatpush.msra.mxu0 %v368
    %1115 = vmatmul.f32.gmra.mxu0 %v1094
    %v1116 = vpop.f32.mrf.mxu0
    %v1117 = vadd.f32 %v1097, %v1116
    %1118 = vmatmul.f32.gmra.mxu0 %v1095
    %v1119 = vpop.f32.mrf.mxu0
    %v1120 = vadd.f32 %v1097, %v1119
    %1121 = vdwg.mxu0
    %v1122 = vadd.f32 %v317, %v1117
    %v1123 = vadd.f32 %v318, %v1120
    %1124 = vadd.xlane.f32.xlu0 %v1122
    %v1125 = vpop.xlane.xlu0 %1124
    %1126 = vadd.xlane.f32.xlu0 %v1123
    %v1127 = vpop.xlane.xlu0 %1126
    %v1128 = vrcp.pop 128.0
    %v1129 = vmul.f32 128.0, %v1128
    %v1130 = vsub.f32 1.0, %v1129
    %v1131 = vmul.f32 %v1128, %v1130
    %v1132 = vadd.f32 %v1128, %v1131
    %vm1133 = vweird.f32 %v1128
    %v1134 = vsel %vm1133, %v1128, %v1132
    %v1135 = vmul.f32 %v1125, %v1134
    %v1136 = vmul.f32 %v1127, %v1134
    %v1137 = vsub.f32 %v1122, %v1135
    %v1138 = vsub.f32 %v1123, %v1136
    %v1139 = vmul.f32 %v1137, %v1137
    %v1140 = vmul.f32 %v1138, %v1138
    %1141 = vadd.xlane.f32.xlu0 %v1139
    %v1142 = vpop.xlane.xlu0 %1141
    %1143 = vadd.xlane.f32.xlu0 %v1140
    %v1144 = vpop.xlane.xlu0 %1143
    %v1145 = vmul.f32 %v1142, %v1134
    %v1146 = vmul.f32 %v1144, %v1134
    %v1147 = vadd.f32 %v1145, 1e-05
    %v1148 = vadd.f32 %v1146, 1e-05
    %v1149 = vrsqrt.pop %v1147
    %v1150 = vmul.f32 %v1149, %v1147
    %v1151 = vmul.f32 %v1150, %v1149
    %v1152 = vmul.f32 0.5, %v1151
    %v1153 = vsub.f32 1.5, %v1152
    %v1154 = vmul.f32 %v1149, %v1153
    %vm1155 = vweird.f32 %v1147
    %vm1156 = vweird.f32 %v1149
    %vm1157 = vmor %vm1155, %vm1156
    %v1158 = vsel %vm1157, %v1149, %v1154
    %v1159 = vrsqrt.pop %v1148
    %v1160 = vmul.f32 %v1159, %v1148
    %v1161 = vmul.f32 %v1160, %v1159
    %v1162 = vmul.f32 0.5, %v1161
    %v1163 = vsub.f32 1.5, %v1162
    %v1164 = vmul.f32 %v1159, %v1163
    %vm1165 = vweird.f32 %v1148
    %vm1166 = vweird.f32 %v1159
    %vm1167 = vmor %vm1165, %vm1166
    %v1168 = vsel %vm1167, %v1159, %v1164
    %v1169 = vmul.f32 %v1137, %v1158
    %v1170 = vmul.f32 %v1138, %v1168
    %v1172 = vperm.slane %v385, 0
    %v1174 = vmul.f32 %v1169, %v1172
    %v1175 = vmul.f32 %v1170, %v1172
    %v1177 = vperm.slane %v386, 0
    %v1179 = vadd.f32 %v1174, %v1177
    %v1180 = vadd.f32 %v1175, %v1177
    %v1182 = vperm.slane %v419, 0
    %v1183 = vperm.slane %v419, 1
    %1186 = vmatpush.msra.mxu0 %v417
    %1187 = vmatpush.msra.mxu0 %v415
    %1188 = vmatpush.msra.mxu0 %v413
    %1189 = vmatpush.msra.mxu0 %v411
    %1190 = vmatpush.msra.mxu0 %v409
    %1191 = vmatpush.msra.mxu0 %v407
    %1192 = vmatpush.msra.mxu0 %v405
    %1193 = vmatpush.msra.mxu0 %v403
    %1194 = vmatpush.msra.mxu0 %v401
    %1195 = vmatpush.msra.mxu0 %v399
    %1196 = vmatpush.msra.mxu0 %v397
    %1197 = vmatpush.msra.mxu0 %v395
    %1198 = vmatpush.msra.mxu0 %v393
    %1199 = vmatpush.msra.mxu0 %v391
    %1200 = vmatpush.msra.mxu0 %v389
    %1201 = vmatpush.msra.mxu0 %v387
    %1202 = vmatmul.f32.gmra.mxu0 %v1179
    %v1203 = vpop.f32.mrf.mxu0
    %v1204 = vadd.f32 %v1182, %v1203
    %1205 = vmatmul.f32.gmra.mxu0 %v1180
    %v1206 = vpop.f32.mrf.mxu0
    %v1207 = vadd.f32 %v1182, %v1206
    %1208 = vdwg.mxu0
    %1209 = vmatpush.msra.mxu0 %v418
    %1210 = vmatpush.msra.mxu0 %v416
    %1211 = vmatpush.msra.mxu0 %v414
    %1212 = vmatpush.msra.mxu0 %v412
    %1213 = vmatpush.msra.mxu0 %v410
    %1214 = vmatpush.msra.mxu0 %v408
    %1215 = vmatpush.msra.mxu0 %v406
    %1216 = vmatpush.msra.mxu0 %v404
    %1217 = vmatpush.msra.mxu0 %v402
    %1218 = vmatpush.msra.mxu0 %v400
    %1219 = vmatpush.msra.mxu0 %v398
    %1220 = vmatpush.msra.mxu0 %v396
    %1221 = vmatpush.msra.mxu0 %v394
    %1222 = vmatpush.msra.mxu0 %v392
    %1223 = vmatpush.msra.mxu0 %v390
    %1224 = vmatpush.msra.mxu0 %v388
    %1225 = vmatmul.f32.gmra.mxu0 %v1179
    %v1226 = vpop.f32.mrf.mxu0
    %v1227 = vadd.f32 %v1183, %v1226
    %1228 = vmatmul.f32.gmra.mxu0 %v1180
    %v1229 = vpop.f32.mrf.mxu0
    %v1230 = vadd.f32 %v1183, %v1229
    %1231 = vdwg.mxu0
    %v1232 = vmax.f32 %v1204, 0.0
    %v1233 = vmax.f32 %v1227, 0.0
    %v1234 = vmax.f32 %v1207, 0.0
    %v1235 = vmax.f32 %v1230, 0.0
    %v1237 = vperm.slane %v452, 0
    %1239 = vmatpush.msra.mxu0 %v435
    %1240 = vmatpush.msra.mxu0 %v434
    %1241 = vmatpush.msra.mxu0 %v433
    %1242 = vmatpush.msra.mxu0 %v432
    %1243 = vmatpush.msra.mxu0 %v431
    %1244 = vmatpush.msra.mxu0 %v430
    %1245 = vmatpush.msra.mxu0 %v429
    %1246 = vmatpush.msra.mxu0 %v428
    %1247 = vmatpush.msra.mxu0 %v427
    %1248 = vmatpush.msra.mxu0 %v426
    %1249 = vmatpush.msra.mxu0 %v425
    %1250 = vmatpush.msra.mxu0 %v424
    %1251 = vmatpush.msra.mxu0 %v423
    %1252 = vmatpush.msra.mxu0 %v422
    %1253 = vmatpush.msra.mxu0 %v421
    %1254 = vmatpush.msra.mxu0 %v420
    %1255 = vmatmul.f32.gmra.mxu0 %v1232
    %v1256 = vpop.f32.mrf.mxu0
    %v1257 = vadd.f32 %v1237, %v1256
    %1258 = vmatmul.f32.gmra.mxu0 %v1234
    %v1259 = vpop.f32.mrf.mxu0
    %v1260 = vadd.f32 %v1237, %v1259
    %1261 = vdwg.mxu0
    %1262 = vmatpush.msra.mxu0 %v451
    %1263 = vmatpush.msra.mxu0 %v450
    %1264 = vmatpush.msra.mxu0 %v449
    %1265 = vmatpush.msra.mxu0 %v448
    %1266 = vmatpush.msra.mxu0 %v447
    %1267 = vmatpush.msra.mxu0 %v446
    %1268 = vmatpush.msra.mxu0 %v445
    %1269 = vmatpush.msra.mxu0 %v444
    %1270 = vmatpush.msra.mxu0 %v443
    %1271 = vmatpush.msra.mxu0 %v442
    %1272 = vmatpush.msra.mxu0 %v441
    %1273 = vmatpush.msra.mxu0 %v440
    %1274 = vmatpush.msra.mxu0 %v439
    %1275 = vmatpush.msra.mxu0 %v438
    %1276 = vmatpush.msra.mxu0 %v437
    %1277 = vmatpush.msra.mxu0 %v436
    %1278 = vmatmul.f32.gmra.mxu0 %v1233
    %v1279 = vpop.f32.mrf.mxu0
    %v1280 = vadd.f32 %v1257, %v1279
    %1281 = vmatmul.f32.gmra.mxu0 %v1235
    %v1282 = vpop.f32.mrf.mxu0
    %v1283 = vadd.f32 %v1260, %v1282
    %1284 = vdwg.mxu0
    %v1285 = vadd.f32 %v1179, %v1280
    %v1286 = vadd.f32 %v1180, %v1283
    %1287 = vadd.xlane.f32.xlu0 %v1285
    %v1288 = vpop.xlane.xlu0 %1287
    %1289 = vadd.xlane.f32.xlu0 %v1286
    %v1290 = vpop.xlane.xlu0 %1289
    %v1291 = vmul.f32 %v1288, %v1134
    %v1292 = vmul.f32 %v1290, %v1134
    %v1293 = vsub.f32 %v1285, %v1291
    %v1294 = vsub.f32 %v1286, %v1292
    %v1295 = vmul.f32 %v1293, %v1293
    %v1296 = vmul.f32 %v1294, %v1294
    %1297 = vadd.xlane.f32.xlu0 %v1295
    %v1298 = vpop.xlane.xlu0 %1297
    %1299 = vadd.xlane.f32.xlu0 %v1296
    %v1300 = vpop.xlane.xlu0 %1299
    %v1301 = vmul.f32 %v1298, %v1134
    %v1302 = vmul.f32 %v1300, %v1134
    %v1303 = vadd.f32 %v1301, 1e-05
    %v1304 = vadd.f32 %v1302, 1e-05
    %v1305 = vrsqrt.pop %v1303
    %v1306 = vmul.f32 %v1305, %v1303
    %v1307 = vmul.f32 %v1306, %v1305
    %v1308 = vmul.f32 0.5, %v1307
    %v1309 = vsub.f32 1.5, %v1308
    %v1310 = vmul.f32 %v1305, %v1309
    %vm1311 = vweird.f32 %v1303
    %vm1312 = vweird.f32 %v1305
    %vm1313 = vmor %vm1311, %vm1312
    %v1314 = vsel %vm1313, %v1305, %v1310
    %v1315 = vrsqrt.pop %v1304
    %v1316 = vmul.f32 %v1315, %v1304
    %v1317 = vmul.f32 %v1316, %v1315
    %v1318 = vmul.f32 0.5, %v1317
    %v1319 = vsub.f32 1.5, %v1318
    %v1320 = vmul.f32 %v1315, %v1319
    %vm1321 = vweird.f32 %v1304
    %vm1322 = vweird.f32 %v1315
    %vm1323 = vmor %vm1321, %vm1322
    %v1324 = vsel %vm1323, %v1315, %v1320
    %v1325 = vmul.f32 %v1293, %v1314
    %v1326 = vmul.f32 %v1294, %v1324
    %v1328 = vperm.slane %v453, 0
    %v1330 = vmul.f32 %v1325, %v1328
    %v1331 = vmul.f32 %v1326, %v1328
    %v1333 = vperm.slane %v454, 0
    %v1335 = vadd.f32 %v1330, %v1333
    %v1336 = vadd.f32 %v1331, %v1333
    %v1337 = vld [vmem:[#allocation19] sm:$0xff]
    %v1338 = vld [vmem:[#allocation19 + $0x8] sm:$0xff]
    %v1339 = vld [vmem:[#allocation19 + $0x10] sm:$0xff]
    %v1340 = vld [vmem:[#allocation19 + $0x18] sm:$0xff]
    %v1341 = vld [vmem:[#allocation19 + $0x20] sm:$0xff]
    %v1342 = vld [vmem:[#allocation19 + $0x28] sm:$0xff]
    %v1343 = vld [vmem:[#allocation19 + $0x30] sm:$0xff]
    %v1344 = vld [vmem:[#allocation19 + $0x38] sm:$0xff]
    %v1345 = vld [vmem:[#allocation19 + $0x40] sm:$0xff]
    %v1346 = vld [vmem:[#allocation19 + $0x48] sm:$0xff]
    %v1347 = vld [vmem:[#allocation19 + $0x50] sm:$0xff]
    %v1348 = vld [vmem:[#allocation19 + $0x58] sm:$0xff]
    %v1349 = vld [vmem:[#allocation19 + $0x60] sm:$0xff]
    %v1350 = vld [vmem:[#allocation19 + $0x68] sm:$0xff]
    %v1351 = vld [vmem:[#allocation19 + $0x70] sm:$0xff]
    %v1352 = vld [vmem:[#allocation19 + $0x78] sm:$0xff]
    %v1353 = vld [vmem:[#allocation19 + $0x80] sm:$0xff]
    %v1354 = vld [vmem:[#allocation19 + $0x88] sm:$0xff]
    %v1355 = vld [vmem:[#allocation19 + $0x90] sm:$0xff]
    %v1356 = vld [vmem:[#allocation19 + $0x98] sm:$0xff]
    %v1357 = vld [vmem:[#allocation19 + $0xa0] sm:$0xff]
    %v1358 = vld [vmem:[#allocation19 + $0xa8] sm:$0xff]
    %v1359 = vld [vmem:[#allocation19 + $0xb0] sm:$0xff]
    %v1360 = vld [vmem:[#allocation19 + $0xb8] sm:$0xff]
    %v1361 = vld [vmem:[#allocation19 + $0xc0] sm:$0xff]
    %v1362 = vld [vmem:[#allocation19 + $0xc8] sm:$0xff]
    %v1363 = vld [vmem:[#allocation19 + $0xd0] sm:$0xff]
    %v1364 = vld [vmem:[#allocation19 + $0xd8] sm:$0xff]
    %v1365 = vld [vmem:[#allocation19 + $0xe0] sm:$0xff]
    %v1366 = vld [vmem:[#allocation19 + $0xe8] sm:$0xff]
    %v1367 = vld [vmem:[#allocation19 + $0xf0] sm:$0xff]
    %v1368 = vld [vmem:[#allocation19 + $0xf8] sm:$0xff]
    %v1369 = vld [vmem:[#allocation19 + $0x100] sm:$0xff]
    %v1370 = vld [vmem:[#allocation19 + $0x108] sm:$0xff]
    %v1371 = vld [vmem:[#allocation19 + $0x110] sm:$0xff]
    %v1372 = vld [vmem:[#allocation19 + $0x118] sm:$0xff]
    %v1373 = vld [vmem:[#allocation19 + $0x120] sm:$0xff]
    %v1374 = vld [vmem:[#allocation19 + $0x128] sm:$0xff]
    %v1375 = vld [vmem:[#allocation19 + $0x130] sm:$0xff]
    %v1376 = vld [vmem:[#allocation19 + $0x138] sm:$0xff]
    %v1377 = vld [vmem:[#allocation19 + $0x140] sm:$0xff]
    %v1378 = vld [vmem:[#allocation19 + $0x148] sm:$0xff]
    %v1379 = vld [vmem:[#allocation19 + $0x150] sm:$0xff]
    %v1380 = vld [vmem:[#allocation19 + $0x158] sm:$0xff]
    %v1381 = vld [vmem:[#allocation19 + $0x160] sm:$0xff]
    %v1382 = vld [vmem:[#allocation19 + $0x168] sm:$0xff]
    %v1383 = vld [vmem:[#allocation19 + $0x170] sm:$0xff]
    %v1384 = vld [vmem:[#allocation19 + $0x178] sm:$0xff]
    %v1385 = vld [vmem:[%s15] sm:$0x7]
    %v1386 = vld [vmem:[#allocation20] sm:$0xff]
    %v1387 = vld [vmem:[#allocation20 + $0x8] sm:$0xff]
    %v1388 = vld [vmem:[#allocation20 + $0x10] sm:$0xff]
    %v1389 = vld [vmem:[#allocation20 + $0x18] sm:$0xff]
    %v1390 = vld [vmem:[#allocation20 + $0x20] sm:$0xff]
    %v1391 = vld [vmem:[#allocation20 + $0x28] sm:$0xff]
    %v1392 = vld [vmem:[#allocation20 + $0x30] sm:$0xff]
    %v1393 = vld [vmem:[#allocation20 + $0x38] sm:$0xff]
    %v1394 = vld [vmem:[#allocation20 + $0x40] sm:$0xff]
    %v1395 = vld [vmem:[#allocation20 + $0x48] sm:$0xff]
    %v1396 = vld [vmem:[#allocation20 + $0x50] sm:$0xff]
    %v1397 = vld [vmem:[#allocation20 + $0x58] sm:$0xff]
    %v1398 = vld [vmem:[#allocation20 + $0x60] sm:$0xff]
    %v1399 = vld [vmem:[#allocation20 + $0x68] sm:$0xff]
    %v1400 = vld [vmem:[#allocation20 + $0x70] sm:$0xff]
    %v1401 = vld [vmem:[#allocation20 + $0x78] sm:$0xff]
    %v1402 = vld [vmem:[%s17] sm:$0x1]
    %v1403 = vld [vmem:[%s18] sm:$0x1]
    %v1404 = vld [vmem:[%s19] sm:$0x1]
    %v1405 = vld [vmem:[#allocation22] sm:$0xff]
    %v1406 = vld [vmem:[#allocation22 + $0x8] sm:$0xff]
    %v1407 = vld [vmem:[#allocation22 + $0x10] sm:$0xff]
    %v1408 = vld [vmem:[#allocation22 + $0x18] sm:$0xff]
    %v1409 = vld [vmem:[#allocation22 + $0x20] sm:$0xff]
    %v1410 = vld [vmem:[#allocation22 + $0x28] sm:$0xff]
    %v1411 = vld [vmem:[#allocation22 + $0x30] sm:$0xff]
    %v1412 = vld [vmem:[#allocation22 + $0x38] sm:$0xff]
    %v1413 = vld [vmem:[#allocation22 + $0x40] sm:$0xff]
    %v1414 = vld [vmem:[#allocation22 + $0x48] sm:$0xff]
    %v1415 = vld [vmem:[#allocation22 + $0x50] sm:$0xff]
    %v1416 = vld [vmem:[#allocation22 + $0x58] sm:$0xff]
    %v1417 = vld [vmem:[#allocation22 + $0x60] sm:$0xff]
    %v1418 = vld [vmem:[#allocation22 + $0x68] sm:$0xff]
    %v1419 = vld [vmem:[#allocation22 + $0x70] sm:$0xff]
    %v1420 = vld [vmem:[#allocation22 + $0x78] sm:$0xff]
    %v1421 = vld [vmem:[#allocation22 + $0x80] sm:$0xff]
    %v1422 = vld [vmem:[#allocation22 + $0x88] sm:$0xff]
    %v1423 = vld [vmem:[#allocation22 + $0x90] sm:$0xff]
    %v1424 = vld [vmem:[#allocation22 + $0x98] sm:$0xff]
    %v1425 = vld [vmem:[#allocation22 + $0xa0] sm:$0xff]
    %v1426 = vld [vmem:[#allocation22 + $0xa8] sm:$0xff]
    %v1427 = vld [vmem:[#allocation22 + $0xb0] sm:$0xff]
    %v1428 = vld [vmem:[#allocation22 + $0xb8] sm:$0xff]
    %v1429 = vld [vmem:[#allocation22 + $0xc0] sm:$0xff]
    %v1430 = vld [vmem:[#allocation22 + $0xc8] sm:$0xff]
    %v1431 = vld [vmem:[#allocation22 + $0xd0] sm:$0xff]
    %v1432 = vld [vmem:[#allocation22 + $0xd8] sm:$0xff]
    %v1433 = vld [vmem:[#allocation22 + $0xe0] sm:$0xff]
    %v1434 = vld [vmem:[#allocation22 + $0xe8] sm:$0xff]
    %v1435 = vld [vmem:[#allocation22 + $0xf0] sm:$0xff]
    %v1436 = vld [vmem:[#allocation22 + $0xf8] sm:$0xff]
    %v1437 = vld [vmem:[%s21] sm:$0x3]
    %v1438 = vld [vmem:[#allocation23] sm:$0xff]
    %v1439 = vld [vmem:[#allocation23 + $0x8] sm:$0xff]
    %v1440 = vld [vmem:[#allocation23 + $0x10] sm:$0xff]
    %v1441 = vld [vmem:[#allocation23 + $0x18] sm:$0xff]
    %v1442 = vld [vmem:[#allocation23 + $0x20] sm:$0xff]
    %v1443 = vld [vmem:[#allocation23 + $0x28] sm:$0xff]
    %v1444 = vld [vmem:[#allocation23 + $0x30] sm:$0xff]
    %v1445 = vld [vmem:[#allocation23 + $0x38] sm:$0xff]
    %v1446 = vld [vmem:[#allocation23 + $0x40] sm:$0xff]
    %v1447 = vld [vmem:[#allocation23 + $0x48] sm:$0xff]
    %v1448 = vld [vmem:[#allocation23 + $0x50] sm:$0xff]
    %v1449 = vld [vmem:[#allocation23 + $0x58] sm:$0xff]
    %v1450 = vld [vmem:[#allocation23 + $0x60] sm:$0xff]
    %v1451 = vld [vmem:[#allocation23 + $0x68] sm:$0xff]
    %v1452 = vld [vmem:[#allocation23 + $0x70] sm:$0xff]
    %v1453 = vld [vmem:[#allocation23 + $0x78] sm:$0xff]
    %v1454 = vld [vmem:[#allocation23 + $0x80] sm:$0xff]
    %v1455 = vld [vmem:[#allocation23 + $0x88] sm:$0xff]
    %v1456 = vld [vmem:[#allocation23 + $0x90] sm:$0xff]
    %v1457 = vld [vmem:[#allocation23 + $0x98] sm:$0xff]
    %v1458 = vld [vmem:[#allocation23 + $0xa0] sm:$0xff]
    %v1459 = vld [vmem:[#allocation23 + $0xa8] sm:$0xff]
    %v1460 = vld [vmem:[#allocation23 + $0xb0] sm:$0xff]
    %v1461 = vld [vmem:[#allocation23 + $0xb8] sm:$0xff]
    %v1462 = vld [vmem:[#allocation23 + $0xc0] sm:$0xff]
    %v1463 = vld [vmem:[#allocation23 + $0xc8] sm:$0xff]
    %v1464 = vld [vmem:[#allocation23 + $0xd0] sm:$0xff]
    %v1465 = vld [vmem:[#allocation23 + $0xd8] sm:$0xff]
    %v1466 = vld [vmem:[#allocation23 + $0xe0] sm:$0xff]
    %v1467 = vld [vmem:[#allocation23 + $0xe8] sm:$0xff]
    %v1468 = vld [vmem:[#allocation23 + $0xf0] sm:$0xff]
    %v1469 = vld [vmem:[#allocation23 + $0xf8] sm:$0xff]
    %v1470 = vld [vmem:[%s23] sm:$0x1]
    %v1471 = vld [vmem:[%s24] sm:$0x1]
    %v1472 = vld [vmem:[%s25] sm:$0x1]
    %v1474 = vperm.slane %v1385, 0
    %v1475 = vperm.slane %v1385, 1
    %v1476 = vperm.slane %v1385, 2
    %1480 = vmatpush.msra.mxu0 %v1382
    %1481 = vmatpush.msra.mxu0 %v1379
    %1482 = vmatpush.msra.mxu0 %v1376
    %1483 = vmatpush.msra.mxu0 %v1373
    %1484 = vmatpush.msra.mxu0 %v1370
    %1485 = vmatpush.msra.mxu0 %v1367
    %1486 = vmatpush.msra.mxu0 %v1364
    %1487 = vmatpush.msra.mxu0 %v1361
    %1488 = vmatpush.msra.mxu0 %v1358
    %1489 = vmatpush.msra.mxu0 %v1355
    %1490 = vmatpush.msra.mxu0 %v1352
    %1491 = vmatpush.msra.mxu0 %v1349
    %1492 = vmatpush.msra.mxu0 %v1346
    %1493 = vmatpush.msra.mxu0 %v1343
    %1494 = vmatpush.msra.mxu0 %v1340
    %1495 = vmatpush.msra.mxu0 %v1337
    %1496 = vmatmul.f32.gmra.mxu0 %v1335
    %v1497 = vpop.f32.mrf.mxu0
    %v1498 = vadd.f32 %v1474, %v1497
    %1499 = vmatmul.f32.gmra.mxu0 %v1336
    %v1500 = vpop.f32.mrf.mxu0
    %v1501 = vadd.f32 %v1474, %v1500
    %1502 = vdwg.mxu0
    %1503 = vmatpush.msra.mxu0 %v1383
    %1504 = vmatpush.msra.mxu0 %v1380
    %1505 = vmatpush.msra.mxu0 %v1377
    %1506 = vmatpush.msra.mxu0 %v1374
    %1507 = vmatpush.msra.mxu0 %v1371
    %1508 = vmatpush.msra.mxu0 %v1368
    %1509 = vmatpush.msra.mxu0 %v1365
    %1510 = vmatpush.msra.mxu0 %v1362
    %1511 = vmatpush.msra.mxu0 %v1359
    %1512 = vmatpush.msra.mxu0 %v1356
    %1513 = vmatpush.msra.mxu0 %v1353
    %1514 = vmatpush.msra.mxu0 %v1350
    %1515 = vmatpush.msra.mxu0 %v1347
    %1516 = vmatpush.msra.mxu0 %v1344
    %1517 = vmatpush.msra.mxu0 %v1341
    %1518 = vmatpush.msra.mxu0 %v1338
    %1519 = vmatmul.f32.gmra.mxu0 %v1335
    %v1520 = vpop.f32.mrf.mxu0
    %v1521 = vadd.f32 %v1475, %v1520
    %1522 = vmatmul.f32.gmra.mxu0 %v1336
    %v1523 = vpop.f32.mrf.mxu0
    %v1524 = vadd.f32 %v1475, %v1523
    %1525 = vdwg.mxu0
    %1526 = vmatpush.msra.mxu0 %v1384
    %1527 = vmatpush.msra.mxu0 %v1381
    %1528 = vmatpush.msra.mxu0 %v1378
    %1529 = vmatpush.msra.mxu0 %v1375
    %1530 = vmatpush.msra.mxu0 %v1372
    %1531 = vmatpush.msra.mxu0 %v1369
    %1532 = vmatpush.msra.mxu0 %v1366
    %1533 = vmatpush.msra.mxu0 %v1363
    %1534 = vmatpush.msra.mxu0 %v1360
    %1535 = vmatpush.msra.mxu0 %v1357
    %1536 = vmatpush.msra.mxu0 %v1354
    %1537 = vmatpush.msra.mxu0 %v1351
    %1538 = vmatpush.msra.mxu0 %v1348
    %1539 = vmatpush.msra.mxu0 %v1345
    %1540 = vmatpush.msra.mxu0 %v1342
    %1541 = vmatpush.msra.mxu0 %v1339
    %1542 = vmatmul.f32.gmra.mxu0 %v1335
    %v1543 = vpop.f32.mrf.mxu0
    %v1544 = vadd.f32 %v1476, %v1543
    %1545 = vmatmul.f32.gmra.mxu0 %v1336
    %v1546 = vpop.f32.mrf.mxu0
    %v1547 = vadd.f32 %v1476, %v1546
    %1548 = vdwg.mxu0
    %v1549 = vmul.f32 %v1498, %v298
    %v1550 = vmul.f32 %v1501, %v298
    %1551 = vmatpush.xpose.msra.mxu0 0.0
    %1552 = vmatpush.xpose.msra.mxu0 0.0
    %1553 = vmatpush.xpose.msra.mxu0 0.0
    %1554 = vmatpush.xpose.msra.mxu0 0.0
    %1555 = vmatpush.xpose.msra.mxu0 0.0
    %1556 = vmatpush.xpose.msra.mxu0 0.0
    %1557 = vmatpush.xpose.msra.mxu0 0.0
    %1558 = vmatpush.xpose.msra.mxu0 0.0
    %1559 = vmatpush.xpose.msra.mxu0 0.0
    %1560 = vmatpush.xpose.msra.mxu0 0.0
    %1561 = vmatpush.xpose.msra.mxu0 0.0
    %1562 = vmatpush.xpose.msra.mxu0 0.0
    %1563 = vmatpush.xpose.msra.mxu0 0.0
    %1564 = vmatpush.xpose.msra.mxu0 0.0
    %1565 = vmatpush.xpose.msra.mxu0 0.0
    %1566 = vmatpush.xpose.msra.mxu0 %v1521
    %1567 = vmatmul.f32.gmra.mxu0 %v1549
    %v1568 = vpop.f32.mrf.mxu0
    %v1569 = vadd.f32 0.0, %v1568
    %1570 = vdwg.mxu0
    %1571 = vmatpush.xpose.msra.mxu0 0.0
    %1572 = vmatpush.xpose.msra.mxu0 0.0
    %1573 = vmatpush.xpose.msra.mxu0 0.0
    %1574 = vmatpush.xpose.msra.mxu0 0.0
    %1575 = vmatpush.xpose.msra.mxu0 0.0
    %1576 = vmatpush.xpose.msra.mxu0 0.0
    %1577 = vmatpush.xpose.msra.mxu0 0.0
    %1578 = vmatpush.xpose.msra.mxu0 0.0
    %1579 = vmatpush.xpose.msra.mxu0 0.0
    %1580 = vmatpush.xpose.msra.mxu0 0.0
    %1581 = vmatpush.xpose.msra.mxu0 0.0
    %1582 = vmatpush.xpose.msra.mxu0 0.0
    %1583 = vmatpush.xpose.msra.mxu0 0.0
    %1584 = vmatpush.xpose.msra.mxu0 0.0
    %1585 = vmatpush.xpose.msra.mxu0 0.0
    %1586 = vmatpush.xpose.msra.mxu0 %v1524
    %1587 = vmatmul.f32.gmra.mxu0 %v1550
    %v1588 = vpop.f32.mrf.mxu0
    %v1589 = vadd.f32 0.0, %v1588
    %1590 = vdwg.mxu0
    %v1591 = vmul.f32 %v1569, 0.17677669
    %v1592 = vmul.f32 %v1589, 0.17677669
    %v1593 = vsel %vm575, %v1591, -inf
    %1594 = vmax.xlane.f32.xlu0 %v1593
    %v1595 = vpop.xlane.xlu0 %1594
    %v1596 = vsel %vm575, %v1592, -inf
    %1597 = vmax.xlane.f32.xlu0 %v1596
    %v1598 = vpop.xlane.xlu0 %1597
    %v1599 = vsub.f32 %v1591, %v1595
    %v1600 = vsub.f32 %v1592, %v1598
    %v1601 = vmul.f32 %v1599, 1.442695
    %v1602 = vpow.pop %v1601
    %v1603 = vmul.f32 %v1600, 1.442695
    %v1604 = vpow.pop %v1603
    %v1605 = vsel %vm575, %v1602, 0.0
    %1606 = vadd.xlane.f32.xlu0 %v1605
    %v1607 = vpop.xlane.xlu0 %1606
    %v1608 = vsel %vm575, %v1604, 0.0
    %1609 = vadd.xlane.f32.xlu0 %v1608
    %v1610 = vpop.xlane.xlu0 %1609
    %v1611 = vrcp.pop %v1607
    %v1612 = vmul.f32 %v1607, %v1611
    %v1613 = vsub.f32 1.0, %v1612
    %v1614 = vmul.f32 %v1611, %v1613
    %v1615 = vadd.f32 %v1611, %v1614
    %vm1616 = vweird.f32 %v1607
    %vm1617 = vweird.f32 %v1611
    %vm1618 = vmor %vm1616, %vm1617
    %v1619 = vsel %vm1618, %v1611, %v1615
    %v1620 = vand.u32 2147483647, %v1607
    %vm1621 = vcmp.eq.f32.partialorder %v1620, 8.507059e+37
    %v1622 = vand.u32 %v1607, 2147483648
    %v1623 = vor.u32 1.1754944e-38, %v1622
    %v1624 = vsel %vm1621, %v1623, %v1619
    %v1625 = vrcp.pop %v1610
    %v1626 = vmul.f32 %v1610, %v1625
    %v1627 = vsub.f32 1.0, %v1626
    %v1628 = vmul.f32 %v1625, %v1627
    %v1629 = vadd.f32 %v1625, %v1628
    %vm1630 = vweird.f32 %v1610
    %vm1631 = vweird.f32 %v1625
    %vm1632 = vmor %vm1630, %vm1631
    %v1633 = vsel %vm1632, %v1625, %v1629
    %v1634 = vand.u32 2147483647, %v1610
    %vm1635 = vcmp.eq.f32.partialorder %v1634, 8.507059e+37
    %v1636 = vand.u32 %v1610, 2147483648
    %v1637 = vor.u32 1.1754944e-38, %v1636
    %v1638 = vsel %vm1635, %v1637, %v1633
    %v1639 = vmul.f32 %v1602, %v1624
    %v1640 = vmul.f32 %v1604, %v1638
    %v1641 = vmul.f32 %v1544, %v298
    %v1642 = vmul.f32 %v1547, %v298
    %v1643 = vmul.f32 %v1498, %v303
    %v1644 = vmul.f32 %v1501, %v303
    %1645 = vmatpush.xpose.msra.mxu0 0.0
    %1646 = vmatpush.xpose.msra.mxu0 0.0
    %1647 = vmatpush.xpose.msra.mxu0 0.0
    %1648 = vmatpush.xpose.msra.mxu0 0.0
    %1649 = vmatpush.xpose.msra.mxu0 0.0
    %1650 = vmatpush.xpose.msra.mxu0 0.0
    %1651 = vmatpush.xpose.msra.mxu0 0.0
    %1652 = vmatpush.xpose.msra.mxu0 0.0
    %1653 = vmatpush.xpose.msra.mxu0 0.0
    %1654 = vmatpush.xpose.msra.mxu0 0.0
    %1655 = vmatpush.xpose.msra.mxu0 0.0
    %1656 = vmatpush.xpose.msra.mxu0 0.0
    %1657 = vmatpush.xpose.msra.mxu0 0.0
    %1658 = vmatpush.xpose.msra.mxu0 0.0
    %1659 = vmatpush.xpose.msra.mxu0 0.0
    %1660 = vmatpush.xpose.msra.mxu0 %v1521
    %1661 = vmatmul.f32.gmra.mxu0 %v1643
    %v1662 = vpop.f32.mrf.mxu0
    %v1663 = vadd.f32 0.0, %v1662
    %1664 = vdwg.mxu0
    %1665 = vmatpush.xpose.msra.mxu0 0.0
    %1666 = vmatpush.xpose.msra.mxu0 0.0
    %1667 = vmatpush.xpose.msra.mxu0 0.0
    %1668 = vmatpush.xpose.msra.mxu0 0.0
    %1669 = vmatpush.xpose.msra.mxu0 0.0
    %1670 = vmatpush.xpose.msra.mxu0 0.0
    %1671 = vmatpush.xpose.msra.mxu0 0.0
    %1672 = vmatpush.xpose.msra.mxu0 0.0
    %1673 = vmatpush.xpose.msra.mxu0 0.0
    %1674 = vmatpush.xpose.msra.mxu0 0.0
    %1675 = vmatpush.xpose.msra.mxu0 0.0
    %1676 = vmatpush.xpose.msra.mxu0 0.0
    %1677 = vmatpush.xpose.msra.mxu0 0.0
    %1678 = vmatpush.xpose.msra.mxu0 0.0
    %1679 = vmatpush.xpose.msra.mxu0 0.0
    %1680 = vmatpush.xpose.msra.mxu0 %v1524
    %1681 = vmatmul.f32.gmra.mxu0 %v1644
    %v1682 = vpop.f32.mrf.mxu0
    %v1683 = vadd.f32 0.0, %v1682
    %1684 = vdwg.mxu0
    %v1685 = vmul.f32 %v1663, 0.17677669
    %v1686 = vmul.f32 %v1683, 0.17677669
    %v1687 = vsel %vm575, %v1685, -inf
    %1688 = vmax.xlane.f32.xlu0 %v1687
    %v1689 = vpop.xlane.xlu0 %1688
    %v1690 = vsel %vm575, %v1686, -inf
    %1691 = vmax.xlane.f32.xlu0 %v1690
    %v1692 = vpop.xlane.xlu0 %1691
    %v1693 = vsub.f32 %v1685, %v1689
    %v1694 = vsub.f32 %v1686, %v1692
    %v1695 = vmul.f32 %v1693, 1.442695
    %v1696 = vpow.pop %v1695
    %v1697 = vmul.f32 %v1694, 1.442695
    %v1698 = vpow.pop %v1697
    %v1699 = vsel %vm575, %v1696, 0.0
    %1700 = vadd.xlane.f32.xlu0 %v1699
    %v1701 = vpop.xlane.xlu0 %1700
    %v1702 = vsel %vm575, %v1698, 0.0
    %1703 = vadd.xlane.f32.xlu0 %v1702
    %v1704 = vpop.xlane.xlu0 %1703
    %v1705 = vrcp.pop %v1701
    %v1706 = vmul.f32 %v1701, %v1705
    %v1707 = vsub.f32 1.0, %v1706
    %v1708 = vmul.f32 %v1705, %v1707
    %v1709 = vadd.f32 %v1705, %v1708
    %vm1710 = vweird.f32 %v1701
    %vm1711 = vweird.f32 %v1705
    %vm1712 = vmor %vm1710, %vm1711
    %v1713 = vsel %vm1712, %v1705, %v1709
    %v1714 = vand.u32 2147483647, %v1701
    %vm1715 = vcmp.eq.f32.partialorder %v1714, 8.507059e+37
    %v1716 = vand.u32 %v1701, 2147483648
    %v1717 = vor.u32 1.1754944e-38, %v1716
    %v1718 = vsel %vm1715, %v1717, %v1713
    %v1719 = vrcp.pop %v1704
    %v1720 = vmul.f32 %v1704, %v1719
    %v1721 = vsub.f32 1.0, %v1720
    %v1722 = vmul.f32 %v1719, %v1721
    %v1723 = vadd.f32 %v1719, %v1722
    %vm1724 = vweird.f32 %v1704
    %vm1725 = vweird.f32 %v1719
    %vm1726 = vmor %vm1724, %vm1725
    %v1727 = vsel %vm1726, %v1719, %v1723
    %v1728 = vand.u32 2147483647, %v1704
    %vm1729 = vcmp.eq.f32.partialorder %v1728, 8.507059e+37
    %v1730 = vand.u32 %v1704, 2147483648
    %v1731 = vor.u32 1.1754944e-38, %v1730
    %v1732 = vsel %vm1729, %v1731, %v1727
    %v1733 = vmul.f32 %v1696, %v1718
    %v1734 = vmul.f32 %v1698, %v1732
    %v1735 = vmul.f32 %v1544, %v303
    %v1736 = vmul.f32 %v1547, %v303
    %v1738 = vsel %vm575, %v1733, 0
    %1740 = vmatpush.msra.mxu0 0.0
    %1741 = vmatpush.msra.mxu0 0.0
    %1742 = vmatpush.msra.mxu0 0.0
    %1743 = vmatpush.msra.mxu0 0.0
    %1744 = vmatpush.msra.mxu0 0.0
    %1745 = vmatpush.msra.mxu0 0.0
    %1746 = vmatpush.msra.mxu0 0.0
    %1747 = vmatpush.msra.mxu0 0.0
    %1748 = vmatpush.msra.mxu0 0.0
    %1749 = vmatpush.msra.mxu0 0.0
    %1750 = vmatpush.msra.mxu0 0.0
    %1751 = vmatpush.msra.mxu0 0.0
    %1752 = vmatpush.msra.mxu0 0.0
    %1753 = vmatpush.msra.mxu0 0.0
    %1754 = vmatpush.msra.mxu0 0.0
    %1755 = vmatpush.msra.mxu0 %v1735
    %1756 = vmatmul.f32.gmra.mxu0 %v1738
    %v1757 = vpop.f32.mrf.mxu0
    %v1758 = vadd.f32 0.0, %v1757
    %1759 = vdwg.mxu0
    %v1761 = vsel %vm575, %v1734, 0
    %1763 = vmatpush.msra.mxu0 0.0
    %1764 = vmatpush.msra.mxu0 0.0
    %1765 = vmatpush.msra.mxu0 0.0
    %1766 = vmatpush.msra.mxu0 0.0
    %1767 = vmatpush.msra.mxu0 0.0
    %1768 = vmatpush.msra.mxu0 0.0
    %1769 = vmatpush.msra.mxu0 0.0
    %1770 = vmatpush.msra.mxu0 0.0
    %1771 = vmatpush.msra.mxu0 0.0
    %1772 = vmatpush.msra.mxu0 0.0
    %1773 = vmatpush.msra.mxu0 0.0
    %1774 = vmatpush.msra.mxu0 0.0
    %1775 = vmatpush.msra.mxu0 0.0
    %1776 = vmatpush.msra.mxu0 0.0
    %1777 = vmatpush.msra.mxu0 0.0
    %1778 = vmatpush.msra.mxu0 %v1736
    %1779 = vmatmul.f32.gmra.mxu0 %v1761
    %v1780 = vpop.f32.mrf.mxu0
    %v1781 = vadd.f32 0.0, %v1780
    %1782 = vdwg.mxu0
    %v1784 = vsel %vm575, %v1639, 0
    %1786 = vmatpush.msra.mxu0 0.0
    %1787 = vmatpush.msra.mxu0 0.0
    %1788 = vmatpush.msra.mxu0 0.0
    %1789 = vmatpush.msra.mxu0 0.0
    %1790 = vmatpush.msra.mxu0 0.0
    %1791 = vmatpush.msra.mxu0 0.0
    %1792 = vmatpush.msra.mxu0 0.0
    %1793 = vmatpush.msra.mxu0 0.0
    %1794 = vmatpush.msra.mxu0 0.0
    %1795 = vmatpush.msra.mxu0 0.0
    %1796 = vmatpush.msra.mxu0 0.0
    %1797 = vmatpush.msra.mxu0 0.0
    %1798 = vmatpush.msra.mxu0 0.0
    %1799 = vmatpush.msra.mxu0 0.0
    %1800 = vmatpush.msra.mxu0 0.0
    %1801 = vmatpush.msra.mxu0 %v1641
    %1802 = vmatmul.f32.gmra.mxu0 %v1784
    %v1803 = vpop.f32.mrf.mxu0
    %v1804 = vadd.f32 %v1758, %v1803
    %1805 = vdwg.mxu0
    %v1807 = vsel %vm575, %v1640, 0
    %1809 = vmatpush.msra.mxu0 0.0
    %1810 = vmatpush.msra.mxu0 0.0
    %1811 = vmatpush.msra.mxu0 0.0
    %1812 = vmatpush.msra.mxu0 0.0
    %1813 = vmatpush.msra.mxu0 0.0
    %1814 = vmatpush.msra.mxu0 0.0
    %1815 = vmatpush.msra.mxu0 0.0
    %1816 = vmatpush.msra.mxu0 0.0
    %1817 = vmatpush.msra.mxu0 0.0
    %1818 = vmatpush.msra.mxu0 0.0
    %1819 = vmatpush.msra.mxu0 0.0
    %1820 = vmatpush.msra.mxu0 0.0
    %1821 = vmatpush.msra.mxu0 0.0
    %1822 = vmatpush.msra.mxu0 0.0
    %1823 = vmatpush.msra.mxu0 0.0
    %1824 = vmatpush.msra.mxu0 %v1642
    %1825 = vmatmul.f32.gmra.mxu0 %v1807
    %v1826 = vpop.f32.mrf.mxu0
    %v1827 = vadd.f32 %v1781, %v1826
    %1828 = vdwg.mxu0
    %v1829 = vmul.f32 %v1498, %v308
    %v1830 = vmul.f32 %v1501, %v308
    %1831 = vmatpush.xpose.msra.mxu0 0.0
    %1832 = vmatpush.xpose.msra.mxu0 0.0
    %1833 = vmatpush.xpose.msra.mxu0 0.0
    %1834 = vmatpush.xpose.msra.mxu0 0.0
    %1835 = vmatpush.xpose.msra.mxu0 0.0
    %1836 = vmatpush.xpose.msra.mxu0 0.0
    %1837 = vmatpush.xpose.msra.mxu0 0.0
    %1838 = vmatpush.xpose.msra.mxu0 0.0
    %1839 = vmatpush.xpose.msra.mxu0 0.0
    %1840 = vmatpush.xpose.msra.mxu0 0.0
    %1841 = vmatpush.xpose.msra.mxu0 0.0
    %1842 = vmatpush.xpose.msra.mxu0 0.0
    %1843 = vmatpush.xpose.msra.mxu0 0.0
    %1844 = vmatpush.xpose.msra.mxu0 0.0
    %1845 = vmatpush.xpose.msra.mxu0 0.0
    %1846 = vmatpush.xpose.msra.mxu0 %v1521
    %1847 = vmatmul.f32.gmra.mxu0 %v1829
    %v1848 = vpop.f32.mrf.mxu0
    %v1849 = vadd.f32 0.0, %v1848
    %1850 = vdwg.mxu0
    %1851 = vmatpush.xpose.msra.mxu0 0.0
    %1852 = vmatpush.xpose.msra.mxu0 0.0
    %1853 = vmatpush.xpose.msra.mxu0 0.0
    %1854 = vmatpush.xpose.msra.mxu0 0.0
    %1855 = vmatpush.xpose.msra.mxu0 0.0
    %1856 = vmatpush.xpose.msra.mxu0 0.0
    %1857 = vmatpush.xpose.msra.mxu0 0.0
    %1858 = vmatpush.xpose.msra.mxu0 0.0
    %1859 = vmatpush.xpose.msra.mxu0 0.0
    %1860 = vmatpush.xpose.msra.mxu0 0.0
    %1861 = vmatpush.xpose.msra.mxu0 0.0
    %1862 = vmatpush.xpose.msra.mxu0 0.0
    %1863 = vmatpush.xpose.msra.mxu0 0.0
    %1864 = vmatpush.xpose.msra.mxu0 0.0
    %1865 = vmatpush.xpose.msra.mxu0 0.0
    %1866 = vmatpush.xpose.msra.mxu0 %v1524
    %1867 = vmatmul.f32.gmra.mxu0 %v1830
    %v1868 = vpop.f32.mrf.mxu0
    %v1869 = vadd.f32 0.0, %v1868
    %1870 = vdwg.mxu0
    %v1871 = vmul.f32 %v1849, 0.17677669
    %v1872 = vmul.f32 %v1869, 0.17677669
    %v1873 = vsel %vm575, %v1871, -inf
    %1874 = vmax.xlane.f32.xlu0 %v1873
    %v1875 = vpop.xlane.xlu0 %1874
    %v1876 = vsel %vm575, %v1872, -inf
    %1877 = vmax.xlane.f32.xlu0 %v1876
    %v1878 = vpop.xlane.xlu0 %1877
    %v1879 = vsub.f32 %v1871, %v1875
    %v1880 = vsub.f32 %v1872, %v1878
    %v1881 = vmul.f32 %v1879, 1.442695
    %v1882 = vpow.pop %v1881
    %v1883 = vmul.f32 %v1880, 1.442695
    %v1884 = vpow.pop %v1883
    %v1885 = vsel %vm575, %v1882, 0.0
    %1886 = vadd.xlane.f32.xlu0 %v1885
    %v1887 = vpop.xlane.xlu0 %1886
    %v1888 = vsel %vm575, %v1884, 0.0
    %1889 = vadd.xlane.f32.xlu0 %v1888
    %v1890 = vpop.xlane.xlu0 %1889
    %v1891 = vrcp.pop %v1887
    %v1892 = vmul.f32 %v1887, %v1891
    %v1893 = vsub.f32 1.0, %v1892
    %v1894 = vmul.f32 %v1891, %v1893
    %v1895 = vadd.f32 %v1891, %v1894
    %vm1896 = vweird.f32 %v1887
    %vm1897 = vweird.f32 %v1891
    %vm1898 = vmor %vm1896, %vm1897
    %v1899 = vsel %vm1898, %v1891, %v1895
    %v1900 = vand.u32 2147483647, %v1887
    %vm1901 = vcmp.eq.f32.partialorder %v1900, 8.507059e+37
    %v1902 = vand.u32 %v1887, 2147483648
    %v1903 = vor.u32 1.1754944e-38, %v1902
    %v1904 = vsel %vm1901, %v1903, %v1899
    %v1905 = vrcp.pop %v1890
    %v1906 = vmul.f32 %v1890, %v1905
    %v1907 = vsub.f32 1.0, %v1906
    %v1908 = vmul.f32 %v1905, %v1907
    %v1909 = vadd.f32 %v1905, %v1908
    %vm1910 = vweird.f32 %v1890
    %vm1911 = vweird.f32 %v1905
    %vm1912 = vmor %vm1910, %vm1911
    %v1913 = vsel %vm1912, %v1905, %v1909
    %v1914 = vand.u32 2147483647, %v1890
    %vm1915 = vcmp.eq.f32.partialorder %v1914, 8.507059e+37
    %v1916 = vand.u32 %v1890, 2147483648
    %v1917 = vor.u32 1.1754944e-38, %v1916
    %v1918 = vsel %vm1915, %v1917, %v1913
    %v1919 = vmul.f32 %v1882, %v1904
    %v1920 = vmul.f32 %v1884, %v1918
    %v1921 = vmul.f32 %v1544, %v308
    %v1922 = vmul.f32 %v1547, %v308
    %v1924 = vsel %vm575, %v1919, 0
    %1926 = vmatpush.msra.mxu0 0.0
    %1927 = vmatpush.msra.mxu0 0.0
    %1928 = vmatpush.msra.mxu0 0.0
    %1929 = vmatpush.msra.mxu0 0.0
    %1930 = vmatpush.msra.mxu0 0.0
    %1931 = vmatpush.msra.mxu0 0.0
    %1932 = vmatpush.msra.mxu0 0.0
    %1933 = vmatpush.msra.mxu0 0.0
    %1934 = vmatpush.msra.mxu0 0.0
    %1935 = vmatpush.msra.mxu0 0.0
    %1936 = vmatpush.msra.mxu0 0.0
    %1937 = vmatpush.msra.mxu0 0.0
    %1938 = vmatpush.msra.mxu0 0.0
    %1939 = vmatpush.msra.mxu0 0.0
    %1940 = vmatpush.msra.mxu0 0.0
    %1941 = vmatpush.msra.mxu0 %v1921
    %1942 = vmatmul.f32.gmra.mxu0 %v1924
    %v1943 = vpop.f32.mrf.mxu0
    %v1944 = vadd.f32 0.0, %v1943
    %1945 = vdwg.mxu0
    %v1947 = vsel %vm575, %v1920, 0
    %1949 = vmatpush.msra.mxu0 0.0
    %1950 = vmatpush.msra.mxu0 0.0
    %1951 = vmatpush.msra.mxu0 0.0
    %1952 = vmatpush.msra.mxu0 0.0
    %1953 = vmatpush.msra.mxu0 0.0
    %1954 = vmatpush.msra.mxu0 0.0
    %1955 = vmatpush.msra.mxu0 0.0
    %1956 = vmatpush.msra.mxu0 0.0
    %1957 = vmatpush.msra.mxu0 0.0
    %1958 = vmatpush.msra.mxu0 0.0
    %1959 = vmatpush.msra.mxu0 0.0
    %1960 = vmatpush.msra.mxu0 0.0
    %1961 = vmatpush.msra.mxu0 0.0
    %1962 = vmatpush.msra.mxu0 0.0
    %1963 = vmatpush.msra.mxu0 0.0
    %1964 = vmatpush.msra.mxu0 %v1922
    %1965 = vmatmul.f32.gmra.mxu0 %v1947
    %v1966 = vpop.f32.mrf.mxu0
    %v1967 = vadd.f32 0.0, %v1966
    %1968 = vdwg.mxu0
    %v1969 = vadd.f32 %v1804, %v1944
    %v1970 = vadd.f32 %v1827, %v1967
    %v1971 = vmul.f32 %v1498, %v313
    %v1972 = vmul.f32 %v1501, %v313
    %1973 = vmatpush.xpose.msra.mxu0 0.0
    %1974 = vmatpush.xpose.msra.mxu0 0.0
    %1975 = vmatpush.xpose.msra.mxu0 0.0
    %1976 = vmatpush.xpose.msra.mxu0 0.0
    %1977 = vmatpush.xpose.msra.mxu0 0.0
    %1978 = vmatpush.xpose.msra.mxu0 0.0
    %1979 = vmatpush.xpose.msra.mxu0 0.0
    %1980 = vmatpush.xpose.msra.mxu0 0.0
    %1981 = vmatpush.xpose.msra.mxu0 0.0
    %1982 = vmatpush.xpose.msra.mxu0 0.0
    %1983 = vmatpush.xpose.msra.mxu0 0.0
    %1984 = vmatpush.xpose.msra.mxu0 0.0
    %1985 = vmatpush.xpose.msra.mxu0 0.0
    %1986 = vmatpush.xpose.msra.mxu0 0.0
    %1987 = vmatpush.xpose.msra.mxu0 0.0
    %1988 = vmatpush.xpose.msra.mxu0 %v1521
    %1989 = vmatmul.f32.gmra.mxu0 %v1971
    %v1990 = vpop.f32.mrf.mxu0
    %v1991 = vadd.f32 0.0, %v1990
    %1992 = vdwg.mxu0
    %1993 = vmatpush.xpose.msra.mxu0 0.0
    %1994 = vmatpush.xpose.msra.mxu0 0.0
    %1995 = vmatpush.xpose.msra.mxu0 0.0
    %1996 = vmatpush.xpose.msra.mxu0 0.0
    %1997 = vmatpush.xpose.msra.mxu0 0.0
    %1998 = vmatpush.xpose.msra.mxu0 0.0
    %1999 = vmatpush.xpose.msra.mxu0 0.0
    %2000 = vmatpush.xpose.msra.mxu0 0.0
    %2001 = vmatpush.xpose.msra.mxu0 0.0
    %2002 = vmatpush.xpose.msra.mxu0 0.0
    %2003 = vmatpush.xpose.msra.mxu0 0.0
    %2004 = vmatpush.xpose.msra.mxu0 0.0
    %2005 = vmatpush.xpose.msra.mxu0 0.0
    %2006 = vmatpush.xpose.msra.mxu0 0.0
    %2007 = vmatpush.xpose.msra.mxu0 0.0
    %2008 = vmatpush.xpose.msra.mxu0 %v1524
    %2009 = vmatmul.f32.gmra.mxu0 %v1972
    %v2010 = vpop.f32.mrf.mxu0
    %v2011 = vadd.f32 0.0, %v2010
    %2012 = vdwg.mxu0
    %v2013 = vmul.f32 %v1991, 0.17677669
    %v2014 = vmul.f32 %v2011, 0.17677669
    %v2015 = vsel %vm575, %v2013, -inf
    %2016 = vmax.xlane.f32.xlu0 %v2015
    %v2017 = vpop.xlane.xlu0 %2016
    %v2018 = vsel %vm575, %v2014, -inf
    %2019 = vmax.xlane.f32.xlu0 %v2018
    %v2020 = vpop.xlane.xlu0 %2019
    %v2021 = vsub.f32 %v2013, %v2017
    %v2022 = vsub.f32 %v2014, %v2020
    %v2023 = vmul.f32 %v2021, 1.442695
    %v2024 = vpow.pop %v2023
    %v2025 = vmul.f32 %v2022, 1.442695
    %v2026 = vpow.pop %v2025
    %v2027 = vsel %vm575, %v2024, 0.0
    %2028 = vadd.xlane.f32.xlu0 %v2027
    %v2029 = vpop.xlane.xlu0 %2028
    %v2030 = vsel %vm575, %v2026, 0.0
    %2031 = vadd.xlane.f32.xlu0 %v2030
    %v2032 = vpop.xlane.xlu0 %2031
    %v2033 = vrcp.pop %v2029
    %v2034 = vmul.f32 %v2029, %v2033
    %v2035 = vsub.f32 1.0, %v2034
    %v2036 = vmul.f32 %v2033, %v2035
    %v2037 = vadd.f32 %v2033, %v2036
    %vm2038 = vweird.f32 %v2029
    %vm2039 = vweird.f32 %v2033
    %vm2040 = vmor %vm2038, %vm2039
    %v2041 = vsel %vm2040, %v2033, %v2037
    %v2042 = vand.u32 2147483647, %v2029
    %vm2043 = vcmp.eq.f32.partialorder %v2042, 8.507059e+37
    %v2044 = vand.u32 %v2029, 2147483648
    %v2045 = vor.u32 1.1754944e-38, %v2044
    %v2046 = vsel %vm2043, %v2045, %v2041
    %v2047 = vrcp.pop %v2032
    %v2048 = vmul.f32 %v2032, %v2047
    %v2049 = vsub.f32 1.0, %v2048
    %v2050 = vmul.f32 %v2047, %v2049
    %v2051 = vadd.f32 %v2047, %v2050
    %vm2052 = vweird.f32 %v2032
    %vm2053 = vweird.f32 %v2047
    %vm2054 = vmor %vm2052, %vm2053
    %v2055 = vsel %vm2054, %v2047, %v2051
    %v2056 = vand.u32 2147483647, %v2032
    %vm2057 = vcmp.eq.f32.partialorder %v2056, 8.507059e+37
    %v2058 = vand.u32 %v2032, 2147483648
    %v2059 = vor.u32 1.1754944e-38, %v2058
    %v2060 = vsel %vm2057, %v2059, %v2055
    %v2061 = vmul.f32 %v2024, %v2046
    %v2062 = vmul.f32 %v2026, %v2060
    %v2063 = vmul.f32 %v1544, %v313
    %v2064 = vmul.f32 %v1547, %v313
    %v2066 = vsel %vm575, %v2061, 0
    %2068 = vmatpush.msra.mxu0 0.0
    %2069 = vmatpush.msra.mxu0 0.0
    %2070 = vmatpush.msra.mxu0 0.0
    %2071 = vmatpush.msra.mxu0 0.0
    %2072 = vmatpush.msra.mxu0 0.0
    %2073 = vmatpush.msra.mxu0 0.0
    %2074 = vmatpush.msra.mxu0 0.0
    %2075 = vmatpush.msra.mxu0 0.0
    %2076 = vmatpush.msra.mxu0 0.0
    %2077 = vmatpush.msra.mxu0 0.0
    %2078 = vmatpush.msra.mxu0 0.0
    %2079 = vmatpush.msra.mxu0 0.0
    %2080 = vmatpush.msra.mxu0 0.0
    %2081 = vmatpush.msra.mxu0 0.0
    %2082 = vmatpush.msra.mxu0 0.0
    %2083 = vmatpush.msra.mxu0 %v2063
    %2084 = vmatmul.f32.gmra.mxu0 %v2066
    %v2085 = vpop.f32.mrf.mxu0
    %v2086 = vadd.f32 0.0, %v2085
    %2087 = vdwg.mxu0
    %v2089 = vsel %vm575, %v2062, 0
    %2091 = vmatpush.msra.mxu0 0.0
    %2092 = vmatpush.msra.mxu0 0.0
    %2093 = vmatpush.msra.mxu0 0.0
    %2094 = vmatpush.msra.mxu0 0.0
    %2095 = vmatpush.msra.mxu0 0.0
    %2096 = vmatpush.msra.mxu0 0.0
    %2097 = vmatpush.msra.mxu0 0.0
    %2098 = vmatpush.msra.mxu0 0.0
    %2099 = vmatpush.msra.mxu0 0.0
    %2100 = vmatpush.msra.mxu0 0.0
    %2101 = vmatpush.msra.mxu0 0.0
    %2102 = vmatpush.msra.mxu0 0.0
    %2103 = vmatpush.msra.mxu0 0.0
    %2104 = vmatpush.msra.mxu0 0.0
    %2105 = vmatpush.msra.mxu0 0.0
    %2106 = vmatpush.msra.mxu0 %v2064
    %2107 = vmatmul.f32.gmra.mxu0 %v2089
    %v2108 = vpop.f32.mrf.mxu0
    %v2109 = vadd.f32 0.0, %v2108
    %2110 = vdwg.mxu0
    %v2111 = vadd.f32 %v1969, %v2086
    %v2112 = vadd.f32 %v1970, %v2109
    %v2114 = vperm.slane %v1402, 0
    %2116 = vmatpush.msra.mxu0 %v1401
    %2117 = vmatpush.msra.mxu0 %v1400
    %2118 = vmatpush.msra.mxu0 %v1399
    %2119 = vmatpush.msra.mxu0 %v1398
    %2120 = vmatpush.msra.mxu0 %v1397
    %2121 = vmatpush.msra.mxu0 %v1396
    %2122 = vmatpush.msra.mxu0 %v1395
    %2123 = vmatpush.msra.mxu0 %v1394
    %2124 = vmatpush.msra.mxu0 %v1393
    %2125 = vmatpush.msra.mxu0 %v1392
    %2126 = vmatpush.msra.mxu0 %v1391
    %2127 = vmatpush.msra.mxu0 %v1390
    %2128 = vmatpush.msra.mxu0 %v1389
    %2129 = vmatpush.msra.mxu0 %v1388
    %2130 = vmatpush.msra.mxu0 %v1387
    %2131 = vmatpush.msra.mxu0 %v1386
    %2132 = vmatmul.f32.gmra.mxu0 %v2111
    %v2133 = vpop.f32.mrf.mxu0
    %v2134 = vadd.f32 %v2114, %v2133
    %2135 = vmatmul.f32.gmra.mxu0 %v2112
    %v2136 = vpop.f32.mrf.mxu0
    %v2137 = vadd.f32 %v2114, %v2136
    %2138 = vdwg.mxu0
    %v2139 = vadd.f32 %v1335, %v2134
    %v2140 = vadd.f32 %v1336, %v2137
    %2141 = vadd.xlane.f32.xlu0 %v2139
    %v2142 = vpop.xlane.xlu0 %2141
    %2143 = vadd.xlane.f32.xlu0 %v2140
    %v2144 = vpop.xlane.xlu0 %2143
    %v2145 = vmul.f32 %v2142, %v1134
    %v2146 = vmul.f32 %v2144, %v1134
    %v2147 = vsub.f32 %v2139, %v2145
    %v2148 = vsub.f32 %v2140, %v2146
    %v2149 = vmul.f32 %v2147, %v2147
    %v2150 = vmul.f32 %v2148, %v2148
    %2151 = vadd.xlane.f32.xlu0 %v2149
    %v2152 = vpop.xlane.xlu0 %2151
    %2153 = vadd.xlane.f32.xlu0 %v2150
    %v2154 = vpop.xlane.xlu0 %2153
    %v2155 = vmul.f32 %v2152, %v1134
    %v2156 = vmul.f32 %v2154, %v1134
    %v2157 = vadd.f32 %v2155, 1e-05
    %v2158 = vadd.f32 %v2156, 1e-05
    %v2159 = vrsqrt.pop %v2157
    %v2160 = vmul.f32 %v2159, %v2157
    %v2161 = vmul.f32 %v2160, %v2159
    %v2162 = vmul.f32 0.5, %v2161
    %v2163 = vsub.f32 1.5, %v2162
    %v2164 = vmul.f32 %v2159, %v2163
    %vm2165 = vweird.f32 %v2157
    %vm2166 = vweird.f32 %v2159
    %vm2167 = vmor %vm2165, %vm2166
    %v2168 = vsel %vm2167, %v2159, %v2164
    %v2169 = vrsqrt.pop %v2158
    %v2170 = vmul.f32 %v2169, %v2158
    %v2171 = vmul.f32 %v2170, %v2169
    %v2172 = vmul.f32 0.5, %v2171
    %v2173 = vsub.f32 1.5, %v2172
    %v2174 = vmul.f32 %v2169, %v2173
    %vm2175 = vweird.f32 %v2158
    %vm2176 = vweird.f32 %v2169
    %vm2177 = vmor %vm2175, %vm2176
    %v2178 = vsel %vm2177, %v2169, %v2174
    %v2179 = vmul.f32 %v2147, %v2168
    %v2180 = vmul.f32 %v2148, %v2178
    %v2182 = vperm.slane %v1403, 0
    %v2184 = vmul.f32 %v2179, %v2182
    %v2185 = vmul.f32 %v2180, %v2182
    %v2187 = vperm.slane %v1404, 0
    %v2189 = vadd.f32 %v2184, %v2187
    %v2190 = vadd.f32 %v2185, %v2187
    %v2192 = vperm.slane %v1437, 0
    %v2193 = vperm.slane %v1437, 1
    %2196 = vmatpush.msra.mxu0 %v1435
    %2197 = vmatpush.msra.mxu0 %v1433
    %2198 = vmatpush.msra.mxu0 %v1431
    %2199 = vmatpush.msra.mxu0 %v1429
    %2200 = vmatpush.msra.mxu0 %v1427
    %2201 = vmatpush.msra.mxu0 %v1425
    %2202 = vmatpush.msra.mxu0 %v1423
    %2203 = vmatpush.msra.mxu0 %v1421
    %2204 = vmatpush.msra.mxu0 %v1419
    %2205 = vmatpush.msra.mxu0 %v1417
    %2206 = vmatpush.msra.mxu0 %v1415
    %2207 = vmatpush.msra.mxu0 %v1413
    %2208 = vmatpush.msra.mxu0 %v1411
    %2209 = vmatpush.msra.mxu0 %v1409
    %2210 = vmatpush.msra.mxu0 %v1407
    %2211 = vmatpush.msra.mxu0 %v1405
    %2212 = vmatmul.f32.gmra.mxu0 %v2189
    %v2213 = vpop.f32.mrf.mxu0
    %v2214 = vadd.f32 %v2192, %v2213
    %2215 = vmatmul.f32.gmra.mxu0 %v2190
    %v2216 = vpop.f32.mrf.mxu0
    %v2217 = vadd.f32 %v2192, %v2216
    %2218 = vdwg.mxu0
    %2219 = vmatpush.msra.mxu0 %v1436
    %2220 = vmatpush.msra.mxu0 %v1434
    %2221 = vmatpush.msra.mxu0 %v1432
    %2222 = vmatpush.msra.mxu0 %v1430
    %2223 = vmatpush.msra.mxu0 %v1428
    %2224 = vmatpush.msra.mxu0 %v1426
    %2225 = vmatpush.msra.mxu0 %v1424
    %2226 = vmatpush.msra.mxu0 %v1422
    %2227 = vmatpush.msra.mxu0 %v1420
    %2228 = vmatpush.msra.mxu0 %v1418
    %2229 = vmatpush.msra.mxu0 %v1416
    %2230 = vmatpush.msra.mxu0 %v1414
    %2231 = vmatpush.msra.mxu0 %v1412
    %2232 = vmatpush.msra.mxu0 %v1410
    %2233 = vmatpush.msra.mxu0 %v1408
    %2234 = vmatpush.msra.mxu0 %v1406
    %2235 = vmatmul.f32.gmra.mxu0 %v2189
    %v2236 = vpop.f32.mrf.mxu0
    %v2237 = vadd.f32 %v2193, %v2236
    %2238 = vmatmul.f32.gmra.mxu0 %v2190
    %v2239 = vpop.f32.mrf.mxu0
    %v2240 = vadd.f32 %v2193, %v2239
    %2241 = vdwg.mxu0
    %v2242 = vmax.f32 %v2214, 0.0
    %v2243 = vmax.f32 %v2237, 0.0
    %v2244 = vmax.f32 %v2217, 0.0
    %v2245 = vmax.f32 %v2240, 0.0
    %v2247 = vperm.slane %v1470, 0
    %2249 = vmatpush.msra.mxu0 %v1453
    %2250 = vmatpush.msra.mxu0 %v1452
    %2251 = vmatpush.msra.mxu0 %v1451
    %2252 = vmatpush.msra.mxu0 %v1450
    %2253 = vmatpush.msra.mxu0 %v1449
    %2254 = vmatpush.msra.mxu0 %v1448
    %2255 = vmatpush.msra.mxu0 %v1447
    %2256 = vmatpush.msra.mxu0 %v1446
    %2257 = vmatpush.msra.mxu0 %v1445
    %2258 = vmatpush.msra.mxu0 %v1444
    %2259 = vmatpush.msra.mxu0 %v1443
    %2260 = vmatpush.msra.mxu0 %v1442
    %2261 = vmatpush.msra.mxu0 %v1441
    %2262 = vmatpush.msra.mxu0 %v1440
    %2263 = vmatpush.msra.mxu0 %v1439
    %2264 = vmatpush.msra.mxu0 %v1438
    %2265 = vmatmul.f32.gmra.mxu0 %v2242
    %v2266 = vpop.f32.mrf.mxu0
    %v2267 = vadd.f32 %v2247, %v2266
    %2268 = vmatmul.f32.gmra.mxu0 %v2244
    %v2269 = vpop.f32.mrf.mxu0
    %v2270 = vadd.f32 %v2247, %v2269
    %2271 = vdwg.mxu0
    %2272 = vmatpush.msra.mxu0 %v1469
    %2273 = vmatpush.msra.mxu0 %v1468
    %2274 = vmatpush.msra.mxu0 %v1467
    %2275 = vmatpush.msra.mxu0 %v1466
    %2276 = vmatpush.msra.mxu0 %v1465
    %2277 = vmatpush.msra.mxu0 %v1464
    %2278 = vmatpush.msra.mxu0 %v1463
    %2279 = vmatpush.msra.mxu0 %v1462
    %2280 = vmatpush.msra.mxu0 %v1461
    %2281 = vmatpush.msra.mxu0 %v1460
    %2282 = vmatpush.msra.mxu0 %v1459
    %2283 = vmatpush.msra.mxu0 %v1458
    %2284 = vmatpush.msra.mxu0 %v1457
    %2285 = vmatpush.msra.mxu0 %v1456
    %2286 = vmatpush.msra.mxu0 %v1455
    %2287 = vmatpush.msra.mxu0 %v1454
    %2288 = vmatmul.f32.gmra.mxu0 %v2243
    %v2289 = vpop.f32.mrf.mxu0
    %v2290 = vadd.f32 %v2267, %v2289
    %2291 = vmatmul.f32.gmra.mxu0 %v2245
    %v2292 = vpop.f32.mrf.mxu0
    %v2293 = vadd.f32 %v2270, %v2292
    %2294 = vdwg.mxu0
    %v2295 = vadd.f32 %v2189, %v2290
    %v2296 = vadd.f32 %v2190, %v2293
    %2297 = vadd.xlane.f32.xlu0 %v2295
    %v2298 = vpop.xlane.xlu0 %2297
    %2299 = vadd.xlane.f32.xlu0 %v2296
    %v2300 = vpop.xlane.xlu0 %2299
    %v2301 = vmul.f32 %v2298, %v1134
    %v2302 = vmul.f32 %v2300, %v1134
    %v2303 = vsub.f32 %v2295, %v2301
    %v2304 = vsub.f32 %v2296, %v2302
    %v2305 = vmul.f32 %v2303, %v2303
    %v2306 = vmul.f32 %v2304, %v2304
    %2307 = vadd.xlane.f32.xlu0 %v2305
    %v2308 = vpop.xlane.xlu0 %2307
    %2309 = vadd.xlane.f32.xlu0 %v2306
    %v2310 = vpop.xlane.xlu0 %2309
    %v2311 = vmul.f32 %v2308, %v1134
    %v2312 = vmul.f32 %v2310, %v1134
    %v2313 = vadd.f32 %v2311, 1e-05
    %v2314 = vadd.f32 %v2312, 1e-05
    %v2315 = vrsqrt.pop %v2313
    %v2316 = vmul.f32 %v2315, %v2313
    %v2317 = vmul.f32 %v2316, %v2315
    %v2318 = vmul.f32 0.5, %v2317
    %v2319 = vsub.f32 1.5, %v2318
    %v2320 = vmul.f32 %v2315, %v2319
    %vm2321 = vweird.f32 %v2313
    %vm2322 = vweird.f32 %v2315
    %vm2323 = vmor %vm2321, %vm2322
    %v2324 = vsel %vm2323, %v2315, %v2320
    %v2325 = vrsqrt.pop %v2314
    %v2326 = vmul.f32 %v2325, %v2314
    %v2327 = vmul.f32 %v2326, %v2325
    %v2328 = vmul.f32 0.5, %v2327
    %v2329 = vsub.f32 1.5, %v2328
    %v2330 = vmul.f32 %v2325, %v2329
    %vm2331 = vweird.f32 %v2314
    %vm2332 = vweird.f32 %v2325
    %vm2333 = vmor %vm2331, %vm2332
    %v2334 = vsel %vm2333, %v2325, %v2330
    %v2335 = vmul.f32 %v2303, %v2324
    %v2336 = vmul.f32 %v2304, %v2334
    %v2338 = vperm.slane %v1471, 0
    %v2340 = vmul.f32 %v2335, %v2338
    %v2341 = vmul.f32 %v2336, %v2338
    %v2343 = vperm.slane %v1472, 0
    %v2345 = vadd.f32 %v2340, %v2343
    %v2346 = vadd.f32 %v2341, %v2343
    %2347 = vst [vmem:[#allocation25] sm:$0xff] %v2345
    %2348 = vst [vmem:[#allocation25 + $0x8] sm:$0xff] %v2346
    // Predicated region
    $region162: #{tpu_custom_call.1} parent=1 // pred_check
      _
    $region163: #{tpu_custom_call.1} parent=1 // pred_check_branch
      %2350 = sbr.rel (0) target = $region165
    $region164: #{tpu_custom_call.1} parent=1 // pred_region
      %2352 = vsyncadd [#allocation4], 0
      %s2353 = sshll.u32 [#allocation25], 4
      %s2354 = int_to_ptr.vmem [resolvable:$true] %s2353
      %s2355 = sshll.u32 %s26, 4
      %s2356 = int_to_ptr.hbm [resolvable:$true] %s2355
      %2361 = dma.vmem_to_hbm [thread:$0]  %s2354, 256, %s2356, [#allocation4], 128, 128, 8
    $region165: #{tpu_custom_call.1} parent=1 // pred_fallthru
      _
    // Predicated region
    $region166: #{tpu_custom_call.1} parent=1 // pred_check
      _
    $region167: #{tpu_custom_call.1} parent=1 // pred_check_branch
      %2363 = sbr.rel (0) target = $region169
    $region168: #{tpu_custom_call.1} parent=1 // pred_region
      %2365 = dma.done [#allocation4], 256
    $region169: #{tpu_custom_call.1} parent=1 // pred_fallthru
      _
    %2366 = vsyncpa [#allocation3], 1
    %2367 = vsyncpa [#allocation6], 1
    %2368 = vsyncpa [#allocation9], 1
    %2369 = vsyncpa [#allocation12], 1
    %2370 = vsyncpa [#allocation15], 1
    %2371 = vsyncpa [#allocation18], 1
    %2372 = vsyncpa [#allocation21], 1
    %2373 = vsyncpa [#allocation24], 1
    %2374 = vsyncpa [#allocation4], 1

</llo_original>
